<compile_context>
chip_gen: v5e
topology: v5e:2x2
jax: 0.10.0
libtpu: 0.0.40
codegen_flags: <defaults>
</compile_context>

<pallas_src>
import functools
import math

import jax
import jax.numpy as jnp
from jax import lax
from jax.experimental import pallas as pl
from jax.experimental.pallas import tpu as pltpu


# ----------------------------- Pallas kernels ------------------------------

def _linear_kernel(x_ref, w_ref, b_ref, o_ref):
    """o = x @ w + b   (used for feat_proj and the fused q / kv / qkv projections)."""
    acc = jnp.dot(x_ref[...], w_ref[...], preferred_element_type=jnp.float32)
    o_ref[...] = (acc + b_ref[...]).astype(o_ref.dtype)


def _outproj_add_ln_kernel(a_ref, w_ref, b_ref, r_ref, g_ref, bt_ref, o_ref, *, eps):
    """o = LayerNorm(residual + attn @ w_o + b_o)  -- fused MHA epilogue."""
    proj = jnp.dot(a_ref[...], w_ref[...], preferred_element_type=jnp.float32) + b_ref[...]
    z = r_ref[...].astype(jnp.float32) + proj
    mu = jnp.mean(z, axis=-1, keepdims=True)
    var = jnp.mean((z - mu) ** 2, axis=-1, keepdims=True)
    zn = (z - mu) * lax.rsqrt(var + eps)
    o_ref[...] = (zn * g_ref[...] + bt_ref[...]).astype(o_ref.dtype)


def _ffn_add_ln_kernel(x_ref, w1_ref, b1_ref, w2_ref, b2_ref, g_ref, bt_ref, o_ref, *, eps):
    """o = LayerNorm(x + W2 relu(W1 x + b1) + b2)  -- fused feed-forward block."""
    x = x_ref[...]
    h = jnp.dot(x, w1_ref[...], preferred_element_type=jnp.float32) + b1_ref[...]
    h = jnp.maximum(h, 0.0)                                    # relu, kept in f32
    ff = jnp.dot(h, w2_ref[...], preferred_element_type=jnp.float32) + b2_ref[...]
    z = x.astype(jnp.float32) + ff
    mu = jnp.mean(z, axis=-1, keepdims=True)
    var = jnp.mean((z - mu) ** 2, axis=-1, keepdims=True)
    zn = (z - mu) * lax.rsqrt(var + eps)
    o_ref[...] = (zn * g_ref[...] + bt_ref[...]).astype(o_ref.dtype)


def _mha_core(q, k, v, nhead, scale):
    """All-heads scaled-dot-product attention; q/k/v are (S, E) f32 slabs."""
    E = q.shape[-1]
    dh = E // nhead
    q = q * scale
    outs = []
    for h in range(nhead):                       # nhead is small & static
        sl = slice(h * dh, (h + 1) * dh)
        s = lax.dot_general(q[:, sl], k[:, sl], (((1,), (1,)), ((), ())),
                            preferred_element_type=jnp.float32)        # (Sq, Sk)
        m = jnp.max(s, axis=-1, keepdims=True)
        p = jnp.exp(s - m)
        denom = jnp.sum(p, axis=-1, keepdims=True)
        p = p * pl.reciprocal(denom, approx=True)                      # EUP slot
        outs.append(jnp.dot(p, v[:, sl], preferred_element_type=jnp.float32))
    return jnp.concatenate(outs, axis=-1)        # lane-dense (Sq, E)


def _self_attn_kernel(qkv_ref, o_ref, *, nhead, scale):
    E = o_ref.shape[-1]
    qkv = qkv_ref[...].astype(jnp.float32)
    out = _mha_core(qkv[:, :E], qkv[:, E:2 * E], qkv[:, 2 * E:], nhead, scale)
    o_ref[...] = out.astype(o_ref.dtype)


def _cross_attn_kernel(q_ref, kv_ref, o_ref, *, nhead, scale):
    E = o_ref.shape[-1]
    q = q_ref[...].astype(jnp.float32)
    kv = kv_ref[...].astype(jnp.float32)
    out = _mha_core(q, kv[:, :E], kv[:, E:], nhead, scale)
    o_ref[...] = out.astype(o_ref.dtype)


def _final_head_kernel(x_ref, w_ref, b_ref, o_ref):
    """o = sigmoid(sum(x * w, -1) + b)  -- Cout=1 head as a VPU reduction."""
    x = x_ref[...].astype(jnp.float32)
    o = jnp.sum(x * w_ref[...], axis=-1, keepdims=True) + b_ref[...]
    o_ref[...] = jax.nn.sigmoid(o).astype(o_ref.dtype)


# ----------------------------- kernel wrappers ------------------------------

def _row_tile(m, target=512):
    """Largest multiple-of-8 divisor of m that is <= target and gives grid >= 2.

    Falls back to m (grid of 1) only when no such divisor exists, so the block
    still satisfies the (8, 128) / full-dim constraint.
    """
    t = min(target, m)
    t -= t % 8
    while t >= 8:
        if m % t == 0 and m // t >= 2:
            return t
        t -= 8
    return m


def linear(x, w, b):
    """x:[M,K] @ w:[K,N] + b:[N]."""
    M, K = x.shape
    N = w.shape[1]
    tm = _row_tile(M)
    return pl.pallas_call(
        _linear_kernel,
        out_shape=jax.ShapeDtypeStruct((M, N), x.dtype),
        grid_spec=pltpu.PrefetchScalarGridSpec(
            num_scalar_prefetch=0, grid=(M // tm,),
            in_specs=[pl.BlockSpec((tm, K), lambda i: (i, 0)),
                      pl.BlockSpec((K, N), lambda i: (0, 0)),
                      pl.BlockSpec((1, N), lambda i: (0, 0))],
            out_specs=pl.BlockSpec((tm, N), lambda i: (i, 0))),
        compiler_params=pltpu.CompilerParams(dimension_semantics=("parallel",)),
    )(x, w, b.reshape(1, N))


def outproj_add_ln(attn, w, b, resid, gamma, beta, eps=1e-5):
    """LayerNorm(resid + attn @ w + b) fused in one kernel."""
    M, E = attn.shape
    tm = _row_tile(M)
    return pl.pallas_call(
        functools.partial(_outproj_add_ln_kernel, eps=eps),
        out_shape=jax.ShapeDtypeStruct((M, E), attn.dtype),
        grid_spec=pltpu.PrefetchScalarGridSpec(
            num_scalar_prefetch=0, grid=(M // tm,),
            in_specs=[pl.BlockSpec((tm, E), lambda i: (i, 0)),
                      pl.BlockSpec((E, E), lambda i: (0, 0)),
                      pl.BlockSpec((1, E), lambda i: (0, 0)),
                      pl.BlockSpec((tm, E), lambda i: (i, 0)),
                      pl.BlockSpec((1, E), lambda i: (0, 0)),
                      pl.BlockSpec((1, E), lambda i: (0, 0))],
            out_specs=pl.BlockSpec((tm, E), lambda i: (i, 0))),
        compiler_params=pltpu.CompilerParams(dimension_semantics=("parallel",)),
    )(attn, w, b.reshape(1, E), resid, gamma.reshape(1, E), beta.reshape(1, E))


def ffn_add_ln(x, w1, b1, w2, b2, gamma, beta, eps=1e-5):
    """LayerNorm(x + FFN(x)) fused in one kernel."""
    M, E = x.shape
    F = w1.shape[1]
    tm = _row_tile(M)
    return pl.pallas_call(
        functools.partial(_ffn_add_ln_kernel, eps=eps),
        out_shape=jax.ShapeDtypeStruct((M, E), x.dtype),
        grid_spec=pltpu.PrefetchScalarGridSpec(
            num_scalar_prefetch=0, grid=(M // tm,),
            in_specs=[pl.BlockSpec((tm, E), lambda i: (i, 0)),
                      pl.BlockSpec((E, F), lambda i: (0, 0)),
                      pl.BlockSpec((1, F), lambda i: (0, 0)),
                      pl.BlockSpec((F, E), lambda i: (0, 0)),
                      pl.BlockSpec((1, E), lambda i: (0, 0)),
                      pl.BlockSpec((1, E), lambda i: (0, 0)),
                      pl.BlockSpec((1, E), lambda i: (0, 0))],
            out_specs=pl.BlockSpec((tm, E), lambda i: (i, 0))),
        compiler_params=pltpu.CompilerParams(dimension_semantics=("parallel",)),
    )(x, w1, b1.reshape(1, F), w2, b2.reshape(1, E),
      gamma.reshape(1, E), beta.reshape(1, E))


def self_attention(qkv, B, S, E, nhead):
    """qkv: (B*S, 3E) batch-major tokens -> (B*S, E) attention output."""
    scale = 1.0 / math.sqrt(E // nhead)
    return pl.pallas_call(
        functools.partial(_self_attn_kernel, nhead=nhead, scale=scale),
        out_shape=jax.ShapeDtypeStruct((B * S, E), qkv.dtype),
        grid_spec=pltpu.PrefetchScalarGridSpec(
            num_scalar_prefetch=0, grid=(B,),
            in_specs=[pl.BlockSpec((S, 3 * E), lambda b: (b, 0))],
            out_specs=pl.BlockSpec((S, E), lambda b: (b, 0))),
        compiler_params=pltpu.CompilerParams(dimension_semantics=("parallel",)),
    )(qkv)


def cross_attention(q, kv, B, Sq, Sk, E, nhead):
    """q: (B*Sq, E), kv: (B*Sk, 2E) batch-major tokens -> (B*Sq, E)."""
    scale = 1.0 / math.sqrt(E // nhead)
    return pl.pallas_call(
        functools.partial(_cross_attn_kernel, nhead=nhead, scale=scale),
        out_shape=jax.ShapeDtypeStruct((B * Sq, E), q.dtype),
        grid_spec=pltpu.PrefetchScalarGridSpec(
            num_scalar_prefetch=0, grid=(B,),
            in_specs=[pl.BlockSpec((Sq, E), lambda b: (b, 0)),
                      pl.BlockSpec((Sk, 2 * E), lambda b: (b, 0))],
            out_specs=pl.BlockSpec((Sq, E), lambda b: (b, 0))),
        compiler_params=pltpu.CompilerParams(dimension_semantics=("parallel",)),
    )(q, kv)


def final_head(x, w, b):
    """x:[M,E], w:[E,1], b:[1] -> sigmoid(x @ w + b) as a VPU reduction."""
    M, E = x.shape
    tm = _row_tile(M)
    return pl.pallas_call(
        _final_head_kernel,
        out_shape=jax.ShapeDtypeStruct((M, 1), x.dtype),
        grid_spec=pltpu.PrefetchScalarGridSpec(
            num_scalar_prefetch=0, grid=(M // tm,),
            in_specs=[pl.BlockSpec((tm, E), lambda i: (i, 0)),
                      pl.BlockSpec((1, E), lambda i: (0, 0)),
                      pl.BlockSpec((1, 1), lambda i: (0, 0))],
            out_specs=pl.BlockSpec((tm, 1), lambda i: (i, 0))),
        compiler_params=pltpu.CompilerParams(dimension_semantics=("parallel",)),
    )(x, w.reshape(1, E), b.reshape(1, 1))


# ----------------------------- model (plain-JAX glue) -----------------------

def encoder_layer(tok_q, tok_kv, B, Sq, Sk, p, nhead, *, self_attn):
    """PyTorch (Co)TransformerEncoderLayer, eval mode, on batch-major tokens.

    out = LN2( z + FFN(z) ),   z = LN1( tok_q + MHA(tok_q, tok_kv, tok_kv) )
    """
    E = tok_q.shape[-1]
    mha = p['mha']
    if self_attn:
        qkv = linear(tok_q, mha['w_qkv'], mha['b_qkv'])          # (B*Sq, 3E)
        attn = self_attention(qkv, B, Sq, E, nhead)
    else:
        q = linear(tok_q, mha['w_q'], mha['b_q'])                # (B*Sq, E)
        kv = linear(tok_kv, mha['w_kv'], mha['b_kv'])            # (B*Sk, 2E)
        attn = cross_attention(q, kv, B, Sq, Sk, E, nhead)
    z = outproj_add_ln(attn, mha['w_o'], mha['b_o'], tok_q, p['ln1_g'], p['ln1_b'])
    out = ffn_add_ln(z, p['w1'], p['b1'], p['w2'], p['b2'], p['ln2_g'], p['ln2_b'])
    return out


def pos_encoding_tokens(B, H, W, num_pos_feats, temperature=10000.0,
                        scale=2 * math.pi):
    """PositionEncodingSine2D, returned directly as batch-major tokens (B*H*W, C)."""
    not_mask = jnp.ones((B, H, W), jnp.float32)
    y_embed = jnp.cumsum(not_mask, axis=1)
    x_embed = jnp.cumsum(not_mask, axis=2)
    eps = 1e-6
    y_embed = y_embed / (y_embed[:, -1:, :] + eps) * scale
    x_embed = x_embed / (x_embed[:, :, -1:] + eps) * scale
    dim_t = jnp.arange(num_pos_feats, dtype=jnp.float32)
    dim_t = jnp.power(temperature, 2.0 * jnp.floor(dim_t / 2.0) / num_pos_feats)
    pos_x = x_embed[:, :, :, None] / dim_t
    pos_y = y_embed[:, :, :, None] / dim_t
    pos_x = jnp.stack((jnp.sin(pos_x[..., 0::2]), jnp.cos(pos_x[..., 1::2])),
                      axis=4).reshape(B, H, W, -1)
    pos_y = jnp.stack((jnp.sin(pos_y[..., 0::2]), jnp.cos(pos_y[..., 1::2])),
                      axis=4).reshape(B, H, W, -1)
    pos = jnp.concatenate((pos_y, pos_x), axis=3)                # (B, H, W, 2*npf)
    return pos.reshape(B * H * W, -1)


def _nchw_to_tokens(z):
    B, C, H, W = z.shape
    return jnp.transpose(z, (0, 2, 3, 1)).reshape(B * H * W, C)


def _tokens_to_nchw(t, B, H, W):
    C = t.shape[-1]
    return jnp.transpose(t.reshape(B, H, W, C), (0, 3, 1, 2))


def encoder_forward(x, y, params, *, nhead, pos_weight, feat_weight, have_final=True):
    Bx, _, Hx, Wx = x.shape
    By, _, Hy, Wy = y.shape
    Sx, Sy = Hx * Wx, Hy * Wy
    E = params['proj_w'].shape[1]

    # feat_proj (1x1 conv == per-token linear); drop_feat: eval-mode identity
    featx = linear(_nchw_to_tokens(x), params['proj_w'], params['proj_b'])
    featy = linear(_nchw_to_tokens(y), params['proj_w'], params['proj_b'])

    # positional encodings depend only on shape -> computed once, outside the loop
    posx = pos_encoding_tokens(Bx, Hx, Wx, E // 2)
    posy = pos_encoding_tokens(By, Hy, Wy, E // 2)

    for blk in params['blocks']:                                 # layer_type 'CI'
        # --- co-attention layer ('C'): both outputs use the same inputs ---
        co = blk['co']
        outx = encoder_layer(featx, featy, Bx, Sx, Sy, co['layer12'], nhead,
                             self_attn=False)
        outy = encoder_layer(featy, featx, By, Sy, Sx, co['layer21'], nhead,
                             self_attn=False)
        featx, featy = outx, outy
        # --- inner attention layer ('I') ---
        # The concatenated sequence with a block-diagonal src_mask is exactly
        # equivalent to applying the shared-parameter encoder layer to each
        # sequence independently (self-attention: q = k = v).
        inn = blk['inner']
        fx = feat_weight * featx + pos_weight * posx
        fy = feat_weight * featy + pos_weight * posy
        featx = encoder_layer(fx, fx, Bx, Sx, Sx, inn, nhead, self_attn=True)
        featy = encoder_layer(fy, fy, By, Sy, Sy, inn, nhead, self_attn=True)

    if have_final:
        ox = final_head(featx, params['final_w'], params['final_b'])   # (Bx*Sx, 1)
        oy = final_head(featy, params['final_w'], params['final_b'])
        return _tokens_to_nchw(ox, Bx, Hx, Wx), _tokens_to_nchw(oy, By, Hy, Wy)
    return _tokens_to_nchw(featx, Bx, Hx, Wx), _tokens_to_nchw(featy, By, Hy, Wy)


# ----------------------------- parameter init -------------------------------

def _init_linear(key, fan_in, fan_out):
    k1, k2 = jax.random.split(key)
    bound = 1.0 / math.sqrt(fan_in)
    w = jax.random.uniform(k1, (fan_in, fan_out), jnp.float32, -bound, bound)
    b = jax.random.uniform(k2, (fan_out,), jnp.float32, -bound, bound)
    return w, b


def _init_mha(key, E):
    ks = jax.random.split(key, 4)
    wq, bq = _init_linear(ks[0], E, E)
    wk, bk = _init_linear(ks[1], E, E)
    wv, bv = _init_linear(ks[2], E, E)
    wo, bo = _init_linear(ks[3], E, E)
    # fused projection weights (same underlying values, pre-concatenated once)
    return dict(
        w_q=wq, b_q=bq,
        w_kv=jnp.concatenate([wk, wv], axis=1), b_kv=jnp.concatenate([bk, bv]),
        w_qkv=jnp.concatenate([wq, wk, wv], axis=1),
        b_qkv=jnp.concatenate([bq, bk, bv]),
        w_o=wo, b_o=bo)


def _init_encoder_layer(key, E, F):
    ks = jax.random.split(key, 3)
    w1, b1 = _init_linear(ks[1], E, F)
    w2, b2 = _init_linear(ks[2], F, E)
    return dict(mha=_init_mha(ks[0], E), w1=w1, b1=b1, w2=w2, b2=b2,
                ln1_g=jnp.ones((E,), jnp.float32), ln1_b=jnp.zeros((E,), jnp.float32),
                ln2_g=jnp.ones((E,), jnp.float32), ln2_b=jnp.zeros((E,), jnp.float32))


def init_params(key, feat_dim, d_model, nhead, dim_ff, num_layers):
    keys = jax.random.split(key, num_layers + 2)
    proj_w, proj_b = _init_linear(keys[0], feat_dim, d_model)
    blocks = []
    for i in range(num_layers):
        k12, k21, kin = jax.random.split(keys[i + 1], 3)
        blocks.append(dict(
            co=dict(layer12=_init_encoder_layer(k12, d_model, dim_ff),
                    layer21=_init_encoder_layer(k21, d_model, dim_ff)),
            inner=_init_encoder_layer(kin, d_model, dim_ff)))
    final_w, final_b = _init_linear(keys[-1], d_model, 1)
    return dict(proj_w=proj_w, proj_b=proj_b, blocks=blocks,
                final_w=final_w, final_b=final_b)


# ----------------------------- demo ------------------------------------------

if __name__ == "__main__":
    B, feat_dim, H, W = 2, 8, 8, 8
    d_model, nhead, dim_ff = 32, 4, 64
    num_layers = 1                       # one EncoderLayerBlock, layer_type 'CI'
    pos_weight, feat_weight = 0.1, 1.0

    key = jax.random.PRNGKey(0)
    kx, ky, kp = jax.random.split(key, 3)
    x = jax.random.normal(kx, (B, feat_dim, H, W), jnp.float32)
    y = jax.random.normal(ky, (B, feat_dim, H, W), jnp.float32)
    params = init_params(kp, feat_dim, d_model, nhead, dim_ff, num_layers)

    fwd = jax.jit(lambda a, b, p: encoder_forward(
        a, b, p, nhead=nhead, pos_weight=pos_weight, feat_weight=feat_weight))

    outx, outy = fwd(x, y, params)
    jax.block_until_ready((outx, outy))
    assert outx.shape == (B, 1, H, W) and outy.shape == (B, 1, H, W)
    assert bool(jnp.all(jnp.isfinite(outx))) and bool(jnp.all(jnp.isfinite(outy)))
    print("KERNEL_OK")
</pallas_src>

<mosaic_0001>
module attributes {stable_mosaic.version = 11 : i64} {
  func.func @_linear_kernel(%arg0: i32, %arg1: memref<64x8xf32, #tpu.memory_space<vmem>>, %arg2: memref<8x32xf32, #tpu.memory_space<vmem>>, %arg3: memref<1x32xf32, #tpu.memory_space<vmem>>, %arg4: memref<64x32xf32, #tpu.memory_space<vmem>>) attributes {dimension_semantics = [#tpu.dimension_semantics<parallel>], iteration_bounds = array<i64: 2>, scalar_prefetch = 0 : i64, scratch_operands = 0 : i64, tpu.core_type = #tpu.core_type<tc>, window_params = [{transform_indices = @transform_0, window_bounds = array<i64: 64, 8>}, {pipeline_mode = #tpu.pipeline_mode<synchronous>, transform_indices = @transform_1, window_bounds = array<i64: 8, 32>}, {pipeline_mode = #tpu.pipeline_mode<synchronous>, transform_indices = @transform_2, window_bounds = array<i64: 1, 32>}, {transform_indices = @transform_3, window_bounds = array<i64: 64, 32>}]} {
    %c0 = arith.constant 0 : index
    %c0_0 = arith.constant 0 : index
    %0 = vector.load %arg1[%c0, %c0_0] : memref<64x8xf32, #tpu.memory_space<vmem>>, vector<64x8xf32>
    %c0_1 = arith.constant 0 : index
    %c0_2 = arith.constant 0 : index
    %1 = vector.load %arg2[%c0_1, %c0_2] : memref<8x32xf32, #tpu.memory_space<vmem>>, vector<8x32xf32>
    %cst = arith.constant dense<0.000000e+00> : vector<64x32xf32>
    %2 = tpu.matmul %0, %1, %cst {dimension_numbers = #tpu.dot_dimension_numbers<[1], [0], [0], [1], [0, 0, 1, 1], [], []>} : vector<64x8xf32>, vector<8x32xf32>, vector<64x32xf32> -> vector<64x32xf32>
    %c0_3 = arith.constant 0 : index
    %c0_4 = arith.constant 0 : index
    %3 = vector.load %arg3[%c0_3, %c0_4] : memref<1x32xf32, #tpu.memory_space<vmem>>, vector<1x32xf32>
    %4 = vector.broadcast %3 : vector<1x32xf32> to vector<64x32xf32>
    %5 = arith.addf %2, %4 : vector<64x32xf32>
    %c0_5 = arith.constant 0 : index
    %c0_6 = arith.constant 0 : index
    %6 = vector.load %arg4[%c0_5, %c0_6] : memref<64x32xf32, #tpu.memory_space<vmem>>, vector<64x32xf32>
    tpu.vector_store %arg4[%c0_5, %c0_6], %5 {strides = array<i32>} : memref<64x32xf32, #tpu.memory_space<vmem>>, vector<64x32xf32>,
    return
  }
  func.func @transform_0(%arg0: i32) -> (i32, i32) {
    %c0_i32 = arith.constant 0 : i32
    %c0_i32_0 = arith.constant 0 : i32
    return %arg0, %c0_i32 : i32, i32
  }
  func.func @transform_1(%arg0: i32) -> (i32, i32) {
    %c0_i32 = arith.constant 0 : i32
    %c0_i32_0 = arith.constant 0 : i32
    %c0_i32_1 = arith.constant 0 : i32
    return %c0_i32, %c0_i32_0 : i32, i32
  }
  func.func @transform_2(%arg0: i32) -> (i32, i32) {
    %c0_i32 = arith.constant 0 : i32
    %c0_i32_0 = arith.constant 0 : i32
    %c0_i32_1 = arith.constant 0 : i32
    return %c0_i32, %c0_i32_0 : i32, i32
  }
  func.func @transform_3(%arg0: i32) -> (i32, i32) {
    %c0_i32 = arith.constant 0 : i32
    %c0_i32_0 = arith.constant 0 : i32
    return %arg0, %c0_i32 : i32, i32
  }
}

module attributes {stable_mosaic.version = 11 : i64} {
  func.func @_linear_kernel(%arg0: i32, %arg1: memref<64x32xf32, #tpu.memory_space<vmem>>, %arg2: memref<32x32xf32, #tpu.memory_space<vmem>>, %arg3: memref<1x32xf32, #tpu.memory_space<vmem>>, %arg4: memref<64x32xf32, #tpu.memory_space<vmem>>) attributes {dimension_semantics = [#tpu.dimension_semantics<parallel>], iteration_bounds = array<i64: 2>, scalar_prefetch = 0 : i64, scratch_operands = 0 : i64, tpu.core_type = #tpu.core_type<tc>, window_params = [{transform_indices = @transform_0, window_bounds = array<i64: 64, 32>}, {pipeline_mode = #tpu.pipeline_mode<synchronous>, transform_indices = @transform_1, window_bounds = array<i64: 32, 32>}, {pipeline_mode = #tpu.pipeline_mode<synchronous>, transform_indices = @transform_2, window_bounds = array<i64: 1, 32>}, {transform_indices = @transform_3, window_bounds = array<i64: 64, 32>}]} {
    %c0 = arith.constant 0 : index
    %c0_0 = arith.constant 0 : index
    %0 = vector.load %arg1[%c0, %c0_0] : memref<64x32xf32, #tpu.memory_space<vmem>>, vector<64x32xf32>
    %c0_1 = arith.constant 0 : index
    %c0_2 = arith.constant 0 : index
    %1 = vector.load %arg2[%c0_1, %c0_2] : memref<32x32xf32, #tpu.memory_space<vmem>>, vector<32x32xf32>
    %cst = arith.constant dense<0.000000e+00> : vector<64x32xf32>
    %2 = tpu.matmul %0, %1, %cst {dimension_numbers = #tpu.dot_dimension_numbers<[1], [0], [0], [1], [0, 0, 1, 1], [], []>} : vector<64x32xf32>, vector<32x32xf32>, vector<64x32xf32> -> vector<64x32xf32>
    %c0_3 = arith.constant 0 : index
    %c0_4 = arith.constant 0 : index
    %3 = vector.load %arg3[%c0_3, %c0_4] : memref<1x32xf32, #tpu.memory_space<vmem>>, vector<1x32xf32>
    %4 = vector.broadcast %3 : vector<1x32xf32> to vector<64x32xf32>
    %5 = arith.addf %2, %4 : vector<64x32xf32>
    %c0_5 = arith.constant 0 : index
    %c0_6 = arith.constant 0 : index
    %6 = vector.load %arg4[%c0_5, %c0_6] : memref<64x32xf32, #tpu.memory_space<vmem>>, vector<64x32xf32>
    tpu.vector_store %arg4[%c0_5, %c0_6], %5 {strides = array<i32>} : memref<64x32xf32, #tpu.memory_space<vmem>>, vector<64x32xf32>,
    return
  }
  func.func @transform_0(%arg0: i32) -> (i32, i32) {
    %c0_i32 = arith.constant 0 : i32
    %c0_i32_0 = arith.constant 0 : i32
    return %arg0, %c0_i32 : i32, i32
  }
  func.func @transform_1(%arg0: i32) -> (i32, i32) {
    %c0_i32 = arith.constant 0 : i32
    %c0_i32_0 = arith.constant 0 : i32
    %c0_i32_1 = arith.constant 0 : i32
    return %c0_i32, %c0_i32_0 : i32, i32
  }
  func.func @transform_2(%arg0: i32) -> (i32, i32) {
    %c0_i32 = arith.constant 0 : i32
    %c0_i32_0 = arith.constant 0 : i32
    %c0_i32_1 = arith.constant 0 : i32
    return %c0_i32, %c0_i32_0 : i32, i32
  }
  func.func @transform_3(%arg0: i32) -> (i32, i32) {
    %c0_i32 = arith.constant 0 : i32
    %c0_i32_0 = arith.constant 0 : i32
    return %arg0, %c0_i32 : i32, i32
  }
}

module attributes {stable_mosaic.version = 11 : i64} {
  func.func @_linear_kernel(%arg0: i32, %arg1: memref<64x32xf32, #tpu.memory_space<vmem>>, %arg2: memref<32x64xf32, #tpu.memory_space<vmem>>, %arg3: memref<1x64xf32, #tpu.memory_space<vmem>>, %arg4: memref<64x64xf32, #tpu.memory_space<vmem>>) attributes {dimension_semantics = [#tpu.dimension_semantics<parallel>], iteration_bounds = array<i64: 2>, scalar_prefetch = 0 : i64, scratch_operands = 0 : i64, tpu.core_type = #tpu.core_type<tc>, window_params = [{transform_indices = @transform_0, window_bounds = array<i64: 64, 32>}, {pipeline_mode = #tpu.pipeline_mode<synchronous>, transform_indices = @transform_1, window_bounds = array<i64: 32, 64>}, {pipeline_mode = #tpu.pipeline_mode<synchronous>, transform_indices = @transform_2, window_bounds = array<i64: 1, 64>}, {transform_indices = @transform_3, window_bounds = array<i64: 64, 64>}]} {
    %c0 = arith.constant 0 : index
    %c0_0 = arith.constant 0 : index
    %0 = vector.load %arg1[%c0, %c0_0] : memref<64x32xf32, #tpu.memory_space<vmem>>, vector<64x32xf32>
    %c0_1 = arith.constant 0 : index
    %c0_2 = arith.constant 0 : index
    %1 = vector.load %arg2[%c0_1, %c0_2] : memref<32x64xf32, #tpu.memory_space<vmem>>, vector<32x64xf32>
    %cst = arith.constant dense<0.000000e+00> : vector<64x64xf32>
    %2 = tpu.matmul %0, %1, %cst {dimension_numbers = #tpu.dot_dimension_numbers<[1], [0], [0], [1], [0, 0, 1, 1], [], []>} : vector<64x32xf32>, vector<32x64xf32>, vector<64x64xf32> -> vector<64x64xf32>
    %c0_3 = arith.constant 0 : index
    %c0_4 = arith.constant 0 : index
    %3 = vector.load %arg3[%c0_3, %c0_4] : memref<1x64xf32, #tpu.memory_space<vmem>>, vector<1x64xf32>
    %4 = vector.broadcast %3 : vector<1x64xf32> to vector<64x64xf32>
    %5 = arith.addf %2, %4 : vector<64x64xf32>
    %c0_5 = arith.constant 0 : index
    %c0_6 = arith.constant 0 : index
    %6 = vector.load %arg4[%c0_5, %c0_6] : memref<64x64xf32, #tpu.memory_space<vmem>>, vector<64x64xf32>
    tpu.vector_store %arg4[%c0_5, %c0_6], %5 {strides = array<i32>} : memref<64x64xf32, #tpu.memory_space<vmem>>, vector<64x64xf32>,
    return
  }
  func.func @transform_0(%arg0: i32) -> (i32, i32) {
    %c0_i32 = arith.constant 0 : i32
    %c0_i32_0 = arith.constant 0 : i32
    return %arg0, %c0_i32 : i32, i32
  }
  func.func @transform_1(%arg0: i32) -> (i32, i32) {
    %c0_i32 = arith.constant 0 : i32
    %c0_i32_0 = arith.constant 0 : i32
    %c0_i32_1 = arith.constant 0 : i32
    return %c0_i32, %c0_i32_0 : i32, i32
  }
  func.func @transform_2(%arg0: i32) -> (i32, i32) {
    %c0_i32 = arith.constant 0 : i32
    %c0_i32_0 = arith.constant 0 : i32
    %c0_i32_1 = arith.constant 0 : i32
    return %c0_i32, %c0_i32_0 : i32, i32
  }
  func.func @transform_3(%arg0: i32) -> (i32, i32) {
    %c0_i32 = arith.constant 0 : i32
    %c0_i32_0 = arith.constant 0 : i32
    return %arg0, %c0_i32 : i32, i32
  }
}

module attributes {stable_mosaic.version = 11 : i64} {
  func.func @_cross_attn_kernel(%arg0: i32, %arg1: memref<64x32xf32, #tpu.memory_space<vmem>>, %arg2: memref<64x64xf32, #tpu.memory_space<vmem>>, %arg3: memref<64x32xf32, #tpu.memory_space<vmem>>) attributes {dimension_semantics = [#tpu.dimension_semantics<parallel>], iteration_bounds = array<i64: 2>, scalar_prefetch = 0 : i64, scratch_operands = 0 : i64, tpu.core_type = #tpu.core_type<tc>, window_params = [{transform_indices = @transform_0, window_bounds = array<i64: 64, 32>}, {transform_indices = @transform_1, window_bounds = array<i64: 64, 64>}, {transform_indices = @transform_2, window_bounds = array<i64: 64, 32>}]} {
    %c0 = arith.constant 0 : index
    %c0_0 = arith.constant 0 : index
    %0 = vector.load %arg1[%c0, %c0_0] : memref<64x32xf32, #tpu.memory_space<vmem>>, vector<64x32xf32>
    %c0_1 = arith.constant 0 : index
    %c0_2 = arith.constant 0 : index
    %1 = vector.load %arg2[%c0_1, %c0_2] : memref<64x64xf32, #tpu.memory_space<vmem>>, vector<64x64xf32>
    %2 = vector.extract_strided_slice %1 {offsets = [0, 0], sizes = [64, 32], strides = [1, 1]} : vector<64x64xf32> to vector<64x32xf32>
    %3 = vector.extract_strided_slice %1 {offsets = [0, 32], sizes = [64, 32], strides = [1, 1]} : vector<64x64xf32> to vector<64x32xf32>
    %cst = arith.constant 0.353553385 : f32
    %4 = vector.broadcast %cst : f32 to vector<64x32xf32>
    %5 = arith.mulf %0, %4 : vector<64x32xf32>
    %6 = vector.extract_strided_slice %5 {offsets = [0, 0], sizes = [64, 8], strides = [1, 1]} : vector<64x32xf32> to vector<64x8xf32>
    %7 = vector.extract_strided_slice %2 {offsets = [0, 0], sizes = [64, 8], strides = [1, 1]} : vector<64x32xf32> to vector<64x8xf32>
    %cst_3 = arith.constant dense<0.000000e+00> : vector<64x64xf32>
    %8 = tpu.matmul %6, %7, %cst_3 {dimension_numbers = #tpu.dot_dimension_numbers<[1], [1], [0], [0], [0, 0, 1, 0], [], []>} : vector<64x8xf32>, vector<64x8xf32>, vector<64x64xf32> -> vector<64x64xf32>
    %cst_4 = arith.constant dense<0xFF800000> : vector<64xf32>
    %9 = vector.multi_reduction <maximumf>, %8, %cst_4 [1] : vector<64x64xf32> to vector<64xf32>
    %10 = vector.shape_cast %9 : vector<64xf32> to vector<64x1xf32>
    %11 = vector.broadcast %10 : vector<64x1xf32> to vector<64x64xf32>
    %12 = arith.subf %8, %11 : vector<64x64xf32>
    %13 = math.exp %12 : vector<64x64xf32>
    %cst_5 = arith.constant dense<0.000000e+00> : vector<64xf32>
    %14 = vector.multi_reduction <add>, %13, %cst_5 [1] : vector<64x64xf32> to vector<64xf32>
    %15 = vector.shape_cast %14 : vector<64xf32> to vector<64x1xf32>
    %16 = tpu.reciprocal %15 {approx = true} : vector<64x1xf32> -> vector<64x1xf32>
    %17 = vector.broadcast %16 : vector<64x1xf32> to vector<64x64xf32>
    %18 = arith.mulf %13, %17 : vector<64x64xf32>
    %19 = vector.extract_strided_slice %3 {offsets = [0, 0], sizes = [64, 8], strides = [1, 1]} : vector<64x32xf32> to vector<64x8xf32>
    %cst_6 = arith.constant dense<0.000000e+00> : vector<64x8xf32>
    %20 = tpu.matmul %18, %19, %cst_6 {dimension_numbers = #tpu.dot_dimension_numbers<[1], [0], [0], [1], [0, 0, 1, 1], [], []>} : vector<64x64xf32>, vector<64x8xf32>, vector<64x8xf32> -> vector<64x8xf32>
    %21 = vector.extract_strided_slice %5 {offsets = [0, 8], sizes = [64, 8], strides = [1, 1]} : vector<64x32xf32> to vector<64x8xf32>
    %22 = vector.extract_strided_slice %2 {offsets = [0, 8], sizes = [64, 8], strides = [1, 1]} : vector<64x32xf32> to vector<64x8xf32>
    %cst_7 = arith.constant dense<0.000000e+00> : vector<64x64xf32>
    %23 = tpu.matmul %21, %22, %cst_7 {dimension_numbers = #tpu.dot_dimension_numbers<[1], [1], [0], [0], [0, 0, 1, 0], [], []>} : vector<64x8xf32>, vector<64x8xf32>, vector<64x64xf32> -> vector<64x64xf32>
    %cst_8 = arith.constant dense<0xFF800000> : vector<64xf32>
    %24 = vector.multi_reduction <maximumf>, %23, %cst_8 [1] : vector<64x64xf32> to vector<64xf32>
    %25 = vector.shape_cast %24 : vector<64xf32> to vector<64x1xf32>
    %26 = vector.broadcast %25 : vector<64x1xf32> to vector<64x64xf32>
    %27 = arith.subf %23, %26 : vector<64x64xf32>
    %28 = math.exp %27 : vector<64x64xf32>
    %cst_9 = arith.constant dense<0.000000e+00> : vector<64xf32>
    %29 = vector.multi_reduction <add>, %28, %cst_9 [1] : vector<64x64xf32> to vector<64xf32>
    %30 = vector.shape_cast %29 : vector<64xf32> to vector<64x1xf32>
    %31 = tpu.reciprocal %30 {approx = true} : vector<64x1xf32> -> vector<64x1xf32>
    %32 = vector.broadcast %31 : vector<64x1xf32> to vector<64x64xf32>
    %33 = arith.mulf %28, %32 : vector<64x64xf32>
    %34 = vector.extract_strided_slice %3 {offsets = [0, 8], sizes = [64, 8], strides = [1, 1]} : vector<64x32xf32> to vector<64x8xf32>
    %cst_10 = arith.constant dense<0.000000e+00> : vector<64x8xf32>
    %35 = tpu.matmul %33, %34, %cst_10 {dimension_numbers = #tpu.dot_dimension_numbers<[1], [0], [0], [1], [0, 0, 1, 1], [], []>} : vector<64x64xf32>, vector<64x8xf32>, vector<64x8xf32> -> vector<64x8xf32>
    %36 = vector.extract_strided_slice %5 {offsets = [0, 16], sizes = [64, 8], strides = [1, 1]} : vector<64x32xf32> to vector<64x8xf32>
    %37 = vector.extract_strided_slice %2 {offsets = [0, 16], sizes = [64, 8], strides = [1, 1]} : vector<64x32xf32> to vector<64x8xf32>
    %cst_11 = arith.constant dense<0.000000e+00> : vector<64x64xf32>
    %38 = tpu.matmul %36, %37, %cst_11 {dimension_numbers = #tpu.dot_dimension_numbers<[1], [1], [0], [0], [0, 0, 1, 0], [], []>} : vector<64x8xf32>, vector<64x8xf32>, vector<64x64xf32> -> vector<64x64xf32>
    %cst_12 = arith.constant dense<0xFF800000> : vector<64xf32>
    %39 = vector.multi_reduction <maximumf>, %38, %cst_12 [1] : vector<64x64xf32> to vector<64xf32>
    %40 = vector.shape_cast %39 : vector<64xf32> to vector<64x1xf32>
    %41 = vector.broadcast %40 : vector<64x1xf32> to vector<64x64xf32>
    %42 = arith.subf %38, %41 : vector<64x64xf32>
    %43 = math.exp %42 : vector<64x64xf32>
    %cst_13 = arith.constant dense<0.000000e+00> : vector<64xf32>
    %44 = vector.multi_reduction <add>, %43, %cst_13 [1] : vector<64x64xf32> to vector<64xf32>
    %45 = vector.shape_cast %44 : vector<64xf32> to vector<64x1xf32>
    %46 = tpu.reciprocal %45 {approx = true} : vector<64x1xf32> -> vector<64x1xf32>
    %47 = vector.broadcast %46 : vector<64x1xf32> to vector<64x64xf32>
    %48 = arith.mulf %43, %47 : vector<64x64xf32>
    %49 = vector.extract_strided_slice %3 {offsets = [0, 16], sizes = [64, 8], strides = [1, 1]} : vector<64x32xf32> to vector<64x8xf32>
    %cst_14 = arith.constant dense<0.000000e+00> : vector<64x8xf32>
    %50 = tpu.matmul %48, %49, %cst_14 {dimension_numbers = #tpu.dot_dimension_numbers<[1], [0], [0], [1], [0, 0, 1, 1], [], []>} : vector<64x64xf32>, vector<64x8xf32>, vector<64x8xf32> -> vector<64x8xf32>
    %51 = vector.extract_strided_slice %5 {offsets = [0, 24], sizes = [64, 8], strides = [1, 1]} : vector<64x32xf32> to vector<64x8xf32>
    %52 = vector.extract_strided_slice %2 {offsets = [0, 24], sizes = [64, 8], strides = [1, 1]} : vector<64x32xf32> to vector<64x8xf32>
    %cst_15 = arith.constant dense<0.000000e+00> : vector<64x64xf32>
    %53 = tpu.matmul %51, %52, %cst_15 {dimension_numbers = #tpu.dot_dimension_numbers<[1], [1], [0], [0], [0, 0, 1, 0], [], []>} : vector<64x8xf32>, vector<64x8xf32>, vector<64x64xf32> -> vector<64x64xf32>
    %cst_16 = arith.constant dense<0xFF800000> : vector<64xf32>
    %54 = vector.multi_reduction <maximumf>, %53, %cst_16 [1] : vector<64x64xf32> to vector<64xf32>
    %55 = vector.shape_cast %54 : vector<64xf32> to vector<64x1xf32>
    %56 = vector.broadcast %55 : vector<64x1xf32> to vector<64x64xf32>
    %57 = arith.subf %53, %56 : vector<64x64xf32>
    %58 = math.exp %57 : vector<64x64xf32>
    %cst_17 = arith.constant dense<0.000000e+00> : vector<64xf32>
    %59 = vector.multi_reduction <add>, %58, %cst_17 [1] : vector<64x64xf32> to vector<64xf32>
    %60 = vector.shape_cast %59 : vector<64xf32> to vector<64x1xf32>
    %61 = tpu.reciprocal %60 {approx = true} : vector<64x1xf32> -> vector<64x1xf32>
    %62 = vector.broadcast %61 : vector<64x1xf32> to vector<64x64xf32>
    %63 = arith.mulf %58, %62 : vector<64x64xf32>
    %64 = vector.extract_strided_slice %3 {offsets = [0, 24], sizes = [64, 8], strides = [1, 1]} : vector<64x32xf32> to vector<64x8xf32>
    %cst_18 = arith.constant dense<0.000000e+00> : vector<64x8xf32>
    %65 = tpu.matmul %63, %64, %cst_18 {dimension_numbers = #tpu.dot_dimension_numbers<[1], [0], [0], [1], [0, 0, 1, 1], [], []>} : vector<64x64xf32>, vector<64x8xf32>, vector<64x8xf32> -> vector<64x8xf32>
    %66 = tpu.concatenate %20, %35, %50, %65 in 1 : vector<64x8xf32>, vector<64x8xf32>, vector<64x8xf32>, vector<64x8xf32> -> vector<64x32xf32>
    %c0_19 = arith.constant 0 : index
    %c0_20 = arith.constant 0 : index
    %67 = vector.load %arg3[%c0_19, %c0_20] : memref<64x32xf32, #tpu.memory_space<vmem>>, vector<64x32xf32>
    tpu.vector_store %arg3[%c0_19, %c0_20], %66 {strides = array<i32>} : memref<64x32xf32, #tpu.memory_space<vmem>>, vector<64x32xf32>,
    return
  }
  func.func @transform_0(%arg0: i32) -> (i32, i32) {
    %c0_i32 = arith.constant 0 : i32
    %c0_i32_0 = arith.constant 0 : i32
    return %arg0, %c0_i32 : i32, i32
  }
  func.func @transform_1(%arg0: i32) -> (i32, i32) {
    %c0_i32 = arith.constant 0 : i32
    %c0_i32_0 = arith.constant 0 : i32
    return %arg0, %c0_i32 : i32, i32
  }
  func.func @transform_2(%arg0: i32) -> (i32, i32) {
    %c0_i32 = arith.constant 0 : i32
    %c0_i32_0 = arith.constant 0 : i32
    return %arg0, %c0_i32 : i32, i32
  }
}

module attributes {stable_mosaic.version = 11 : i64} {
  func.func @_outproj_add_ln_kernel(%arg0: i32, %arg1: memref<64x32xf32, #tpu.memory_space<vmem>>, %arg2: memref<32x32xf32, #tpu.memory_space<vmem>>, %arg3: memref<1x32xf32, #tpu.memory_space<vmem>>, %arg4: memref<64x32xf32, #tpu.memory_space<vmem>>, %arg5: memref<1x32xf32, #tpu.memory_space<vmem>>, %arg6: memref<1x32xf32, #tpu.memory_space<vmem>>, %arg7: memref<64x32xf32, #tpu.memory_space<vmem>>) attributes {dimension_semantics = [#tpu.dimension_semantics<parallel>], iteration_bounds = array<i64: 2>, scalar_prefetch = 0 : i64, scratch_operands = 0 : i64, tpu.core_type = #tpu.core_type<tc>, window_params = [{transform_indices = @transform_0, window_bounds = array<i64: 64, 32>}, {pipeline_mode = #tpu.pipeline_mode<synchronous>, transform_indices = @transform_1, window_bounds = array<i64: 32, 32>}, {pipeline_mode = #tpu.pipeline_mode<synchronous>, transform_indices = @transform_2, window_bounds = array<i64: 1, 32>}, {transform_indices = @transform_3, window_bounds = array<i64: 64, 32>}, {pipeline_mode = #tpu.pipeline_mode<synchronous>, transform_indices = @transform_4, window_bounds = array<i64: 1, 32>}, {pipeline_mode = #tpu.pipeline_mode<synchronous>, transform_indices = @transform_5, window_bounds = array<i64: 1, 32>}, {transform_indices = @transform_6, window_bounds = array<i64: 64, 32>}]} {
    %c0 = arith.constant 0 : index
    %c0_0 = arith.constant 0 : index
    %0 = vector.load %arg1[%c0, %c0_0] : memref<64x32xf32, #tpu.memory_space<vmem>>, vector<64x32xf32>
    %c0_1 = arith.constant 0 : index
    %c0_2 = arith.constant 0 : index
    %1 = vector.load %arg2[%c0_1, %c0_2] : memref<32x32xf32, #tpu.memory_space<vmem>>, vector<32x32xf32>
    %cst = arith.constant dense<0.000000e+00> : vector<64x32xf32>
    %2 = tpu.matmul %0, %1, %cst {dimension_numbers = #tpu.dot_dimension_numbers<[1], [0], [0], [1], [0, 0, 1, 1], [], []>} : vector<64x32xf32>, vector<32x32xf32>, vector<64x32xf32> -> vector<64x32xf32>
    %c0_3 = arith.constant 0 : index
    %c0_4 = arith.constant 0 : index
    %3 = vector.load %arg3[%c0_3, %c0_4] : memref<1x32xf32, #tpu.memory_space<vmem>>, vector<1x32xf32>
    %4 = vector.broadcast %3 : vector<1x32xf32> to vector<64x32xf32>
    %5 = arith.addf %2, %4 : vector<64x32xf32>
    %c0_5 = arith.constant 0 : index
    %c0_6 = arith.constant 0 : index
    %6 = vector.load %arg4[%c0_5, %c0_6] : memref<64x32xf32, #tpu.memory_space<vmem>>, vector<64x32xf32>
    %7 = arith.addf %6, %5 : vector<64x32xf32>
    %cst_7 = arith.constant dense<0.000000e+00> : vector<64xf32>
    %8 = vector.multi_reduction <add>, %7, %cst_7 [1] : vector<64x32xf32> to vector<64xf32>
    %9 = vector.shape_cast %8 : vector<64xf32> to vector<64x1xf32>
    %cst_8 = arith.constant 3.200000e+01 : f32
    %10 = vector.broadcast %cst_8 : f32 to vector<64x1xf32>
    %11 = arith.divf %9, %10 : vector<64x1xf32>
    %12 = vector.broadcast %11 : vector<64x1xf32> to vector<64x32xf32>
    %13 = arith.subf %7, %12 : vector<64x32xf32>
    %14 = arith.mulf %13, %13 : vector<64x32xf32>
    %cst_9 = arith.constant dense<0.000000e+00> : vector<64xf32>
    %15 = vector.multi_reduction <add>, %14, %cst_9 [1] : vector<64x32xf32> to vector<64xf32>
    %16 = vector.shape_cast %15 : vector<64xf32> to vector<64x1xf32>
    %cst_10 = arith.constant 3.200000e+01 : f32
    %17 = vector.broadcast %cst_10 : f32 to vector<64x1xf32>
    %18 = arith.divf %16, %17 : vector<64x1xf32>
    %19 = vector.broadcast %11 : vector<64x1xf32> to vector<64x32xf32>
    %20 = arith.subf %7, %19 : vector<64x32xf32>
    %cst_11 = arith.constant 9.99999974E-6 : f32
    %21 = vector.broadcast %cst_11 : f32 to vector<64x1xf32>
    %22 = arith.addf %18, %21 : vector<64x1xf32>
    %23 = math.rsqrt %22 : vector<64x1xf32>
    %24 = vector.broadcast %23 : vector<64x1xf32> to vector<64x32xf32>
    %25 = arith.mulf %20, %24 : vector<64x32xf32>
    %c0_12 = arith.constant 0 : index
    %c0_13 = arith.constant 0 : index
    %26 = vector.load %arg5[%c0_12, %c0_13] : memref<1x32xf32, #tpu.memory_space<vmem>>, vector<1x32xf32>
    %27 = vector.broadcast %26 : vector<1x32xf32> to vector<64x32xf32>
    %28 = arith.mulf %25, %27 : vector<64x32xf32>
    %c0_14 = arith.constant 0 : index
    %c0_15 = arith.constant 0 : index
    %29 = vector.load %arg6[%c0_14, %c0_15] : memref<1x32xf32, #tpu.memory_space<vmem>>, vector<1x32xf32>
    %30 = vector.broadcast %29 : vector<1x32xf32> to vector<64x32xf32>
    %31 = arith.addf %28, %30 : vector<64x32xf32>
    %c0_16 = arith.constant 0 : index
    %c0_17 = arith.constant 0 : index
    %32 = vector.load %arg7[%c0_16, %c0_17] : memref<64x32xf32, #tpu.memory_space<vmem>>, vector<64x32xf32>
    tpu.vector_store %arg7[%c0_16, %c0_17], %31 {strides = array<i32>} : memref<64x32xf32, #tpu.memory_space<vmem>>, vector<64x32xf32>,
    return
  }
  func.func @transform_0(%arg0: i32) -> (i32, i32) {
    %c0_i32 = arith.constant 0 : i32
    %c0_i32_0 = arith.constant 0 : i32
    return %arg0, %c0_i32 : i32, i32
  }
  func.func @transform_1(%arg0: i32) -> (i32, i32) {
    %c0_i32 = arith.constant 0 : i32
    %c0_i32_0 = arith.constant 0 : i32
    %c0_i32_1 = arith.constant 0 : i32
    return %c0_i32, %c0_i32_0 : i32, i32
  }
  func.func @transform_2(%arg0: i32) -> (i32, i32) {
    %c0_i32 = arith.constant 0 : i32
    %c0_i32_0 = arith.constant 0 : i32
    %c0_i32_1 = arith.constant 0 : i32
    return %c0_i32, %c0_i32_0 : i32, i32
  }
  func.func @transform_3(%arg0: i32) -> (i32, i32) {
    %c0_i32 = arith.constant 0 : i32
    %c0_i32_0 = arith.constant 0 : i32
    return %arg0, %c0_i32 : i32, i32
  }
  func.func @transform_4(%arg0: i32) -> (i32, i32) {
    %c0_i32 = arith.constant 0 : i32
    %c0_i32_0 = arith.constant 0 : i32
    %c0_i32_1 = arith.constant 0 : i32
    return %c0_i32, %c0_i32_0 : i32, i32
  }
  func.func @transform_5(%arg0: i32) -> (i32, i32) {
    %c0_i32 = arith.constant 0 : i32
    %c0_i32_0 = arith.constant 0 : i32
    %c0_i32_1 = arith.constant 0 : i32
    return %c0_i32, %c0_i32_0 : i32, i32
  }
  func.func @transform_6(%arg0: i32) -> (i32, i32) {
    %c0_i32 = arith.constant 0 : i32
    %c0_i32_0 = arith.constant 0 : i32
    return %arg0, %c0_i32 : i32, i32
  }
}

module attributes {stable_mosaic.version = 11 : i64} {
  func.func @_ffn_add_ln_kernel(%arg0: i32, %arg1: memref<64x32xf32, #tpu.memory_space<vmem>>, %arg2: memref<32x64xf32, #tpu.memory_space<vmem>>, %arg3: memref<1x64xf32, #tpu.memory_space<vmem>>, %arg4: memref<64x32xf32, #tpu.memory_space<vmem>>, %arg5: memref<1x32xf32, #tpu.memory_space<vmem>>, %arg6: memref<1x32xf32, #tpu.memory_space<vmem>>, %arg7: memref<1x32xf32, #tpu.memory_space<vmem>>, %arg8: memref<64x32xf32, #tpu.memory_space<vmem>>) attributes {dimension_semantics = [#tpu.dimension_semantics<parallel>], iteration_bounds = array<i64: 2>, scalar_prefetch = 0 : i64, scratch_operands = 0 : i64, tpu.core_type = #tpu.core_type<tc>, window_params = [{transform_indices = @transform_0, window_bounds = array<i64: 64, 32>}, {pipeline_mode = #tpu.pipeline_mode<synchronous>, transform_indices = @transform_1, window_bounds = array<i64: 32, 64>}, {pipeline_mode = #tpu.pipeline_mode<synchronous>, transform_indices = @transform_2, window_bounds = array<i64: 1, 64>}, {pipeline_mode = #tpu.pipeline_mode<synchronous>, transform_indices = @transform_3, window_bounds = array<i64: 64, 32>}, {pipeline_mode = #tpu.pipeline_mode<synchronous>, transform_indices = @transform_4, window_bounds = array<i64: 1, 32>}, {pipeline_mode = #tpu.pipeline_mode<synchronous>, transform_indices = @transform_5, window_bounds = array<i64: 1, 32>}, {pipeline_mode = #tpu.pipeline_mode<synchronous>, transform_indices = @transform_6, window_bounds = array<i64: 1, 32>}, {transform_indices = @transform_7, window_bounds = array<i64: 64, 32>}]} {
    %c0 = arith.constant 0 : index
    %c0_0 = arith.constant 0 : index
    %0 = vector.load %arg1[%c0, %c0_0] : memref<64x32xf32, #tpu.memory_space<vmem>>, vector<64x32xf32>
    %c0_1 = arith.constant 0 : index
    %c0_2 = arith.constant 0 : index
    %1 = vector.load %arg2[%c0_1, %c0_2] : memref<32x64xf32, #tpu.memory_space<vmem>>, vector<32x64xf32>
    %cst = arith.constant dense<0.000000e+00> : vector<64x64xf32>
    %2 = tpu.matmul %0, %1, %cst {dimension_numbers = #tpu.dot_dimension_numbers<[1], [0], [0], [1], [0, 0, 1, 1], [], []>} : vector<64x32xf32>, vector<32x64xf32>, vector<64x64xf32> -> vector<64x64xf32>
    %c0_3 = arith.constant 0 : index
    %c0_4 = arith.constant 0 : index
    %3 = vector.load %arg3[%c0_3, %c0_4] : memref<1x64xf32, #tpu.memory_space<vmem>>, vector<1x64xf32>
    %4 = vector.broadcast %3 : vector<1x64xf32> to vector<64x64xf32>
    %5 = arith.addf %2, %4 : vector<64x64xf32>
    %cst_5 = arith.constant 0.000000e+00 : f32
    %6 = vector.broadcast %cst_5 : f32 to vector<64x64xf32>
    %7 = arith.maximumf %5, %6 : vector<64x64xf32>
    %c0_6 = arith.constant 0 : index
    %c0_7 = arith.constant 0 : index
    %8 = vector.load %arg4[%c0_6, %c0_7] : memref<64x32xf32, #tpu.memory_space<vmem>>, vector<64x32xf32>
    %cst_8 = arith.constant dense<0.000000e+00> : vector<64x32xf32>
    %9 = tpu.matmul %7, %8, %cst_8 {dimension_numbers = #tpu.dot_dimension_numbers<[1], [0], [0], [1], [0, 0, 1, 1], [], []>} : vector<64x64xf32>, vector<64x32xf32>, vector<64x32xf32> -> vector<64x32xf32>
    %c0_9 = arith.constant 0 : index
    %c0_10 = arith.constant 0 : index
    %10 = vector.load %arg5[%c0_9, %c0_10] : memref<1x32xf32, #tpu.memory_space<vmem>>, vector<1x32xf32>
    %11 = vector.broadcast %10 : vector<1x32xf32> to vector<64x32xf32>
    %12 = arith.addf %9, %11 : vector<64x32xf32>
    %13 = arith.addf %0, %12 : vector<64x32xf32>
    %cst_11 = arith.constant dense<0.000000e+00> : vector<64xf32>
    %14 = vector.multi_reduction <add>, %13, %cst_11 [1] : vector<64x32xf32> to vector<64xf32>
    %15 = vector.shape_cast %14 : vector<64xf32> to vector<64x1xf32>
    %cst_12 = arith.constant 3.200000e+01 : f32
    %16 = vector.broadcast %cst_12 : f32 to vector<64x1xf32>
    %17 = arith.divf %15, %16 : vector<64x1xf32>
    %18 = vector.broadcast %17 : vector<64x1xf32> to vector<64x32xf32>
    %19 = arith.subf %13, %18 : vector<64x32xf32>
    %20 = arith.mulf %19, %19 : vector<64x32xf32>
    %cst_13 = arith.constant dense<0.000000e+00> : vector<64xf32>
    %21 = vector.multi_reduction <add>, %20, %cst_13 [1] : vector<64x32xf32> to vector<64xf32>
    %22 = vector.shape_cast %21 : vector<64xf32> to vector<64x1xf32>
    %cst_14 = arith.constant 3.200000e+01 : f32
    %23 = vector.broadcast %cst_14 : f32 to vector<64x1xf32>
    %24 = arith.divf %22, %23 : vector<64x1xf32>
    %25 = vector.broadcast %17 : vector<64x1xf32> to vector<64x32xf32>
    %26 = arith.subf %13, %25 : vector<64x32xf32>
    %cst_15 = arith.constant 9.99999974E-6 : f32
    %27 = vector.broadcast %cst_15 : f32 to vector<64x1xf32>
    %28 = arith.addf %24, %27 : vector<64x1xf32>
    %29 = math.rsqrt %28 : vector<64x1xf32>
    %30 = vector.broadcast %29 : vector<64x1xf32> to vector<64x32xf32>
    %31 = arith.mulf %26, %30 : vector<64x32xf32>
    %c0_16 = arith.constant 0 : index
    %c0_17 = arith.constant 0 : index
    %32 = vector.load %arg6[%c0_16, %c0_17] : memref<1x32xf32, #tpu.memory_space<vmem>>, vector<1x32xf32>
    %33 = vector.broadcast %32 : vector<1x32xf32> to vector<64x32xf32>
    %34 = arith.mulf %31, %33 : vector<64x32xf32>
    %c0_18 = arith.constant 0 : index
    %c0_19 = arith.constant 0 : index
    %35 = vector.load %arg7[%c0_18, %c0_19] : memref<1x32xf32, #tpu.memory_space<vmem>>, vector<1x32xf32>
    %36 = vector.broadcast %35 : vector<1x32xf32> to vector<64x32xf32>
    %37 = arith.addf %34, %36 : vector<64x32xf32>
    %c0_20 = arith.constant 0 : index
    %c0_21 = arith.constant 0 : index
    %38 = vector.load %arg8[%c0_20, %c0_21] : memref<64x32xf32, #tpu.memory_space<vmem>>, vector<64x32xf32>
    tpu.vector_store %arg8[%c0_20, %c0_21], %37 {strides = array<i32>} : memref<64x32xf32, #tpu.memory_space<vmem>>, vector<64x32xf32>,
    return
  }
  func.func @transform_0(%arg0: i32) -> (i32, i32) {
    %c0_i32 = arith.constant 0 : i32
    %c0_i32_0 = arith.constant 0 : i32
    return %arg0, %c0_i32 : i32, i32
  }
  func.func @transform_1(%arg0: i32) -> (i32, i32) {
    %c0_i32 = arith.constant 0 : i32
    %c0_i32_0 = arith.constant 0 : i32
    %c0_i32_1 = arith.constant 0 : i32
    return %c0_i32, %c0_i32_0 : i32, i32
  }
  func.func @transform_2(%arg0: i32) -> (i32, i32) {
    %c0_i32 = arith.constant 0 : i32
    %c0_i32_0 = arith.constant 0 : i32
    %c0_i32_1 = arith.constant 0 : i32
    return %c0_i32, %c0_i32_0 : i32, i32
  }
  func.func @transform_3(%arg0: i32) -> (i32, i32) {
    %c0_i32 = arith.constant 0 : i32
    %c0_i32_0 = arith.constant 0 : i32
    %c0_i32_1 = arith.constant 0 : i32
    return %c0_i32, %c0_i32_0 : i32, i32
  }
  func.func @transform_4(%arg0: i32) -> (i32, i32) {
    %c0_i32 = arith.constant 0 : i32
    %c0_i32_0 = arith.constant 0 : i32
    %c0_i32_1 = arith.constant 0 : i32
    return %c0_i32, %c0_i32_0 : i32, i32
  }
  func.func @transform_5(%arg0: i32) -> (i32, i32) {
    %c0_i32 = arith.constant 0 : i32
    %c0_i32_0 = arith.constant 0 : i32
    %c0_i32_1 = arith.constant 0 : i32
    return %c0_i32, %c0_i32_0 : i32, i32
  }
  func.func @transform_6(%arg0: i32) -> (i32, i32) {
    %c0_i32 = arith.constant 0 : i32
    %c0_i32_0 = arith.constant 0 : i32
    %c0_i32_1 = arith.constant 0 : i32
    return %c0_i32, %c0_i32_0 : i32, i32
  }
  func.func @transform_7(%arg0: i32) -> (i32, i32) {
    %c0_i32 = arith.constant 0 : i32
    %c0_i32_0 = arith.constant 0 : i32
    return %arg0, %c0_i32 : i32, i32
  }
}

module attributes {stable_mosaic.version = 11 : i64} {
  func.func @_linear_kernel(%arg0: i32, %arg1: memref<64x32xf32, #tpu.memory_space<vmem>>, %arg2: memref<32x96xf32, #tpu.memory_space<vmem>>, %arg3: memref<1x96xf32, #tpu.memory_space<vmem>>, %arg4: memref<64x96xf32, #tpu.memory_space<vmem>>) attributes {dimension_semantics = [#tpu.dimension_semantics<parallel>], iteration_bounds = array<i64: 2>, scalar_prefetch = 0 : i64, scratch_operands = 0 : i64, tpu.core_type = #tpu.core_type<tc>, window_params = [{transform_indices = @transform_0, window_bounds = array<i64: 64, 32>}, {pipeline_mode = #tpu.pipeline_mode<synchronous>, transform_indices = @transform_1, window_bounds = array<i64: 32, 96>}, {pipeline_mode = #tpu.pipeline_mode<synchronous>, transform_indices = @transform_2, window_bounds = array<i64: 1, 96>}, {transform_indices = @transform_3, window_bounds = array<i64: 64, 96>}]} {
    %c0 = arith.constant 0 : index
    %c0_0 = arith.constant 0 : index
    %0 = vector.load %arg1[%c0, %c0_0] : memref<64x32xf32, #tpu.memory_space<vmem>>, vector<64x32xf32>
    %c0_1 = arith.constant 0 : index
    %c0_2 = arith.constant 0 : index
    %1 = vector.load %arg2[%c0_1, %c0_2] : memref<32x96xf32, #tpu.memory_space<vmem>>, vector<32x96xf32>
    %cst = arith.constant dense<0.000000e+00> : vector<64x96xf32>
    %2 = tpu.matmul %0, %1, %cst {dimension_numbers = #tpu.dot_dimension_numbers<[1], [0], [0], [1], [0, 0, 1, 1], [], []>} : vector<64x32xf32>, vector<32x96xf32>, vector<64x96xf32> -> vector<64x96xf32>
    %c0_3 = arith.constant 0 : index
    %c0_4 = arith.constant 0 : index
    %3 = vector.load %arg3[%c0_3, %c0_4] : memref<1x96xf32, #tpu.memory_space<vmem>>, vector<1x96xf32>
    %4 = vector.broadcast %3 : vector<1x96xf32> to vector<64x96xf32>
    %5 = arith.addf %2, %4 : vector<64x96xf32>
    %c0_5 = arith.constant 0 : index
    %c0_6 = arith.constant 0 : index
    %6 = vector.load %arg4[%c0_5, %c0_6] : memref<64x96xf32, #tpu.memory_space<vmem>>, vector<64x96xf32>
    tpu.vector_store %arg4[%c0_5, %c0_6], %5 {strides = array<i32>} : memref<64x96xf32, #tpu.memory_space<vmem>>, vector<64x96xf32>,
    return
  }
  func.func @transform_0(%arg0: i32) -> (i32, i32) {
    %c0_i32 = arith.constant 0 : i32
    %c0_i32_0 = arith.constant 0 : i32
    return %arg0, %c0_i32 : i32, i32
  }
  func.func @transform_1(%arg0: i32) -> (i32, i32) {
    %c0_i32 = arith.constant 0 : i32
    %c0_i32_0 = arith.constant 0 : i32
    %c0_i32_1 = arith.constant 0 : i32
    return %c0_i32, %c0_i32_0 : i32, i32
  }
  func.func @transform_2(%arg0: i32) -> (i32, i32) {
    %c0_i32 = arith.constant 0 : i32
    %c0_i32_0 = arith.constant 0 : i32
    %c0_i32_1 = arith.constant 0 : i32
    return %c0_i32, %c0_i32_0 : i32, i32
  }
  func.func @transform_3(%arg0: i32) -> (i32, i32) {
    %c0_i32 = arith.constant 0 : i32
    %c0_i32_0 = arith.constant 0 : i32
    return %arg0, %c0_i32 : i32, i32
  }
}

module attributes {stable_mosaic.version = 11 : i64} {
  func.func @_self_attn_kernel(%arg0: i32, %arg1: memref<64x96xf32, #tpu.memory_space<vmem>>, %arg2: memref<64x32xf32, #tpu.memory_space<vmem>>) attributes {dimension_semantics = [#tpu.dimension_semantics<parallel>], iteration_bounds = array<i64: 2>, scalar_prefetch = 0 : i64, scratch_operands = 0 : i64, tpu.core_type = #tpu.core_type<tc>, window_params = [{transform_indices = @transform_0, window_bounds = array<i64: 64, 96>}, {transform_indices = @transform_1, window_bounds = array<i64: 64, 32>}]} {
    %c0 = arith.constant 0 : index
    %c0_0 = arith.constant 0 : index
    %0 = vector.load %arg1[%c0, %c0_0] : memref<64x96xf32, #tpu.memory_space<vmem>>, vector<64x96xf32>
    %1 = vector.extract_strided_slice %0 {offsets = [0, 0], sizes = [64, 32], strides = [1, 1]} : vector<64x96xf32> to vector<64x32xf32>
    %2 = vector.extract_strided_slice %0 {offsets = [0, 32], sizes = [64, 32], strides = [1, 1]} : vector<64x96xf32> to vector<64x32xf32>
    %3 = vector.extract_strided_slice %0 {offsets = [0, 64], sizes = [64, 32], strides = [1, 1]} : vector<64x96xf32> to vector<64x32xf32>
    %cst = arith.constant 0.353553385 : f32
    %4 = vector.broadcast %cst : f32 to vector<64x32xf32>
    %5 = arith.mulf %1, %4 : vector<64x32xf32>
    %6 = vector.extract_strided_slice %5 {offsets = [0, 0], sizes = [64, 8], strides = [1, 1]} : vector<64x32xf32> to vector<64x8xf32>
    %7 = vector.extract_strided_slice %2 {offsets = [0, 0], sizes = [64, 8], strides = [1, 1]} : vector<64x32xf32> to vector<64x8xf32>
    %cst_1 = arith.constant dense<0.000000e+00> : vector<64x64xf32>
    %8 = tpu.matmul %6, %7, %cst_1 {dimension_numbers = #tpu.dot_dimension_numbers<[1], [1], [0], [0], [0, 0, 1, 0], [], []>} : vector<64x8xf32>, vector<64x8xf32>, vector<64x64xf32> -> vector<64x64xf32>
    %cst_2 = arith.constant dense<0xFF800000> : vector<64xf32>
    %9 = vector.multi_reduction <maximumf>, %8, %cst_2 [1] : vector<64x64xf32> to vector<64xf32>
    %10 = vector.shape_cast %9 : vector<64xf32> to vector<64x1xf32>
    %11 = vector.broadcast %10 : vector<64x1xf32> to vector<64x64xf32>
    %12 = arith.subf %8, %11 : vector<64x64xf32>
    %13 = math.exp %12 : vector<64x64xf32>
    %cst_3 = arith.constant dense<0.000000e+00> : vector<64xf32>
    %14 = vector.multi_reduction <add>, %13, %cst_3 [1] : vector<64x64xf32> to vector<64xf32>
    %15 = vector.shape_cast %14 : vector<64xf32> to vector<64x1xf32>
    %16 = tpu.reciprocal %15 {approx = true} : vector<64x1xf32> -> vector<64x1xf32>
    %17 = vector.broadcast %16 : vector<64x1xf32> to vector<64x64xf32>
    %18 = arith.mulf %13, %17 : vector<64x64xf32>
    %19 = vector.extract_strided_slice %3 {offsets = [0, 0], sizes = [64, 8], strides = [1, 1]} : vector<64x32xf32> to vector<64x8xf32>
    %cst_4 = arith.constant dense<0.000000e+00> : vector<64x8xf32>
    %20 = tpu.matmul %18, %19, %cst_4 {dimension_numbers = #tpu.dot_dimension_numbers<[1], [0], [0], [1], [0, 0, 1, 1], [], []>} : vector<64x64xf32>, vector<64x8xf32>, vector<64x8xf32> -> vector<64x8xf32>
    %21 = vector.extract_strided_slice %5 {offsets = [0, 8], sizes = [64, 8], strides = [1, 1]} : vector<64x32xf32> to vector<64x8xf32>
    %22 = vector.extract_strided_slice %2 {offsets = [0, 8], sizes = [64, 8], strides = [1, 1]} : vector<64x32xf32> to vector<64x8xf32>
    %cst_5 = arith.constant dense<0.000000e+00> : vector<64x64xf32>
    %23 = tpu.matmul %21, %22, %cst_5 {dimension_numbers = #tpu.dot_dimension_numbers<[1], [1], [0], [0], [0, 0, 1, 0], [], []>} : vector<64x8xf32>, vector<64x8xf32>, vector<64x64xf32> -> vector<64x64xf32>
    %cst_6 = arith.constant dense<0xFF800000> : vector<64xf32>
    %24 = vector.multi_reduction <maximumf>, %23, %cst_6 [1] : vector<64x64xf32> to vector<64xf32>
    %25 = vector.shape_cast %24 : vector<64xf32> to vector<64x1xf32>
    %26 = vector.broadcast %25 : vector<64x1xf32> to vector<64x64xf32>
    %27 = arith.subf %23, %26 : vector<64x64xf32>
    %28 = math.exp %27 : vector<64x64xf32>
    %cst_7 = arith.constant dense<0.000000e+00> : vector<64xf32>
    %29 = vector.multi_reduction <add>, %28, %cst_7 [1] : vector<64x64xf32> to vector<64xf32>
    %30 = vector.shape_cast %29 : vector<64xf32> to vector<64x1xf32>
    %31 = tpu.reciprocal %30 {approx = true} : vector<64x1xf32> -> vector<64x1xf32>
    %32 = vector.broadcast %31 : vector<64x1xf32> to vector<64x64xf32>
    %33 = arith.mulf %28, %32 : vector<64x64xf32>
    %34 = vector.extract_strided_slice %3 {offsets = [0, 8], sizes = [64, 8], strides = [1, 1]} : vector<64x32xf32> to vector<64x8xf32>
    %cst_8 = arith.constant dense<0.000000e+00> : vector<64x8xf32>
    %35 = tpu.matmul %33, %34, %cst_8 {dimension_numbers = #tpu.dot_dimension_numbers<[1], [0], [0], [1], [0, 0, 1, 1], [], []>} : vector<64x64xf32>, vector<64x8xf32>, vector<64x8xf32> -> vector<64x8xf32>
    %36 = vector.extract_strided_slice %5 {offsets = [0, 16], sizes = [64, 8], strides = [1, 1]} : vector<64x32xf32> to vector<64x8xf32>
    %37 = vector.extract_strided_slice %2 {offsets = [0, 16], sizes = [64, 8], strides = [1, 1]} : vector<64x32xf32> to vector<64x8xf32>
    %cst_9 = arith.constant dense<0.000000e+00> : vector<64x64xf32>
    %38 = tpu.matmul %36, %37, %cst_9 {dimension_numbers = #tpu.dot_dimension_numbers<[1], [1], [0], [0], [0, 0, 1, 0], [], []>} : vector<64x8xf32>, vector<64x8xf32>, vector<64x64xf32> -> vector<64x64xf32>
    %cst_10 = arith.constant dense<0xFF800000> : vector<64xf32>
    %39 = vector.multi_reduction <maximumf>, %38, %cst_10 [1] : vector<64x64xf32> to vector<64xf32>
    %40 = vector.shape_cast %39 : vector<64xf32> to vector<64x1xf32>
    %41 = vector.broadcast %40 : vector<64x1xf32> to vector<64x64xf32>
    %42 = arith.subf %38, %41 : vector<64x64xf32>
    %43 = math.exp %42 : vector<64x64xf32>
    %cst_11 = arith.constant dense<0.000000e+00> : vector<64xf32>
    %44 = vector.multi_reduction <add>, %43, %cst_11 [1] : vector<64x64xf32> to vector<64xf32>
    %45 = vector.shape_cast %44 : vector<64xf32> to vector<64x1xf32>
    %46 = tpu.reciprocal %45 {approx = true} : vector<64x1xf32> -> vector<64x1xf32>
    %47 = vector.broadcast %46 : vector<64x1xf32> to vector<64x64xf32>
    %48 = arith.mulf %43, %47 : vector<64x64xf32>
    %49 = vector.extract_strided_slice %3 {offsets = [0, 16], sizes = [64, 8], strides = [1, 1]} : vector<64x32xf32> to vector<64x8xf32>
    %cst_12 = arith.constant dense<0.000000e+00> : vector<64x8xf32>
    %50 = tpu.matmul %48, %49, %cst_12 {dimension_numbers = #tpu.dot_dimension_numbers<[1], [0], [0], [1], [0, 0, 1, 1], [], []>} : vector<64x64xf32>, vector<64x8xf32>, vector<64x8xf32> -> vector<64x8xf32>
    %51 = vector.extract_strided_slice %5 {offsets = [0, 24], sizes = [64, 8], strides = [1, 1]} : vector<64x32xf32> to vector<64x8xf32>
    %52 = vector.extract_strided_slice %2 {offsets = [0, 24], sizes = [64, 8], strides = [1, 1]} : vector<64x32xf32> to vector<64x8xf32>
    %cst_13 = arith.constant dense<0.000000e+00> : vector<64x64xf32>
    %53 = tpu.matmul %51, %52, %cst_13 {dimension_numbers = #tpu.dot_dimension_numbers<[1], [1], [0], [0], [0, 0, 1, 0], [], []>} : vector<64x8xf32>, vector<64x8xf32>, vector<64x64xf32> -> vector<64x64xf32>
    %cst_14 = arith.constant dense<0xFF800000> : vector<64xf32>
    %54 = vector.multi_reduction <maximumf>, %53, %cst_14 [1] : vector<64x64xf32> to vector<64xf32>
    %55 = vector.shape_cast %54 : vector<64xf32> to vector<64x1xf32>
    %56 = vector.broadcast %55 : vector<64x1xf32> to vector<64x64xf32>
    %57 = arith.subf %53, %56 : vector<64x64xf32>
    %58 = math.exp %57 : vector<64x64xf32>
    %cst_15 = arith.constant dense<0.000000e+00> : vector<64xf32>
    %59 = vector.multi_reduction <add>, %58, %cst_15 [1] : vector<64x64xf32> to vector<64xf32>
    %60 = vector.shape_cast %59 : vector<64xf32> to vector<64x1xf32>
    %61 = tpu.reciprocal %60 {approx = true} : vector<64x1xf32> -> vector<64x1xf32>
    %62 = vector.broadcast %61 : vector<64x1xf32> to vector<64x64xf32>
    %63 = arith.mulf %58, %62 : vector<64x64xf32>
    %64 = vector.extract_strided_slice %3 {offsets = [0, 24], sizes = [64, 8], strides = [1, 1]} : vector<64x32xf32> to vector<64x8xf32>
    %cst_16 = arith.constant dense<0.000000e+00> : vector<64x8xf32>
    %65 = tpu.matmul %63, %64, %cst_16 {dimension_numbers = #tpu.dot_dimension_numbers<[1], [0], [0], [1], [0, 0, 1, 1], [], []>} : vector<64x64xf32>, vector<64x8xf32>, vector<64x8xf32> -> vector<64x8xf32>
    %66 = tpu.concatenate %20, %35, %50, %65 in 1 : vector<64x8xf32>, vector<64x8xf32>, vector<64x8xf32>, vector<64x8xf32> -> vector<64x32xf32>
    %c0_17 = arith.constant 0 : index
    %c0_18 = arith.constant 0 : index
    %67 = vector.load %arg2[%c0_17, %c0_18] : memref<64x32xf32, #tpu.memory_space<vmem>>, vector<64x32xf32>
    tpu.vector_store %arg2[%c0_17, %c0_18], %66 {strides = array<i32>} : memref<64x32xf32, #tpu.memory_space<vmem>>, vector<64x32xf32>,
    return
  }
  func.func @transform_0(%arg0: i32) -> (i32, i32) {
    %c0_i32 = arith.constant 0 : i32
    %c0_i32_0 = arith.constant 0 : i32
    return %arg0, %c0_i32 : i32, i32
  }
  func.func @transform_1(%arg0: i32) -> (i32, i32) {
    %c0_i32 = arith.constant 0 : i32
    %c0_i32_0 = arith.constant 0 : i32
    return %arg0, %c0_i32 : i32, i32
  }
}

module attributes {stable_mosaic.version = 11 : i64} {
  func.func @_final_head_kernel(%arg0: i32, %arg1: memref<64x32xf32, #tpu.memory_space<vmem>>, %arg2: memref<1x32xf32, #tpu.memory_space<vmem>>, %arg3: memref<1x1xf32, #tpu.memory_space<vmem>>, %arg4: memref<64x1xf32, #tpu.memory_space<vmem>>) attributes {dimension_semantics = [#tpu.dimension_semantics<parallel>], iteration_bounds = array<i64: 2>, scalar_prefetch = 0 : i64, scratch_operands = 0 : i64, tpu.core_type = #tpu.core_type<tc>, window_params = [{transform_indices = @transform_0, window_bounds = array<i64: 64, 32>}, {pipeline_mode = #tpu.pipeline_mode<synchronous>, transform_indices = @transform_1, window_bounds = array<i64: 1, 32>}, {pipeline_mode = #tpu.pipeline_mode<synchronous>, transform_indices = @transform_2, window_bounds = array<i64: 1, 1>}, {transform_indices = @transform_3, window_bounds = array<i64: 64, 1>}]} {
    %c0 = arith.constant 0 : index
    %c0_0 = arith.constant 0 : index
    %0 = vector.load %arg1[%c0, %c0_0] : memref<64x32xf32, #tpu.memory_space<vmem>>, vector<64x32xf32>
    %c0_1 = arith.constant 0 : index
    %c0_2 = arith.constant 0 : index
    %1 = vector.load %arg2[%c0_1, %c0_2] : memref<1x32xf32, #tpu.memory_space<vmem>>, vector<1x32xf32>
    %2 = vector.broadcast %1 : vector<1x32xf32> to vector<64x32xf32>
    %3 = arith.mulf %0, %2 : vector<64x32xf32>
    %cst = arith.constant dense<0.000000e+00> : vector<64xf32>
    %4 = vector.multi_reduction <add>, %3, %cst [1] : vector<64x32xf32> to vector<64xf32>
    %5 = vector.shape_cast %4 : vector<64xf32> to vector<64x1xf32>
    %c0_3 = arith.constant 0 : index
    %c0_4 = arith.constant 0 : index
    %6 = vector.load %arg3[%c0_3, %c0_4] : memref<1x1xf32, #tpu.memory_space<vmem>>, vector<1x1xf32>
    %7 = vector.broadcast %6 : vector<1x1xf32> to vector<64x1xf32>
    %8 = arith.addf %5, %7 : vector<64x1xf32>
    %9 = arith.negf %8 : vector<64x1xf32>
    %10 = math.exp %9 : vector<64x1xf32>
    %cst_5 = arith.constant 1.000000e+00 : f32
    %11 = vector.broadcast %cst_5 : f32 to vector<64x1xf32>
    %12 = arith.addf %11, %10 : vector<64x1xf32>
    %13 = arith.divf %11, %12 : vector<64x1xf32>
    %c0_6 = arith.constant 0 : index
    %c0_7 = arith.constant 0 : index
    %14 = vector.load %arg4[%c0_6, %c0_7] : memref<64x1xf32, #tpu.memory_space<vmem>>, vector<64x1xf32>
    tpu.vector_store %arg4[%c0_6, %c0_7], %13 {strides = array<i32>} : memref<64x1xf32, #tpu.memory_space<vmem>>, vector<64x1xf32>,
    return
  }
  func.func @transform_0(%arg0: i32) -> (i32, i32) {
    %c0_i32 = arith.constant 0 : i32
    %c0_i32_0 = arith.constant 0 : i32
    return %arg0, %c0_i32 : i32, i32
  }
  func.func @transform_1(%arg0: i32) -> (i32, i32) {
    %c0_i32 = arith.constant 0 : i32
    %c0_i32_0 = arith.constant 0 : i32
    %c0_i32_1 = arith.constant 0 : i32
    return %c0_i32, %c0_i32_0 : i32, i32
  }
  func.func @transform_2(%arg0: i32) -> (i32, i32) {
    %c0_i32 = arith.constant 0 : i32
    %c0_i32_0 = arith.constant 0 : i32
    %c0_i32_1 = arith.constant 0 : i32
    return %c0_i32, %c0_i32_0 : i32, i32
  }
  func.func @transform_3(%arg0: i32) -> (i32, i32) {
    %c0_i32 = arith.constant 0 : i32
    %c0_i32_0 = arith.constant 0 : i32
    return %arg0, %c0_i32 : i32, i32
  }
}

</mosaic_0001>

<llo_original>
// kernel: _lambda_.24
$region0: #{_lambda_.24}
  #allocation0 [shape = 'u32[]', space=smem, size = 0x4, offset = 0x4, fixed_abs, tag = 'smem constant byte address 0x4 - core index']
  #allocation1 [shape = 'u32[72,128]{1,0:T(1,128)}', space=vmem, size = 0x9000, scoped, tag = 'internal scratch']
  %s0 = inlined_call_operand.vmem [shape: f32[128,32], index: 0, kind: input, shape index: {}]
  %s1 = inlined_call_operand.vmem [shape: f32[32,32], index: 1, kind: input, shape index: {}]
  %s2 = inlined_call_operand.vmem [shape: f32[1,32], index: 2, kind: input, shape index: {}]
  %s3 = inlined_call_operand.vmem [shape: f32[128,32], index: 3, kind: output, shape index: {}]
  %s4 = sld [smem:[#allocation0]]
  $region45: #{_lambda_.24} parent=0
    _
  %s6 = ssub.s32 1, %s4
  %s7 = scalar_select 0, %s6, %s4
  loop: start=0, step=1, limit=4
  $region2: #{_lambda_.24} parent=0 // loop_pre_header
    _
  $region3: #{_lambda_.24} parent=0 // loop_header
    %s9 = sphi 0, %s13
    %p10 = scmp.ge.s32.totalorder %s9, 4
    %s19 = sphi 0, %s21
    %s22 = sphi 0, %s19
    %s23 = sphi 0, %s22
    %s39 = sphi 0, %s23
    %s43 = sphi 0, %s43
    %s45 = sphi 0, %s43
    %s46 = sphi 0, %s45
    %s60 = sphi 0, %s46
    %s64 = sphi 0, %s64
    %s66 = sphi 0, %s64
    %s67 = sphi 0, %s66
    %s81 = sphi 0, %s67
    %s87 = sphi 0, %s89
    %s90 = sphi 0, %s87
    %s91 = sphi 0, %s90
    %s107 = sphi 0, %s91
  $region4: #{_lambda_.24} parent=0 // loop_header_branch
    %12 = sbr.rel (%p10) target = $region8
  $region5: #{_lambda_.24} parent=0 // loop_body
    %s14 = ssub.s32 %s9, 1
    %s15 = ssub.s32 %s9, 2
    %s16 = sadd.s32 %s9, 1
    %s17 = ssub.s32 %s9, %s16
    %p18 = scmp.eq.s32.totalorder %s17, 0
    %s20 = sadd.s32 %s19, 1
    %s21 = scalar_select %p18, %s19, %s20
    %p24 = pneg %p18
    %p25 = scmp.eq.s32.totalorder %s9, 1
    %p26 = por %p24, %p25
    %p27 = scmp.ne.s32.totalorder %s19, %s22
    %p28 = scmp.eq.s32.totalorder %s9, 0
    %p29 = por %p27, %p28
    %p30 = scmp.ne.s32.totalorder %s19, %s22
    %p31 = scmp.eq.s32.totalorder %s14, 1
    %p32 = por %p30, %p31
    %p33 = scmp.ne.s32.totalorder %s22, %s23
    %p34 = scmp.eq.s32.totalorder %s14, 0
    %p35 = por %p33, %p34
    %p36 = scmp.ne.s32.totalorder %s22, %s23
    %p37 = scmp.eq.s32.totalorder %s15, 1
    %p38 = por %p36, %p37
    %p40 = scmp.ne.s32.totalorder %s23, %s39
    %p41 = scmp.eq.s32.totalorder %s15, 0
    %p42 = por %p40, %p41
    %s44 = sadd.s32 %s43, 1
    %p47 = scmp.eq.s32.totalorder %s9, 1
    %p48 = scmp.ne.s32.totalorder %s43, %s45
    %p49 = scmp.eq.s32.totalorder %s9, 0
    %p50 = por %p48, %p49
    %p51 = scmp.ne.s32.totalorder %s43, %s45
    %p52 = scmp.eq.s32.totalorder %s14, 1
    %p53 = por %p51, %p52
    %p54 = scmp.ne.s32.totalorder %s45, %s46
    %p55 = scmp.eq.s32.totalorder %s14, 0
    %p56 = por %p54, %p55
    %p57 = scmp.ne.s32.totalorder %s45, %s46
    %p58 = scmp.eq.s32.totalorder %s15, 1
    %p59 = por %p57, %p58
    %p61 = scmp.ne.s32.totalorder %s46, %s60
    %p62 = scmp.eq.s32.totalorder %s15, 0
    %p63 = por %p61, %p62
    %s65 = sadd.s32 %s64, 1
    %p68 = scmp.eq.s32.totalorder %s9, 1
    %p69 = scmp.ne.s32.totalorder %s64, %s66
    %p70 = scmp.eq.s32.totalorder %s9, 0
    %p71 = por %p69, %p70
    %p72 = scmp.ne.s32.totalorder %s64, %s66
    %p73 = scmp.eq.s32.totalorder %s14, 1
    %p74 = por %p72, %p73
    %p75 = scmp.ne.s32.totalorder %s66, %s67
    %p76 = scmp.eq.s32.totalorder %s14, 0
    %p77 = por %p75, %p76
    %p78 = scmp.ne.s32.totalorder %s66, %s67
    %p79 = scmp.eq.s32.totalorder %s15, 1
    %p80 = por %p78, %p79
    %p82 = scmp.ne.s32.totalorder %s67, %s81
    %p83 = scmp.eq.s32.totalorder %s15, 0
    %p84 = por %p82, %p83
    %s85 = ssub.s32 %s9, %s16
    %p86 = scmp.eq.s32.totalorder %s85, 0
    %s88 = sadd.s32 %s87, 1
    %s89 = scalar_select %p86, %s87, %s88
    %p92 = pneg %p86
    %p93 = scmp.eq.s32.totalorder %s9, 1
    %p94 = por %p92, %p93
    %p95 = scmp.ne.s32.totalorder %s87, %s90
    %p96 = scmp.eq.s32.totalorder %s9, 0
    %p97 = por %p95, %p96
    %p98 = scmp.ne.s32.totalorder %s87, %s90
    %p99 = scmp.eq.s32.totalorder %s14, 1
    %p100 = por %p98, %p99
    %p101 = scmp.ne.s32.totalorder %s90, %s91
    %p102 = scmp.eq.s32.totalorder %s14, 0
    %p103 = por %p101, %p102
    %p104 = scmp.ne.s32.totalorder %s90, %s91
    %p105 = scmp.eq.s32.totalorder %s15, 1
    %p106 = por %p104, %p105
    %p108 = scmp.ne.s32.totalorder %s91, %s107
    %p109 = scmp.eq.s32.totalorder %s15, 0
    %p110 = por %p108, %p109
    %p111 = scmp.le.s32.totalorder 1, %s9
    %p112 = scmp.lt.s32.totalorder %s9, 3
    %p113 = pnand %p111, %p112
    %p114 = pneg %p113
    // Predicated region
    $region9: #{_lambda_.24} parent=5 // pred_check
      _
    $region10: #{_lambda_.24} parent=5 // pred_check_branch
      %116 = sbr.rel (%p113) target = $region12
    $region11: #{_lambda_.24} parent=5 // pred_region
      %s117 = ssub.s32 %s9, 1
      // Predicated region
      $region13: #{_lambda_.24} parent=11 // pred_check
        %p118 = pneg %p56
      $region14: #{_lambda_.24} parent=11 // pred_check_branch
        %120 = sbr.rel (%p118) target = $region16
      $region15: #{_lambda_.24} parent=11 // pred_region
        _
      $region16: #{_lambda_.24} parent=11 // pred_fallthru
        _
      // Predicated region
      $region17: #{_lambda_.24} parent=11 // pred_check
        %p121 = pneg %p77
      $region18: #{_lambda_.24} parent=11 // pred_check_branch
        %123 = sbr.rel (%p121) target = $region20
      $region19: #{_lambda_.24} parent=11 // pred_region
        _
      $region20: #{_lambda_.24} parent=11 // pred_fallthru
        _
    $region12: #{_lambda_.24} parent=5 // pred_fallthru
      _
    %p124 = scmp.lt.s32.totalorder %s9, 2
    // Predicated region
    $region21: #{_lambda_.24} parent=5 // pred_check
      %p125 = pneg %p124
    $region22: #{_lambda_.24} parent=5 // pred_check_branch
      %127 = sbr.rel (%p125) target = $region24
    $region23: #{_lambda_.24} parent=5 // pred_region
      // Predicated region
      $region25: #{_lambda_.24} parent=23 // pred_check
        %p128 = pneg %p29
      $region26: #{_lambda_.24} parent=23 // pred_check_branch
        %130 = sbr.rel (%p128) target = $region28
      $region27: #{_lambda_.24} parent=23 // pred_region
        %s131 = smul.u32 8, %s9
        %p132 = scmp.lt.s32.totalorder %s131, 15
        %s133 = scalar_select %p132, %s131, 15
        %s134 = smul.addr %s133, 8
        %s135 = scalar_lea.vmem %s0, %s134
        %s136 = smul.u32 8, %s9
      $region28: #{_lambda_.24} parent=23 // pred_fallthru
        _
    $region24: #{_lambda_.24} parent=5 // pred_fallthru
      _
    %p137 = scmp.le.s32.totalorder 1, %s9
    %p138 = scmp.lt.s32.totalorder %s9, 3
    %p139 = pnand %p137, %p138
    %p140 = pneg %p139
    // Predicated region
    $region29: #{_lambda_.24} parent=5 // pred_check
      _
    $region30: #{_lambda_.24} parent=5 // pred_check_branch
      %142 = sbr.rel (%p139) target = $region32
    $region31: #{_lambda_.24} parent=5 // pred_region
      %s143 = ssub.s32 %s9, 1
      %s144 = smul.u32 8, %s14
      %p145 = scmp.lt.s32.totalorder %s144, 15
      %s146 = scalar_select %p145, %s144, 15
      %s147 = smul.addr %s146, 8
      %s148 = scalar_lea.vmem %s0, %s147
      %p149 = pneg %p35
      %p150 = pneg %p32
      %p151 = pneg %p56
      %p152 = pneg %p53
      %p153 = pneg %p77
      %p154 = pneg %p74
      %p155 = pneg %p103
      %p156 = pneg %p100
      %s157 = smul.u32 8, %s14
      %p158 = scmp.lt.s32.totalorder %s157, 15
      %s159 = scalar_select %p158, %s157, 15
      %s160 = smul.addr %s159, 8
      %s161 = scalar_lea.vmem %s3, %s160
      %s162 = smul.u32 8, %s14
      %p163 = scmp.lt.s32.totalorder %s162, 15
      %s164 = scalar_select %p163, %s162, 15
      %s165 = smul.addr %s164, 8
      %s166 = scalar_lea.vmem %s0, %s165
      %s167 = smul.u32 8, %s14
      %s168 = smul.u32 8, %s14
      %p169 = scmp.lt.s32.totalorder %s168, 15
      %s170 = scalar_select %p169, %s168, 15
      %s171 = smul.addr %s170, 8
      %s172 = scalar_lea.vmem %s3, %s171
      %s173 = smul.u32 8, %s14
      %v174 = vld [vmem:[%s166] sm:$0xff]
      %v175 = vld [vmem:[%s166 + $0x8] sm:$0xff]
      %v176 = vld [vmem:[%s166 + $0x10] sm:$0xff]
      %v177 = vld [vmem:[%s166 + $0x18] sm:$0xff]
      %v178 = vld [vmem:[%s166 + $0x20] sm:$0xff]
      %v179 = vld [vmem:[%s166 + $0x28] sm:$0xff]
      %v180 = vld [vmem:[%s166 + $0x30] sm:$0xff]
      %v181 = vld [vmem:[%s166 + $0x38] sm:$0xff]
      %v182 = vld [vmem:[%s1] sm:$0xff]
      %v183 = vld [vmem:[%s1 + $0x8] sm:$0xff]
      %v184 = vld [vmem:[%s1 + $0x10] sm:$0xff]
      %v185 = vld [vmem:[%s1 + $0x18] sm:$0xff]
      %v186 = vld [vmem:[%s2] sm:$0x1]
      %v188 = vperm.slane %v186, 0
      %vm190 = vcmask 261120
      %v192 = vsel %vm190, %v174, 0
      %v195 = vsel %vm190, %v175, 0
      %v198 = vsel %vm190, %v176, 0
      %v201 = vsel %vm190, %v177, 0
      %v204 = vsel %vm190, %v178, 0
      %v207 = vsel %vm190, %v179, 0
      %v210 = vsel %vm190, %v180, 0
      %v213 = vsel %vm190, %v181, 0
      %215 = vmatpush.msra.mxu0 0.0
      %216 = vmatpush.msra.mxu0 0.0
      %217 = vmatpush.msra.mxu0 0.0
      %218 = vmatpush.msra.mxu0 0.0
      %219 = vmatpush.msra.mxu0 0.0
      %220 = vmatpush.msra.mxu0 0.0
      %221 = vmatpush.msra.mxu0 0.0
      %222 = vmatpush.msra.mxu0 0.0
      %223 = vmatpush.msra.mxu0 0.0
      %224 = vmatpush.msra.mxu0 0.0
      %225 = vmatpush.msra.mxu0 0.0
      %226 = vmatpush.msra.mxu0 0.0
      %227 = vmatpush.msra.mxu0 %v185
      %228 = vmatpush.msra.mxu0 %v184
      %229 = vmatpush.msra.mxu0 %v183
      %230 = vmatpush.msra.mxu0 %v182
      %231 = vmatmul.f32.gmra.mxu0 %v192
      %v232 = vpop.f32.mrf.mxu0
      %v233 = vadd.f32 %v188, %v232
      %234 = vmatmul.f32.gmra.mxu0 %v195
      %v235 = vpop.f32.mrf.mxu0
      %v236 = vadd.f32 %v188, %v235
      %237 = vmatmul.f32.gmra.mxu0 %v198
      %v238 = vpop.f32.mrf.mxu0
      %v239 = vadd.f32 %v188, %v238
      %240 = vmatmul.f32.gmra.mxu0 %v201
      %v241 = vpop.f32.mrf.mxu0
      %v242 = vadd.f32 %v188, %v241
      %243 = vmatmul.f32.gmra.mxu0 %v204
      %v244 = vpop.f32.mrf.mxu0
      %v245 = vadd.f32 %v188, %v244
      %246 = vmatmul.f32.gmra.mxu0 %v207
      %v247 = vpop.f32.mrf.mxu0
      %v248 = vadd.f32 %v188, %v247
      %249 = vmatmul.f32.gmra.mxu0 %v210
      %v250 = vpop.f32.mrf.mxu0
      %v251 = vadd.f32 %v188, %v250
      %252 = vmatmul.f32.gmra.mxu0 %v213
      %v253 = vpop.f32.mrf.mxu0
      %v254 = vadd.f32 %v188, %v253
      %255 = vdwg.mxu0
      %256 = vst.msk [vmem:[%s172] sm:$0xff] %vm190, %v233
      %257 = vst.msk [vmem:[%s172 + $0x8] sm:$0xff] %vm190, %v236
      %258 = vst.msk [vmem:[%s172 + $0x10] sm:$0xff] %vm190, %v239
      %259 = vst.msk [vmem:[%s172 + $0x18] sm:$0xff] %vm190, %v242
      %260 = vst.msk [vmem:[%s172 + $0x20] sm:$0xff] %vm190, %v245
      %261 = vst.msk [vmem:[%s172 + $0x28] sm:$0xff] %vm190, %v248
      %262 = vst.msk [vmem:[%s172 + $0x30] sm:$0xff] %vm190, %v251
      %263 = vst.msk [vmem:[%s172 + $0x38] sm:$0xff] %vm190, %v254
      %s264 = smul.u32 8, %s14
      %p265 = scmp.lt.s32.totalorder %s264, 15
      %s266 = scalar_select %p265, %s264, 15
      %s267 = smul.addr %s266, 8
      %s268 = scalar_lea.vmem %s3, %s267
      // Predicated region
      $region33: #{_lambda_.24} parent=31 // pred_check
        %p269 = pneg %p100
      $region34: #{_lambda_.24} parent=31 // pred_check_branch
        %271 = sbr.rel (%p269) target = $region36
      $region35: #{_lambda_.24} parent=31 // pred_region
        %s272 = smul.u32 8, %s14
      $region36: #{_lambda_.24} parent=31 // pred_fallthru
        _
    $region32: #{_lambda_.24} parent=5 // pred_fallthru
      _
    %p273 = scmp.le.s32.totalorder 2, %s9
    // Predicated region
    $region37: #{_lambda_.24} parent=5 // pred_check
      %p274 = pneg %p273
    $region38: #{_lambda_.24} parent=5 // pred_check_branch
      %276 = sbr.rel (%p274) target = $region40
    $region39: #{_lambda_.24} parent=5 // pred_region
      %s277 = ssub.s32 %s9, 2
      // Predicated region
      $region41: #{_lambda_.24} parent=39 // pred_check
        %p278 = pneg %p106
      $region42: #{_lambda_.24} parent=39 // pred_check_branch
        %280 = sbr.rel (%p278) target = $region44
      $region43: #{_lambda_.24} parent=39 // pred_region
        %s281 = smul.u32 8, %s15
        %p282 = scmp.lt.s32.totalorder %s281, 15
        %s283 = scalar_select %p282, %s281, 15
        %s284 = smul.addr %s283, 8
        %s285 = scalar_lea.vmem %s3, %s284
      $region44: #{_lambda_.24} parent=39 // pred_fallthru
        _
    $region40: #{_lambda_.24} parent=5 // pred_fallthru
      _
  $region6: #{_lambda_.24} parent=0 // loop_footer
    %s13 = sadd.s32 1, %s9
  $region7: #{_lambda_.24} parent=0 // loop_footer_branch
    %8 = sbr.rel target = $region3
  $region8: #{_lambda_.24} parent=0 // loop_exit
    _

// kernel: _lambda_.22
$region0: #{_lambda_.22}
  #allocation0 [shape = 'u32[]', space=smem, size = 0x4, offset = 0x4, fixed_abs, tag = 'smem constant byte address 0x4 - core index']
  #allocation1 [shape = 'u32[72,128]{1,0:T(1,128)}', space=vmem, size = 0x9000, scoped, tag = 'internal scratch']
  %s0 = inlined_call_operand.vmem [shape: f32[128,8], index: 0, kind: input, shape index: {}]
  %s1 = inlined_call_operand.vmem [shape: f32[8,32], index: 1, kind: input, shape index: {}]
  %s2 = inlined_call_operand.vmem [shape: f32[1,32], index: 2, kind: input, shape index: {}]
  %s3 = inlined_call_operand.vmem [shape: f32[128,32], index: 3, kind: output, shape index: {}]
  %s4 = sld [smem:[#allocation0]]
  $region45: #{_lambda_.22} parent=0
    _
  %s6 = ssub.s32 1, %s4
  %s7 = scalar_select 0, %s6, %s4
  loop: start=0, step=1, limit=4
  $region2: #{_lambda_.22} parent=0 // loop_pre_header
    _
  $region3: #{_lambda_.22} parent=0 // loop_header
    %s9 = sphi 0, %s13
    %p10 = scmp.ge.s32.totalorder %s9, 4
    %s19 = sphi 0, %s21
    %s22 = sphi 0, %s19
    %s23 = sphi 0, %s22
    %s39 = sphi 0, %s23
    %s43 = sphi 0, %s43
    %s45 = sphi 0, %s43
    %s46 = sphi 0, %s45
    %s60 = sphi 0, %s46
    %s64 = sphi 0, %s64
    %s66 = sphi 0, %s64
    %s67 = sphi 0, %s66
    %s81 = sphi 0, %s67
    %s87 = sphi 0, %s89
    %s90 = sphi 0, %s87
    %s91 = sphi 0, %s90
    %s107 = sphi 0, %s91
  $region4: #{_lambda_.22} parent=0 // loop_header_branch
    %12 = sbr.rel (%p10) target = $region8
  $region5: #{_lambda_.22} parent=0 // loop_body
    %s14 = ssub.s32 %s9, 1
    %s15 = ssub.s32 %s9, 2
    %s16 = sadd.s32 %s9, 1
    %s17 = ssub.s32 %s9, %s16
    %p18 = scmp.eq.s32.totalorder %s17, 0
    %s20 = sadd.s32 %s19, 1
    %s21 = scalar_select %p18, %s19, %s20
    %p24 = pneg %p18
    %p25 = scmp.eq.s32.totalorder %s9, 1
    %p26 = por %p24, %p25
    %p27 = scmp.ne.s32.totalorder %s19, %s22
    %p28 = scmp.eq.s32.totalorder %s9, 0
    %p29 = por %p27, %p28
    %p30 = scmp.ne.s32.totalorder %s19, %s22
    %p31 = scmp.eq.s32.totalorder %s14, 1
    %p32 = por %p30, %p31
    %p33 = scmp.ne.s32.totalorder %s22, %s23
    %p34 = scmp.eq.s32.totalorder %s14, 0
    %p35 = por %p33, %p34
    %p36 = scmp.ne.s32.totalorder %s22, %s23
    %p37 = scmp.eq.s32.totalorder %s15, 1
    %p38 = por %p36, %p37
    %p40 = scmp.ne.s32.totalorder %s23, %s39
    %p41 = scmp.eq.s32.totalorder %s15, 0
    %p42 = por %p40, %p41
    %s44 = sadd.s32 %s43, 1
    %p47 = scmp.eq.s32.totalorder %s9, 1
    %p48 = scmp.ne.s32.totalorder %s43, %s45
    %p49 = scmp.eq.s32.totalorder %s9, 0
    %p50 = por %p48, %p49
    %p51 = scmp.ne.s32.totalorder %s43, %s45
    %p52 = scmp.eq.s32.totalorder %s14, 1
    %p53 = por %p51, %p52
    %p54 = scmp.ne.s32.totalorder %s45, %s46
    %p55 = scmp.eq.s32.totalorder %s14, 0
    %p56 = por %p54, %p55
    %p57 = scmp.ne.s32.totalorder %s45, %s46
    %p58 = scmp.eq.s32.totalorder %s15, 1
    %p59 = por %p57, %p58
    %p61 = scmp.ne.s32.totalorder %s46, %s60
    %p62 = scmp.eq.s32.totalorder %s15, 0
    %p63 = por %p61, %p62
    %s65 = sadd.s32 %s64, 1
    %p68 = scmp.eq.s32.totalorder %s9, 1
    %p69 = scmp.ne.s32.totalorder %s64, %s66
    %p70 = scmp.eq.s32.totalorder %s9, 0
    %p71 = por %p69, %p70
    %p72 = scmp.ne.s32.totalorder %s64, %s66
    %p73 = scmp.eq.s32.totalorder %s14, 1
    %p74 = por %p72, %p73
    %p75 = scmp.ne.s32.totalorder %s66, %s67
    %p76 = scmp.eq.s32.totalorder %s14, 0
    %p77 = por %p75, %p76
    %p78 = scmp.ne.s32.totalorder %s66, %s67
    %p79 = scmp.eq.s32.totalorder %s15, 1
    %p80 = por %p78, %p79
    %p82 = scmp.ne.s32.totalorder %s67, %s81
    %p83 = scmp.eq.s32.totalorder %s15, 0
    %p84 = por %p82, %p83
    %s85 = ssub.s32 %s9, %s16
    %p86 = scmp.eq.s32.totalorder %s85, 0
    %s88 = sadd.s32 %s87, 1
    %s89 = scalar_select %p86, %s87, %s88
    %p92 = pneg %p86
    %p93 = scmp.eq.s32.totalorder %s9, 1
    %p94 = por %p92, %p93
    %p95 = scmp.ne.s32.totalorder %s87, %s90
    %p96 = scmp.eq.s32.totalorder %s9, 0
    %p97 = por %p95, %p96
    %p98 = scmp.ne.s32.totalorder %s87, %s90
    %p99 = scmp.eq.s32.totalorder %s14, 1
    %p100 = por %p98, %p99
    %p101 = scmp.ne.s32.totalorder %s90, %s91
    %p102 = scmp.eq.s32.totalorder %s14, 0
    %p103 = por %p101, %p102
    %p104 = scmp.ne.s32.totalorder %s90, %s91
    %p105 = scmp.eq.s32.totalorder %s15, 1
    %p106 = por %p104, %p105
    %p108 = scmp.ne.s32.totalorder %s91, %s107
    %p109 = scmp.eq.s32.totalorder %s15, 0
    %p110 = por %p108, %p109
    %p111 = scmp.le.s32.totalorder 1, %s9
    %p112 = scmp.lt.s32.totalorder %s9, 3
    %p113 = pnand %p111, %p112
    %p114 = pneg %p113
    // Predicated region
    $region9: #{_lambda_.22} parent=5 // pred_check
      _
    $region10: #{_lambda_.22} parent=5 // pred_check_branch
      %116 = sbr.rel (%p113) target = $region12
    $region11: #{_lambda_.22} parent=5 // pred_region
      %s117 = ssub.s32 %s9, 1
      // Predicated region
      $region13: #{_lambda_.22} parent=11 // pred_check
        %p118 = pneg %p56
      $region14: #{_lambda_.22} parent=11 // pred_check_branch
        %120 = sbr.rel (%p118) target = $region16
      $region15: #{_lambda_.22} parent=11 // pred_region
        _
      $region16: #{_lambda_.22} parent=11 // pred_fallthru
        _
      // Predicated region
      $region17: #{_lambda_.22} parent=11 // pred_check
        %p121 = pneg %p77
      $region18: #{_lambda_.22} parent=11 // pred_check_branch
        %123 = sbr.rel (%p121) target = $region20
      $region19: #{_lambda_.22} parent=11 // pred_region
        _
      $region20: #{_lambda_.22} parent=11 // pred_fallthru
        _
    $region12: #{_lambda_.22} parent=5 // pred_fallthru
      _
    %p124 = scmp.lt.s32.totalorder %s9, 2
    // Predicated region
    $region21: #{_lambda_.22} parent=5 // pred_check
      %p125 = pneg %p124
    $region22: #{_lambda_.22} parent=5 // pred_check_branch
      %127 = sbr.rel (%p125) target = $region24
    $region23: #{_lambda_.22} parent=5 // pred_region
      // Predicated region
      $region25: #{_lambda_.22} parent=23 // pred_check
        %p128 = pneg %p29
      $region26: #{_lambda_.22} parent=23 // pred_check_branch
        %130 = sbr.rel (%p128) target = $region28
      $region27: #{_lambda_.22} parent=23 // pred_region
        %s131 = smul.u32 8, %s9
        %p132 = scmp.lt.s32.totalorder %s131, 15
        %s133 = scalar_select %p132, %s131, 15
        %s134 = smul.addr %s133, 8
        %s135 = scalar_lea.vmem %s0, %s134
        %s136 = smul.u32 8, %s9
      $region28: #{_lambda_.22} parent=23 // pred_fallthru
        _
    $region24: #{_lambda_.22} parent=5 // pred_fallthru
      _
    %p137 = scmp.le.s32.totalorder 1, %s9
    %p138 = scmp.lt.s32.totalorder %s9, 3
    %p139 = pnand %p137, %p138
    %p140 = pneg %p139
    // Predicated region
    $region29: #{_lambda_.22} parent=5 // pred_check
      _
    $region30: #{_lambda_.22} parent=5 // pred_check_branch
      %142 = sbr.rel (%p139) target = $region32
    $region31: #{_lambda_.22} parent=5 // pred_region
      %s143 = ssub.s32 %s9, 1
      %s144 = smul.u32 8, %s14
      %p145 = scmp.lt.s32.totalorder %s144, 15
      %s146 = scalar_select %p145, %s144, 15
      %s147 = smul.addr %s146, 8
      %s148 = scalar_lea.vmem %s0, %s147
      %p149 = pneg %p35
      %p150 = pneg %p32
      %p151 = pneg %p56
      %p152 = pneg %p53
      %p153 = pneg %p77
      %p154 = pneg %p74
      %p155 = pneg %p103
      %p156 = pneg %p100
      %s157 = smul.u32 8, %s14
      %p158 = scmp.lt.s32.totalorder %s157, 15
      %s159 = scalar_select %p158, %s157, 15
      %s160 = smul.addr %s159, 8
      %s161 = scalar_lea.vmem %s3, %s160
      %s162 = smul.u32 8, %s14
      %p163 = scmp.lt.s32.totalorder %s162, 15
      %s164 = scalar_select %p163, %s162, 15
      %s165 = smul.addr %s164, 8
      %s166 = scalar_lea.vmem %s0, %s165
      %s167 = smul.u32 8, %s14
      %s168 = smul.u32 8, %s14
      %p169 = scmp.lt.s32.totalorder %s168, 15
      %s170 = scalar_select %p169, %s168, 15
      %s171 = smul.addr %s170, 8
      %s172 = scalar_lea.vmem %s3, %s171
      %s173 = smul.u32 8, %s14
      %v174 = vld [vmem:[%s166] sm:$0xff]
      %v175 = vld [vmem:[%s166 + $0x8] sm:$0xff]
      %v176 = vld [vmem:[%s166 + $0x10] sm:$0xff]
      %v177 = vld [vmem:[%s166 + $0x18] sm:$0xff]
      %v178 = vld [vmem:[%s166 + $0x20] sm:$0xff]
      %v179 = vld [vmem:[%s166 + $0x28] sm:$0xff]
      %v180 = vld [vmem:[%s166 + $0x30] sm:$0xff]
      %v181 = vld [vmem:[%s166 + $0x38] sm:$0xff]
      %v182 = vld [vmem:[%s1] sm:$0xff]
      %v183 = vld [vmem:[%s2] sm:$0x1]
      %v185 = vperm.slane %v183, 0
      %vm187 = vcmask 64512
      %v189 = vsel %vm187, %v174, 0
      %v192 = vsel %vm187, %v175, 0
      %v195 = vsel %vm187, %v176, 0
      %v198 = vsel %vm187, %v177, 0
      %v201 = vsel %vm187, %v178, 0
      %v204 = vsel %vm187, %v179, 0
      %v207 = vsel %vm187, %v180, 0
      %v210 = vsel %vm187, %v181, 0
      %212 = vmatpush.msra.mxu0 0.0
      %213 = vmatpush.msra.mxu0 0.0
      %214 = vmatpush.msra.mxu0 0.0
      %215 = vmatpush.msra.mxu0 0.0
      %216 = vmatpush.msra.mxu0 0.0
      %217 = vmatpush.msra.mxu0 0.0
      %218 = vmatpush.msra.mxu0 0.0
      %219 = vmatpush.msra.mxu0 0.0
      %220 = vmatpush.msra.mxu0 0.0
      %221 = vmatpush.msra.mxu0 0.0
      %222 = vmatpush.msra.mxu0 0.0
      %223 = vmatpush.msra.mxu0 0.0
      %224 = vmatpush.msra.mxu0 0.0
      %225 = vmatpush.msra.mxu0 0.0
      %226 = vmatpush.msra.mxu0 0.0
      %227 = vmatpush.msra.mxu0 %v182
      %228 = vmatmul.f32.gmra.mxu0 %v189
      %v229 = vpop.f32.mrf.mxu0
      %v230 = vadd.f32 %v185, %v229
      %231 = vmatmul.f32.gmra.mxu0 %v192
      %v232 = vpop.f32.mrf.mxu0
      %v233 = vadd.f32 %v185, %v232
      %234 = vmatmul.f32.gmra.mxu0 %v195
      %v235 = vpop.f32.mrf.mxu0
      %v236 = vadd.f32 %v185, %v235
      %237 = vmatmul.f32.gmra.mxu0 %v198
      %v238 = vpop.f32.mrf.mxu0
      %v239 = vadd.f32 %v185, %v238
      %240 = vmatmul.f32.gmra.mxu0 %v201
      %v241 = vpop.f32.mrf.mxu0
      %v242 = vadd.f32 %v185, %v241
      %243 = vmatmul.f32.gmra.mxu0 %v204
      %v244 = vpop.f32.mrf.mxu0
      %v245 = vadd.f32 %v185, %v244
      %246 = vmatmul.f32.gmra.mxu0 %v207
      %v247 = vpop.f32.mrf.mxu0
      %v248 = vadd.f32 %v185, %v247
      %249 = vmatmul.f32.gmra.mxu0 %v210
      %v250 = vpop.f32.mrf.mxu0
      %v251 = vadd.f32 %v185, %v250
      %252 = vdwg.mxu0
      %vm253 = vcmask 261120
      %254 = vst.msk [vmem:[%s172] sm:$0xff] %vm253, %v230
      %255 = vst.msk [vmem:[%s172 + $0x8] sm:$0xff] %vm253, %v233
      %256 = vst.msk [vmem:[%s172 + $0x10] sm:$0xff] %vm253, %v236
      %257 = vst.msk [vmem:[%s172 + $0x18] sm:$0xff] %vm253, %v239
      %258 = vst.msk [vmem:[%s172 + $0x20] sm:$0xff] %vm253, %v242
      %259 = vst.msk [vmem:[%s172 + $0x28] sm:$0xff] %vm253, %v245
      %260 = vst.msk [vmem:[%s172 + $0x30] sm:$0xff] %vm253, %v248
      %261 = vst.msk [vmem:[%s172 + $0x38] sm:$0xff] %vm253, %v251
      %s262 = smul.u32 8, %s14
      %p263 = scmp.lt.s32.totalorder %s262, 15
      %s264 = scalar_select %p263, %s262, 15
      %s265 = smul.addr %s264, 8
      %s266 = scalar_lea.vmem %s3, %s265
      // Predicated region
      $region33: #{_lambda_.22} parent=31 // pred_check
        %p267 = pneg %p100
      $region34: #{_lambda_.22} parent=31 // pred_check_branch
        %269 = sbr.rel (%p267) target = $region36
      $region35: #{_lambda_.22} parent=31 // pred_region
        %s270 = smul.u32 8, %s14
      $region36: #{_lambda_.22} parent=31 // pred_fallthru
        _
    $region32: #{_lambda_.22} parent=5 // pred_fallthru
      _
    %p271 = scmp.le.s32.totalorder 2, %s9
    // Predicated region
    $region37: #{_lambda_.22} parent=5 // pred_check
      %p272 = pneg %p271
    $region38: #{_lambda_.22} parent=5 // pred_check_branch
      %274 = sbr.rel (%p272) target = $region40
    $region39: #{_lambda_.22} parent=5 // pred_region
      %s275 = ssub.s32 %s9, 2
      // Predicated region
      $region41: #{_lambda_.22} parent=39 // pred_check
        %p276 = pneg %p106
      $region42: #{_lambda_.22} parent=39 // pred_check_branch
        %278 = sbr.rel (%p276) target = $region44
      $region43: #{_lambda_.22} parent=39 // pred_region
        %s279 = smul.u32 8, %s15
        %p280 = scmp.lt.s32.totalorder %s279, 15
        %s281 = scalar_select %p280, %s279, 15
        %s282 = smul.addr %s281, 8
        %s283 = scalar_lea.vmem %s3, %s282
      $region44: #{_lambda_.22} parent=39 // pred_fallthru
        _
    $region40: #{_lambda_.22} parent=5 // pred_fallthru
      _
  $region6: #{_lambda_.22} parent=0 // loop_footer
    %s13 = sadd.s32 1, %s9
  $region7: #{_lambda_.22} parent=0 // loop_footer_branch
    %8 = sbr.rel target = $region3
  $region8: #{_lambda_.22} parent=0 // loop_exit
    _

// kernel: _lambda_.25
$region0: #{_lambda_.25}
  #allocation0 [shape = 'u32[]', space=smem, size = 0x4, offset = 0x4, fixed_abs, tag = 'smem constant byte address 0x4 - core index']
  #allocation1 [shape = 'u32[72,128]{1,0:T(1,128)}', space=vmem, size = 0x9000, scoped, tag = 'internal scratch']
  %s0 = inlined_call_operand.vmem [shape: f32[128,32], index: 0, kind: input, shape index: {}]
  %s1 = inlined_call_operand.vmem [shape: f32[32,64], index: 1, kind: input, shape index: {}]
  %s2 = inlined_call_operand.vmem [shape: f32[1,64], index: 2, kind: input, shape index: {}]
  %s3 = inlined_call_operand.vmem [shape: f32[128,64], index: 3, kind: output, shape index: {}]
  %s4 = sld [smem:[#allocation0]]
  $region45: #{_lambda_.25} parent=0
    _
  %s6 = ssub.s32 1, %s4
  %s7 = scalar_select 0, %s6, %s4
  loop: start=0, step=1, limit=4
  $region2: #{_lambda_.25} parent=0 // loop_pre_header
    _
  $region3: #{_lambda_.25} parent=0 // loop_header
    %s9 = sphi 0, %s13
    %p10 = scmp.ge.s32.totalorder %s9, 4
    %s19 = sphi 0, %s21
    %s22 = sphi 0, %s19
    %s23 = sphi 0, %s22
    %s39 = sphi 0, %s23
    %s43 = sphi 0, %s43
    %s45 = sphi 0, %s43
    %s46 = sphi 0, %s45
    %s60 = sphi 0, %s46
    %s64 = sphi 0, %s64
    %s66 = sphi 0, %s64
    %s67 = sphi 0, %s66
    %s81 = sphi 0, %s67
    %s87 = sphi 0, %s89
    %s90 = sphi 0, %s87
    %s91 = sphi 0, %s90
    %s107 = sphi 0, %s91
  $region4: #{_lambda_.25} parent=0 // loop_header_branch
    %12 = sbr.rel (%p10) target = $region8
  $region5: #{_lambda_.25} parent=0 // loop_body
    %s14 = ssub.s32 %s9, 1
    %s15 = ssub.s32 %s9, 2
    %s16 = sadd.s32 %s9, 1
    %s17 = ssub.s32 %s9, %s16
    %p18 = scmp.eq.s32.totalorder %s17, 0
    %s20 = sadd.s32 %s19, 1
    %s21 = scalar_select %p18, %s19, %s20
    %p24 = pneg %p18
    %p25 = scmp.eq.s32.totalorder %s9, 1
    %p26 = por %p24, %p25
    %p27 = scmp.ne.s32.totalorder %s19, %s22
    %p28 = scmp.eq.s32.totalorder %s9, 0
    %p29 = por %p27, %p28
    %p30 = scmp.ne.s32.totalorder %s19, %s22
    %p31 = scmp.eq.s32.totalorder %s14, 1
    %p32 = por %p30, %p31
    %p33 = scmp.ne.s32.totalorder %s22, %s23
    %p34 = scmp.eq.s32.totalorder %s14, 0
    %p35 = por %p33, %p34
    %p36 = scmp.ne.s32.totalorder %s22, %s23
    %p37 = scmp.eq.s32.totalorder %s15, 1
    %p38 = por %p36, %p37
    %p40 = scmp.ne.s32.totalorder %s23, %s39
    %p41 = scmp.eq.s32.totalorder %s15, 0
    %p42 = por %p40, %p41
    %s44 = sadd.s32 %s43, 1
    %p47 = scmp.eq.s32.totalorder %s9, 1
    %p48 = scmp.ne.s32.totalorder %s43, %s45
    %p49 = scmp.eq.s32.totalorder %s9, 0
    %p50 = por %p48, %p49
    %p51 = scmp.ne.s32.totalorder %s43, %s45
    %p52 = scmp.eq.s32.totalorder %s14, 1
    %p53 = por %p51, %p52
    %p54 = scmp.ne.s32.totalorder %s45, %s46
    %p55 = scmp.eq.s32.totalorder %s14, 0
    %p56 = por %p54, %p55
    %p57 = scmp.ne.s32.totalorder %s45, %s46
    %p58 = scmp.eq.s32.totalorder %s15, 1
    %p59 = por %p57, %p58
    %p61 = scmp.ne.s32.totalorder %s46, %s60
    %p62 = scmp.eq.s32.totalorder %s15, 0
    %p63 = por %p61, %p62
    %s65 = sadd.s32 %s64, 1
    %p68 = scmp.eq.s32.totalorder %s9, 1
    %p69 = scmp.ne.s32.totalorder %s64, %s66
    %p70 = scmp.eq.s32.totalorder %s9, 0
    %p71 = por %p69, %p70
    %p72 = scmp.ne.s32.totalorder %s64, %s66
    %p73 = scmp.eq.s32.totalorder %s14, 1
    %p74 = por %p72, %p73
    %p75 = scmp.ne.s32.totalorder %s66, %s67
    %p76 = scmp.eq.s32.totalorder %s14, 0
    %p77 = por %p75, %p76
    %p78 = scmp.ne.s32.totalorder %s66, %s67
    %p79 = scmp.eq.s32.totalorder %s15, 1
    %p80 = por %p78, %p79
    %p82 = scmp.ne.s32.totalorder %s67, %s81
    %p83 = scmp.eq.s32.totalorder %s15, 0
    %p84 = por %p82, %p83
    %s85 = ssub.s32 %s9, %s16
    %p86 = scmp.eq.s32.totalorder %s85, 0
    %s88 = sadd.s32 %s87, 1
    %s89 = scalar_select %p86, %s87, %s88
    %p92 = pneg %p86
    %p93 = scmp.eq.s32.totalorder %s9, 1
    %p94 = por %p92, %p93
    %p95 = scmp.ne.s32.totalorder %s87, %s90
    %p96 = scmp.eq.s32.totalorder %s9, 0
    %p97 = por %p95, %p96
    %p98 = scmp.ne.s32.totalorder %s87, %s90
    %p99 = scmp.eq.s32.totalorder %s14, 1
    %p100 = por %p98, %p99
    %p101 = scmp.ne.s32.totalorder %s90, %s91
    %p102 = scmp.eq.s32.totalorder %s14, 0
    %p103 = por %p101, %p102
    %p104 = scmp.ne.s32.totalorder %s90, %s91
    %p105 = scmp.eq.s32.totalorder %s15, 1
    %p106 = por %p104, %p105
    %p108 = scmp.ne.s32.totalorder %s91, %s107
    %p109 = scmp.eq.s32.totalorder %s15, 0
    %p110 = por %p108, %p109
    %p111 = scmp.le.s32.totalorder 1, %s9
    %p112 = scmp.lt.s32.totalorder %s9, 3
    %p113 = pnand %p111, %p112
    %p114 = pneg %p113
    // Predicated region
    $region9: #{_lambda_.25} parent=5 // pred_check
      _
    $region10: #{_lambda_.25} parent=5 // pred_check_branch
      %116 = sbr.rel (%p113) target = $region12
    $region11: #{_lambda_.25} parent=5 // pred_region
      %s117 = ssub.s32 %s9, 1
      // Predicated region
      $region13: #{_lambda_.25} parent=11 // pred_check
        %p118 = pneg %p56
      $region14: #{_lambda_.25} parent=11 // pred_check_branch
        %120 = sbr.rel (%p118) target = $region16
      $region15: #{_lambda_.25} parent=11 // pred_region
        _
      $region16: #{_lambda_.25} parent=11 // pred_fallthru
        _
      // Predicated region
      $region17: #{_lambda_.25} parent=11 // pred_check
        %p121 = pneg %p77
      $region18: #{_lambda_.25} parent=11 // pred_check_branch
        %123 = sbr.rel (%p121) target = $region20
      $region19: #{_lambda_.25} parent=11 // pred_region
        _
      $region20: #{_lambda_.25} parent=11 // pred_fallthru
        _
    $region12: #{_lambda_.25} parent=5 // pred_fallthru
      _
    %p124 = scmp.lt.s32.totalorder %s9, 2
    // Predicated region
    $region21: #{_lambda_.25} parent=5 // pred_check
      %p125 = pneg %p124
    $region22: #{_lambda_.25} parent=5 // pred_check_branch
      %127 = sbr.rel (%p125) target = $region24
    $region23: #{_lambda_.25} parent=5 // pred_region
      // Predicated region
      $region25: #{_lambda_.25} parent=23 // pred_check
        %p128 = pneg %p29
      $region26: #{_lambda_.25} parent=23 // pred_check_branch
        %130 = sbr.rel (%p128) target = $region28
      $region27: #{_lambda_.25} parent=23 // pred_region
        %s131 = smul.u32 8, %s9
        %p132 = scmp.lt.s32.totalorder %s131, 15
        %s133 = scalar_select %p132, %s131, 15
        %s134 = smul.addr %s133, 8
        %s135 = scalar_lea.vmem %s0, %s134
        %s136 = smul.u32 8, %s9
      $region28: #{_lambda_.25} parent=23 // pred_fallthru
        _
    $region24: #{_lambda_.25} parent=5 // pred_fallthru
      _
    %p137 = scmp.le.s32.totalorder 1, %s9
    %p138 = scmp.lt.s32.totalorder %s9, 3
    %p139 = pnand %p137, %p138
    %p140 = pneg %p139
    // Predicated region
    $region29: #{_lambda_.25} parent=5 // pred_check
      _
    $region30: #{_lambda_.25} parent=5 // pred_check_branch
      %142 = sbr.rel (%p139) target = $region32
    $region31: #{_lambda_.25} parent=5 // pred_region
      %s143 = ssub.s32 %s9, 1
      %s144 = smul.u32 8, %s14
      %p145 = scmp.lt.s32.totalorder %s144, 15
      %s146 = scalar_select %p145, %s144, 15
      %s147 = smul.addr %s146, 8
      %s148 = scalar_lea.vmem %s0, %s147
      %p149 = pneg %p35
      %p150 = pneg %p32
      %p151 = pneg %p56
      %p152 = pneg %p53
      %p153 = pneg %p77
      %p154 = pneg %p74
      %p155 = pneg %p103
      %p156 = pneg %p100
      %s157 = smul.u32 8, %s14
      %p158 = scmp.lt.s32.totalorder %s157, 15
      %s159 = scalar_select %p158, %s157, 15
      %s160 = smul.addr %s159, 8
      %s161 = scalar_lea.vmem %s3, %s160
      %s162 = smul.u32 8, %s14
      %p163 = scmp.lt.s32.totalorder %s162, 15
      %s164 = scalar_select %p163, %s162, 15
      %s165 = smul.addr %s164, 8
      %s166 = scalar_lea.vmem %s0, %s165
      %s167 = smul.u32 8, %s14
      %s168 = smul.u32 8, %s14
      %p169 = scmp.lt.s32.totalorder %s168, 15
      %s170 = scalar_select %p169, %s168, 15
      %s171 = smul.addr %s170, 8
      %s172 = scalar_lea.vmem %s3, %s171
      %s173 = smul.u32 8, %s14
      %v174 = vld [vmem:[%s166] sm:$0xff]
      %v175 = vld [vmem:[%s166 + $0x8] sm:$0xff]
      %v176 = vld [vmem:[%s166 + $0x10] sm:$0xff]
      %v177 = vld [vmem:[%s166 + $0x18] sm:$0xff]
      %v178 = vld [vmem:[%s166 + $0x20] sm:$0xff]
      %v179 = vld [vmem:[%s166 + $0x28] sm:$0xff]
      %v180 = vld [vmem:[%s166 + $0x30] sm:$0xff]
      %v181 = vld [vmem:[%s166 + $0x38] sm:$0xff]
      %v182 = vld [vmem:[%s1] sm:$0xff]
      %v183 = vld [vmem:[%s1 + $0x8] sm:$0xff]
      %v184 = vld [vmem:[%s1 + $0x10] sm:$0xff]
      %v185 = vld [vmem:[%s1 + $0x18] sm:$0xff]
      %v186 = vld [vmem:[%s2] sm:$0x1]
      %v188 = vperm.slane %v186, 0
      %vm190 = vcmask 261120
      %v192 = vsel %vm190, %v174, 0
      %v195 = vsel %vm190, %v175, 0
      %v198 = vsel %vm190, %v176, 0
      %v201 = vsel %vm190, %v177, 0
      %v204 = vsel %vm190, %v178, 0
      %v207 = vsel %vm190, %v179, 0
      %v210 = vsel %vm190, %v180, 0
      %v213 = vsel %vm190, %v181, 0
      %215 = vmatpush.msra.mxu0 0.0
      %216 = vmatpush.msra.mxu0 0.0
      %217 = vmatpush.msra.mxu0 0.0
      %218 = vmatpush.msra.mxu0 0.0
      %219 = vmatpush.msra.mxu0 0.0
      %220 = vmatpush.msra.mxu0 0.0
      %221 = vmatpush.msra.mxu0 0.0
      %222 = vmatpush.msra.mxu0 0.0
      %223 = vmatpush.msra.mxu0 0.0
      %224 = vmatpush.msra.mxu0 0.0
      %225 = vmatpush.msra.mxu0 0.0
      %226 = vmatpush.msra.mxu0 0.0
      %227 = vmatpush.msra.mxu0 %v185
      %228 = vmatpush.msra.mxu0 %v184
      %229 = vmatpush.msra.mxu0 %v183
      %230 = vmatpush.msra.mxu0 %v182
      %231 = vmatmul.f32.gmra.mxu0 %v192
      %v232 = vpop.f32.mrf.mxu0
      %v233 = vadd.f32 %v188, %v232
      %234 = vmatmul.f32.gmra.mxu0 %v195
      %v235 = vpop.f32.mrf.mxu0
      %v236 = vadd.f32 %v188, %v235
      %237 = vmatmul.f32.gmra.mxu0 %v198
      %v238 = vpop.f32.mrf.mxu0
      %v239 = vadd.f32 %v188, %v238
      %240 = vmatmul.f32.gmra.mxu0 %v201
      %v241 = vpop.f32.mrf.mxu0
      %v242 = vadd.f32 %v188, %v241
      %243 = vmatmul.f32.gmra.mxu0 %v204
      %v244 = vpop.f32.mrf.mxu0
      %v245 = vadd.f32 %v188, %v244
      %246 = vmatmul.f32.gmra.mxu0 %v207
      %v247 = vpop.f32.mrf.mxu0
      %v248 = vadd.f32 %v188, %v247
      %249 = vmatmul.f32.gmra.mxu0 %v210
      %v250 = vpop.f32.mrf.mxu0
      %v251 = vadd.f32 %v188, %v250
      %252 = vmatmul.f32.gmra.mxu0 %v213
      %v253 = vpop.f32.mrf.mxu0
      %v254 = vadd.f32 %v188, %v253
      %255 = vdwg.mxu0
      %vm256 = vcmask 523264
      %257 = vst.msk [vmem:[%s172] sm:$0xff] %vm256, %v233
      %258 = vst.msk [vmem:[%s172 + $0x8] sm:$0xff] %vm256, %v236
      %259 = vst.msk [vmem:[%s172 + $0x10] sm:$0xff] %vm256, %v239
      %260 = vst.msk [vmem:[%s172 + $0x18] sm:$0xff] %vm256, %v242
      %261 = vst.msk [vmem:[%s172 + $0x20] sm:$0xff] %vm256, %v245
      %262 = vst.msk [vmem:[%s172 + $0x28] sm:$0xff] %vm256, %v248
      %263 = vst.msk [vmem:[%s172 + $0x30] sm:$0xff] %vm256, %v251
      %264 = vst.msk [vmem:[%s172 + $0x38] sm:$0xff] %vm256, %v254
      %s265 = smul.u32 8, %s14
      %p266 = scmp.lt.s32.totalorder %s265, 15
      %s267 = scalar_select %p266, %s265, 15
      %s268 = smul.addr %s267, 8
      %s269 = scalar_lea.vmem %s3, %s268
      // Predicated region
      $region33: #{_lambda_.25} parent=31 // pred_check
        %p270 = pneg %p100
      $region34: #{_lambda_.25} parent=31 // pred_check_branch
        %272 = sbr.rel (%p270) target = $region36
      $region35: #{_lambda_.25} parent=31 // pred_region
        %s273 = smul.u32 8, %s14
      $region36: #{_lambda_.25} parent=31 // pred_fallthru
        _
    $region32: #{_lambda_.25} parent=5 // pred_fallthru
      _
    %p274 = scmp.le.s32.totalorder 2, %s9
    // Predicated region
    $region37: #{_lambda_.25} parent=5 // pred_check
      %p275 = pneg %p274
    $region38: #{_lambda_.25} parent=5 // pred_check_branch
      %277 = sbr.rel (%p275) target = $region40
    $region39: #{_lambda_.25} parent=5 // pred_region
      %s278 = ssub.s32 %s9, 2
      // Predicated region
      $region41: #{_lambda_.25} parent=39 // pred_check
        %p279 = pneg %p106
      $region42: #{_lambda_.25} parent=39 // pred_check_branch
        %281 = sbr.rel (%p279) target = $region44
      $region43: #{_lambda_.25} parent=39 // pred_region
        %s282 = smul.u32 8, %s15
        %p283 = scmp.lt.s32.totalorder %s282, 15
        %s284 = scalar_select %p283, %s282, 15
        %s285 = smul.addr %s284, 8
        %s286 = scalar_lea.vmem %s3, %s285
      $region44: #{_lambda_.25} parent=39 // pred_fallthru
        _
    $region40: #{_lambda_.25} parent=5 // pred_fallthru
      _
  $region6: #{_lambda_.25} parent=0 // loop_footer
    %s13 = sadd.s32 1, %s9
  $region7: #{_lambda_.25} parent=0 // loop_footer_branch
    %8 = sbr.rel target = $region3
  $region8: #{_lambda_.25} parent=0 // loop_exit
    _

// kernel: _lambda_.26
$region0: #{_lambda_.26}
  #allocation0 [shape = 'u32[]', space=smem, size = 0x4, offset = 0x4, fixed_abs, tag = 'smem constant byte address 0x4 - core index']
  #allocation1 [shape = 'u32[72,128]{1,0:T(1,128)}', space=vmem, size = 0x9000, scoped, tag = 'internal scratch']
  %s0 = inlined_call_operand.vmem [shape: f32[128,32], index: 0, kind: input, shape index: {}]
  %s1 = inlined_call_operand.vmem [shape: f32[128,64], index: 1, kind: input, shape index: {}]
  %s2 = inlined_call_operand.vmem [shape: f32[128,32], index: 2, kind: output, shape index: {}]
  %s3 = sld [smem:[#allocation0]]
  $region41: #{_lambda_.26} parent=0
    _
  %s5 = ssub.s32 1, %s3
  %s6 = scalar_select 0, %s5, %s3
  loop: start=0, step=1, limit=4
  $region2: #{_lambda_.26} parent=0 // loop_pre_header
    _
  $region3: #{_lambda_.26} parent=0 // loop_header
    %s8 = sphi 0, %s12
    %p9 = scmp.ge.s32.totalorder %s8, 4
    %s18 = sphi 0, %s20
    %s21 = sphi 0, %s18
    %s22 = sphi 0, %s21
    %s38 = sphi 0, %s22
    %s44 = sphi 0, %s46
    %s47 = sphi 0, %s44
    %s48 = sphi 0, %s47
    %s64 = sphi 0, %s48
    %s70 = sphi 0, %s72
    %s73 = sphi 0, %s70
    %s74 = sphi 0, %s73
    %s90 = sphi 0, %s74
  $region4: #{_lambda_.26} parent=0 // loop_header_branch
    %11 = sbr.rel (%p9) target = $region8
  $region5: #{_lambda_.26} parent=0 // loop_body
    %s13 = ssub.s32 %s8, 1
    %s14 = ssub.s32 %s8, 2
    %s15 = sadd.s32 %s8, 1
    %s16 = ssub.s32 %s8, %s15
    %p17 = scmp.eq.s32.totalorder %s16, 0
    %s19 = sadd.s32 %s18, 1
    %s20 = scalar_select %p17, %s18, %s19
    %p23 = pneg %p17
    %p24 = scmp.eq.s32.totalorder %s8, 1
    %p25 = por %p23, %p24
    %p26 = scmp.ne.s32.totalorder %s18, %s21
    %p27 = scmp.eq.s32.totalorder %s8, 0
    %p28 = por %p26, %p27
    %p29 = scmp.ne.s32.totalorder %s18, %s21
    %p30 = scmp.eq.s32.totalorder %s13, 1
    %p31 = por %p29, %p30
    %p32 = scmp.ne.s32.totalorder %s21, %s22
    %p33 = scmp.eq.s32.totalorder %s13, 0
    %p34 = por %p32, %p33
    %p35 = scmp.ne.s32.totalorder %s21, %s22
    %p36 = scmp.eq.s32.totalorder %s14, 1
    %p37 = por %p35, %p36
    %p39 = scmp.ne.s32.totalorder %s22, %s38
    %p40 = scmp.eq.s32.totalorder %s14, 0
    %p41 = por %p39, %p40
    %s42 = ssub.s32 %s8, %s15
    %p43 = scmp.eq.s32.totalorder %s42, 0
    %s45 = sadd.s32 %s44, 1
    %s46 = scalar_select %p43, %s44, %s45
    %p49 = pneg %p43
    %p50 = scmp.eq.s32.totalorder %s8, 1
    %p51 = por %p49, %p50
    %p52 = scmp.ne.s32.totalorder %s44, %s47
    %p53 = scmp.eq.s32.totalorder %s8, 0
    %p54 = por %p52, %p53
    %p55 = scmp.ne.s32.totalorder %s44, %s47
    %p56 = scmp.eq.s32.totalorder %s13, 1
    %p57 = por %p55, %p56
    %p58 = scmp.ne.s32.totalorder %s47, %s48
    %p59 = scmp.eq.s32.totalorder %s13, 0
    %p60 = por %p58, %p59
    %p61 = scmp.ne.s32.totalorder %s47, %s48
    %p62 = scmp.eq.s32.totalorder %s14, 1
    %p63 = por %p61, %p62
    %p65 = scmp.ne.s32.totalorder %s48, %s64
    %p66 = scmp.eq.s32.totalorder %s14, 0
    %p67 = por %p65, %p66
    %s68 = ssub.s32 %s8, %s15
    %p69 = scmp.eq.s32.totalorder %s68, 0
    %s71 = sadd.s32 %s70, 1
    %s72 = scalar_select %p69, %s70, %s71
    %p75 = pneg %p69
    %p76 = scmp.eq.s32.totalorder %s8, 1
    %p77 = por %p75, %p76
    %p78 = scmp.ne.s32.totalorder %s70, %s73
    %p79 = scmp.eq.s32.totalorder %s8, 0
    %p80 = por %p78, %p79
    %p81 = scmp.ne.s32.totalorder %s70, %s73
    %p82 = scmp.eq.s32.totalorder %s13, 1
    %p83 = por %p81, %p82
    %p84 = scmp.ne.s32.totalorder %s73, %s74
    %p85 = scmp.eq.s32.totalorder %s13, 0
    %p86 = por %p84, %p85
    %p87 = scmp.ne.s32.totalorder %s73, %s74
    %p88 = scmp.eq.s32.totalorder %s14, 1
    %p89 = por %p87, %p88
    %p91 = scmp.ne.s32.totalorder %s74, %s90
    %p92 = scmp.eq.s32.totalorder %s14, 0
    %p93 = por %p91, %p92
    %p94 = scmp.le.s32.totalorder 1, %s8
    %p95 = scmp.lt.s32.totalorder %s8, 3
    %p96 = pnand %p94, %p95
    %p97 = pneg %p96
    // Predicated region
    $region9: #{_lambda_.26} parent=5 // pred_check
      _
    $region10: #{_lambda_.26} parent=5 // pred_check_branch
      %99 = sbr.rel (%p96) target = $region12
    $region11: #{_lambda_.26} parent=5 // pred_region
      %s100 = ssub.s32 %s8, 1
    $region12: #{_lambda_.26} parent=5 // pred_fallthru
      _
    %p101 = scmp.lt.s32.totalorder %s8, 2
    // Predicated region
    $region13: #{_lambda_.26} parent=5 // pred_check
      %p102 = pneg %p101
    $region14: #{_lambda_.26} parent=5 // pred_check_branch
      %104 = sbr.rel (%p102) target = $region16
    $region15: #{_lambda_.26} parent=5 // pred_region
      // Predicated region
      $region17: #{_lambda_.26} parent=15 // pred_check
        %p105 = pneg %p28
      $region18: #{_lambda_.26} parent=15 // pred_check_branch
        %107 = sbr.rel (%p105) target = $region20
      $region19: #{_lambda_.26} parent=15 // pred_region
        %s108 = smul.u32 8, %s8
        %p109 = scmp.lt.s32.totalorder %s108, 15
        %s110 = scalar_select %p109, %s108, 15
        %s111 = smul.addr %s110, 8
        %s112 = scalar_lea.vmem %s0, %s111
        %s113 = smul.u32 8, %s8
      $region20: #{_lambda_.26} parent=15 // pred_fallthru
        _
      // Predicated region
      $region21: #{_lambda_.26} parent=15 // pred_check
        %p114 = pneg %p54
      $region22: #{_lambda_.26} parent=15 // pred_check_branch
        %116 = sbr.rel (%p114) target = $region24
      $region23: #{_lambda_.26} parent=15 // pred_region
        %s117 = smul.u32 8, %s8
        %p118 = scmp.lt.s32.totalorder %s117, 15
        %s119 = scalar_select %p118, %s117, 15
        %s120 = smul.addr %s119, 8
        %s121 = scalar_lea.vmem %s1, %s120
        %s122 = smul.u32 8, %s8
      $region24: #{_lambda_.26} parent=15 // pred_fallthru
        _
    $region16: #{_lambda_.26} parent=5 // pred_fallthru
      _
    %p123 = scmp.le.s32.totalorder 1, %s8
    %p124 = scmp.lt.s32.totalorder %s8, 3
    %p125 = pnand %p123, %p124
    %p126 = pneg %p125
    // Predicated region
    $region25: #{_lambda_.26} parent=5 // pred_check
      _
    $region26: #{_lambda_.26} parent=5 // pred_check_branch
      %128 = sbr.rel (%p125) target = $region28
    $region27: #{_lambda_.26} parent=5 // pred_region
      %s129 = ssub.s32 %s8, 1
      %s130 = smul.u32 8, %s13
      %p131 = scmp.lt.s32.totalorder %s130, 15
      %s132 = scalar_select %p131, %s130, 15
      %s133 = smul.addr %s132, 8
      %s134 = scalar_lea.vmem %s0, %s133
      %p135 = pneg %p34
      %p136 = pneg %p31
      %s137 = smul.u32 8, %s13
      %p138 = scmp.lt.s32.totalorder %s137, 15
      %s139 = scalar_select %p138, %s137, 15
      %s140 = smul.addr %s139, 8
      %s141 = scalar_lea.vmem %s1, %s140
      %p142 = pneg %p60
      %p143 = pneg %p57
      %p144 = pneg %p86
      %p145 = pneg %p83
      %s146 = smul.u32 8, %s13
      %p147 = scmp.lt.s32.totalorder %s146, 15
      %s148 = scalar_select %p147, %s146, 15
      %s149 = smul.addr %s148, 8
      %s150 = scalar_lea.vmem %s2, %s149
      %s151 = smul.u32 8, %s13
      %p152 = scmp.lt.s32.totalorder %s151, 15
      %s153 = scalar_select %p152, %s151, 15
      %s154 = smul.addr %s153, 8
      %s155 = scalar_lea.vmem %s0, %s154
      %s156 = smul.u32 8, %s13
      %s157 = smul.u32 8, %s13
      %p158 = scmp.lt.s32.totalorder %s157, 15
      %s159 = scalar_select %p158, %s157, 15
      %s160 = smul.addr %s159, 8
      %s161 = scalar_lea.vmem %s1, %s160
      %s162 = smul.u32 8, %s13
      %s163 = smul.u32 8, %s13
      %p164 = scmp.lt.s32.totalorder %s163, 15
      %s165 = scalar_select %p164, %s163, 15
      %s166 = smul.addr %s165, 8
      %s167 = scalar_lea.vmem %s2, %s166
      %s168 = smul.u32 8, %s13
      %v169 = vld [vmem:[%s155] sm:$0xff]
      %v170 = vld [vmem:[%s155 + $0x8] sm:$0xff]
      %v171 = vld [vmem:[%s155 + $0x10] sm:$0xff]
      %v172 = vld [vmem:[%s155 + $0x18] sm:$0xff]
      %v173 = vld [vmem:[%s155 + $0x20] sm:$0xff]
      %v174 = vld [vmem:[%s155 + $0x28] sm:$0xff]
      %v175 = vld [vmem:[%s155 + $0x30] sm:$0xff]
      %v176 = vld [vmem:[%s155 + $0x38] sm:$0xff]
      %v177 = vld [vmem:[%s161] sm:$0xff]
      %v178 = vld [vmem:[%s161 + $0x8] sm:$0xff]
      %v179 = vld [vmem:[%s161 + $0x10] sm:$0xff]
      %v180 = vld [vmem:[%s161 + $0x18] sm:$0xff]
      %v181 = vld [vmem:[%s161 + $0x20] sm:$0xff]
      %v182 = vld [vmem:[%s161 + $0x28] sm:$0xff]
      %v183 = vld [vmem:[%s161 + $0x30] sm:$0xff]
      %v184 = vld [vmem:[%s161 + $0x38] sm:$0xff]
      %v185 = vmul.f32 %v169, 0.35355338
      %v186 = vmul.f32 %v170, 0.35355338
      %v187 = vmul.f32 %v171, 0.35355338
      %v188 = vmul.f32 %v172, 0.35355338
      %v189 = vmul.f32 %v173, 0.35355338
      %v190 = vmul.f32 %v174, 0.35355338
      %v191 = vmul.f32 %v175, 0.35355338
      %v192 = vmul.f32 %v176, 0.35355338
      %vm193 = vcmask 64512
      %v195 = vsel %vm193, %v185, 0
      %v198 = vsel %vm193, %v186, 0
      %v201 = vsel %vm193, %v187, 0
      %v204 = vsel %vm193, %v188, 0
      %v207 = vsel %vm193, %v189, 0
      %v210 = vsel %vm193, %v190, 0
      %v213 = vsel %vm193, %v191, 0
      %v216 = vsel %vm193, %v192, 0
      %v219 = vsel %vm193, %v177, 0
      %v222 = vsel %vm193, %v178, 0
      %v225 = vsel %vm193, %v179, 0
      %v228 = vsel %vm193, %v180, 0
      %v231 = vsel %vm193, %v181, 0
      %v234 = vsel %vm193, %v182, 0
      %v237 = vsel %vm193, %v183, 0
      %v240 = vsel %vm193, %v184, 0
      %242 = vmatpush.xpose.msra.mxu0 0.0
      %243 = vmatpush.xpose.msra.mxu0 0.0
      %244 = vmatpush.xpose.msra.mxu0 0.0
      %245 = vmatpush.xpose.msra.mxu0 0.0
      %246 = vmatpush.xpose.msra.mxu0 0.0
      %247 = vmatpush.xpose.msra.mxu0 0.0
      %248 = vmatpush.xpose.msra.mxu0 0.0
      %249 = vmatpush.xpose.msra.mxu0 0.0
      %250 = vmatpush.xpose.msra.mxu0 %v240
      %251 = vmatpush.xpose.msra.mxu0 %v237
      %252 = vmatpush.xpose.msra.mxu0 %v234
      %253 = vmatpush.xpose.msra.mxu0 %v231
      %254 = vmatpush.xpose.msra.mxu0 %v228
      %255 = vmatpush.xpose.msra.mxu0 %v225
      %256 = vmatpush.xpose.msra.mxu0 %v222
      %257 = vmatpush.xpose.msra.mxu0 %v219
      %258 = vmatmul.f32.gmra.mxu0 %v195
      %v259 = vpop.f32.mrf.mxu0
      %v260 = vadd.f32 0.0, %v259
      %261 = vmatmul.f32.gmra.mxu0 %v198
      %v262 = vpop.f32.mrf.mxu0
      %v263 = vadd.f32 0.0, %v262
      %264 = vmatmul.f32.gmra.mxu0 %v201
      %v265 = vpop.f32.mrf.mxu0
      %v266 = vadd.f32 0.0, %v265
      %267 = vmatmul.f32.gmra.mxu0 %v204
      %v268 = vpop.f32.mrf.mxu0
      %v269 = vadd.f32 0.0, %v268
      %270 = vmatmul.f32.gmra.mxu0 %v207
      %v271 = vpop.f32.mrf.mxu0
      %v272 = vadd.f32 0.0, %v271
      %273 = vmatmul.f32.gmra.mxu0 %v210
      %v274 = vpop.f32.mrf.mxu0
      %v275 = vadd.f32 0.0, %v274
      %276 = vmatmul.f32.gmra.mxu0 %v213
      %v277 = vpop.f32.mrf.mxu0
      %v278 = vadd.f32 0.0, %v277
      %279 = vmatmul.f32.gmra.mxu0 %v216
      %v280 = vpop.f32.mrf.mxu0
      %v281 = vadd.f32 0.0, %v280
      %282 = vdwg.mxu0
      %vm283 = vcmask 523264
      %v284 = vsel %vm283, %v260, -inf
      %285 = vmax.xlane.f32.xlu0 %v284
      %v286 = vpop.xlane.xlu0 %285
      %v287 = vsel %vm283, %v263, -inf
      %288 = vmax.xlane.f32.xlu0 %v287
      %v289 = vpop.xlane.xlu0 %288
      %v290 = vsel %vm283, %v266, -inf
      %291 = vmax.xlane.f32.xlu0 %v290
      %v292 = vpop.xlane.xlu0 %291
      %v293 = vsel %vm283, %v269, -inf
      %294 = vmax.xlane.f32.xlu0 %v293
      %v295 = vpop.xlane.xlu0 %294
      %v296 = vsel %vm283, %v272, -inf
      %297 = vmax.xlane.f32.xlu0 %v296
      %v298 = vpop.xlane.xlu0 %297
      %v299 = vsel %vm283, %v275, -inf
      %300 = vmax.xlane.f32.xlu0 %v299
      %v301 = vpop.xlane.xlu0 %300
      %v302 = vsel %vm283, %v278, -inf
      %303 = vmax.xlane.f32.xlu0 %v302
      %v304 = vpop.xlane.xlu0 %303
      %v305 = vsel %vm283, %v281, -inf
      %306 = vmax.xlane.f32.xlu0 %v305
      %v307 = vpop.xlane.xlu0 %306
      %v308 = vsub.f32 %v260, %v286
      %v309 = vsub.f32 %v263, %v289
      %v310 = vsub.f32 %v266, %v292
      %v311 = vsub.f32 %v269, %v295
      %v312 = vsub.f32 %v272, %v298
      %v313 = vsub.f32 %v275, %v301
      %v314 = vsub.f32 %v278, %v304
      %v315 = vsub.f32 %v281, %v307
      %v316 = vmul.f32 %v308, 1.442695
      %v317 = vpow.pop %v316
      %v318 = vmul.f32 %v309, 1.442695
      %v319 = vpow.pop %v318
      %v320 = vmul.f32 %v310, 1.442695
      %v321 = vpow.pop %v320
      %v322 = vmul.f32 %v311, 1.442695
      %v323 = vpow.pop %v322
      %v324 = vmul.f32 %v312, 1.442695
      %v325 = vpow.pop %v324
      %v326 = vmul.f32 %v313, 1.442695
      %v327 = vpow.pop %v326
      %v328 = vmul.f32 %v314, 1.442695
      %v329 = vpow.pop %v328
      %v330 = vmul.f32 %v315, 1.442695
      %v331 = vpow.pop %v330
      %v332 = vsel %vm283, %v317, 0.0
      %333 = vadd.xlane.f32.xlu0 %v332
      %v334 = vpop.xlane.xlu0 %333
      %v335 = vsel %vm283, %v319, 0.0
      %336 = vadd.xlane.f32.xlu0 %v335
      %v337 = vpop.xlane.xlu0 %336
      %v338 = vsel %vm283, %v321, 0.0
      %339 = vadd.xlane.f32.xlu0 %v338
      %v340 = vpop.xlane.xlu0 %339
      %v341 = vsel %vm283, %v323, 0.0
      %342 = vadd.xlane.f32.xlu0 %v341
      %v343 = vpop.xlane.xlu0 %342
      %v344 = vsel %vm283, %v325, 0.0
      %345 = vadd.xlane.f32.xlu0 %v344
      %v346 = vpop.xlane.xlu0 %345
      %v347 = vsel %vm283, %v327, 0.0
      %348 = vadd.xlane.f32.xlu0 %v347
      %v349 = vpop.xlane.xlu0 %348
      %v350 = vsel %vm283, %v329, 0.0
      %351 = vadd.xlane.f32.xlu0 %v350
      %v352 = vpop.xlane.xlu0 %351
      %v353 = vsel %vm283, %v331, 0.0
      %354 = vadd.xlane.f32.xlu0 %v353
      %v355 = vpop.xlane.xlu0 %354
      %v356 = vrcp.pop %v334
      %v357 = vrcp.pop %v337
      %v358 = vrcp.pop %v340
      %v359 = vrcp.pop %v343
      %v360 = vrcp.pop %v346
      %v361 = vrcp.pop %v349
      %v362 = vrcp.pop %v352
      %v363 = vrcp.pop %v355
      %v364 = vmul.f32 %v317, %v356
      %v365 = vmul.f32 %v319, %v357
      %v366 = vmul.f32 %v321, %v358
      %v367 = vmul.f32 %v323, %v359
      %v368 = vmul.f32 %v325, %v360
      %v369 = vmul.f32 %v327, %v361
      %v370 = vmul.f32 %v329, %v362
      %v371 = vmul.f32 %v331, %v363
      %372 = vrot.lane.b32.xlu0 %v177, 96
      %v373 = vpop.permute.xlu0 %372
      %374 = vrot.lane.b32.xlu0 %v178, 96
      %v375 = vpop.permute.xlu0 %374
      %376 = vrot.lane.b32.xlu0 %v179, 96
      %v377 = vpop.permute.xlu0 %376
      %378 = vrot.lane.b32.xlu0 %v180, 96
      %v379 = vpop.permute.xlu0 %378
      %380 = vrot.lane.b32.xlu0 %v181, 96
      %v381 = vpop.permute.xlu0 %380
      %382 = vrot.lane.b32.xlu0 %v182, 96
      %v383 = vpop.permute.xlu0 %382
      %384 = vrot.lane.b32.xlu0 %v183, 96
      %v385 = vpop.permute.xlu0 %384
      %386 = vrot.lane.b32.xlu0 %v184, 96
      %v387 = vpop.permute.xlu0 %386
      %v397 = vsel %vm283, %v364, 0
      %v400 = vsel %vm283, %v365, 0
      %v403 = vsel %vm283, %v366, 0
      %v406 = vsel %vm283, %v367, 0
      %v409 = vsel %vm283, %v368, 0
      %v412 = vsel %vm283, %v369, 0
      %v415 = vsel %vm283, %v370, 0
      %v418 = vsel %vm283, %v371, 0
      %420 = vmatpush.msra.mxu0 0.0
      %421 = vmatpush.msra.mxu0 0.0
      %422 = vmatpush.msra.mxu0 0.0
      %423 = vmatpush.msra.mxu0 0.0
      %424 = vmatpush.msra.mxu0 0.0
      %425 = vmatpush.msra.mxu0 0.0
      %426 = vmatpush.msra.mxu0 0.0
      %427 = vmatpush.msra.mxu0 0.0
      %428 = vmatpush.msra.mxu0 %v387
      %429 = vmatpush.msra.mxu0 %v385
      %430 = vmatpush.msra.mxu0 %v383
      %431 = vmatpush.msra.mxu0 %v381
      %432 = vmatpush.msra.mxu0 %v379
      %433 = vmatpush.msra.mxu0 %v377
      %434 = vmatpush.msra.mxu0 %v375
      %435 = vmatpush.msra.mxu0 %v373
      %436 = vmatmul.f32.gmra.mxu0 %v397
      %v437 = vpop.f32.mrf.mxu0
      %v438 = vadd.f32 0.0, %v437
      %439 = vmatmul.f32.gmra.mxu0 %v400
      %v440 = vpop.f32.mrf.mxu0
      %v441 = vadd.f32 0.0, %v440
      %442 = vmatmul.f32.gmra.mxu0 %v403
      %v443 = vpop.f32.mrf.mxu0
      %v444 = vadd.f32 0.0, %v443
      %445 = vmatmul.f32.gmra.mxu0 %v406
      %v446 = vpop.f32.mrf.mxu0
      %v447 = vadd.f32 0.0, %v446
      %448 = vmatmul.f32.gmra.mxu0 %v409
      %v449 = vpop.f32.mrf.mxu0
      %v450 = vadd.f32 0.0, %v449
      %451 = vmatmul.f32.gmra.mxu0 %v412
      %v452 = vpop.f32.mrf.mxu0
      %v453 = vadd.f32 0.0, %v452
      %454 = vmatmul.f32.gmra.mxu0 %v415
      %v455 = vpop.f32.mrf.mxu0
      %v456 = vadd.f32 0.0, %v455
      %457 = vmatmul.f32.gmra.mxu0 %v418
      %v458 = vpop.f32.mrf.mxu0
      %v459 = vadd.f32 0.0, %v458
      %460 = vdwg.mxu0
      %461 = vrot.lane.b32.xlu0 %v185, 120
      %v462 = vpop.permute.xlu0 %461
      %463 = vrot.lane.b32.xlu0 %v186, 120
      %v464 = vpop.permute.xlu0 %463
      %465 = vrot.lane.b32.xlu0 %v187, 120
      %v466 = vpop.permute.xlu0 %465
      %467 = vrot.lane.b32.xlu0 %v188, 120
      %v468 = vpop.permute.xlu0 %467
      %469 = vrot.lane.b32.xlu0 %v189, 120
      %v470 = vpop.permute.xlu0 %469
      %471 = vrot.lane.b32.xlu0 %v190, 120
      %v472 = vpop.permute.xlu0 %471
      %473 = vrot.lane.b32.xlu0 %v191, 120
      %v474 = vpop.permute.xlu0 %473
      %475 = vrot.lane.b32.xlu0 %v192, 120
      %v476 = vpop.permute.xlu0 %475
      %477 = vrot.lane.b32.xlu0 %v177, 120
      %v478 = vpop.permute.xlu0 %477
      %479 = vrot.lane.b32.xlu0 %v178, 120
      %v480 = vpop.permute.xlu0 %479
      %481 = vrot.lane.b32.xlu0 %v179, 120
      %v482 = vpop.permute.xlu0 %481
      %483 = vrot.lane.b32.xlu0 %v180, 120
      %v484 = vpop.permute.xlu0 %483
      %485 = vrot.lane.b32.xlu0 %v181, 120
      %v486 = vpop.permute.xlu0 %485
      %487 = vrot.lane.b32.xlu0 %v182, 120
      %v488 = vpop.permute.xlu0 %487
      %489 = vrot.lane.b32.xlu0 %v183, 120
      %v490 = vpop.permute.xlu0 %489
      %491 = vrot.lane.b32.xlu0 %v184, 120
      %v492 = vpop.permute.xlu0 %491
      %v493 = vsel %vm193, %v462, 0
      %v495 = vsel %vm193, %v464, 0
      %v497 = vsel %vm193, %v466, 0
      %v499 = vsel %vm193, %v468, 0
      %v501 = vsel %vm193, %v470, 0
      %v503 = vsel %vm193, %v472, 0
      %v505 = vsel %vm193, %v474, 0
      %v507 = vsel %vm193, %v476, 0
      %v509 = vsel %vm193, %v478, 0
      %v511 = vsel %vm193, %v480, 0
      %v513 = vsel %vm193, %v482, 0
      %v515 = vsel %vm193, %v484, 0
      %v517 = vsel %vm193, %v486, 0
      %v519 = vsel %vm193, %v488, 0
      %v521 = vsel %vm193, %v490, 0
      %v523 = vsel %vm193, %v492, 0
      %525 = vmatpush.xpose.msra.mxu0 0.0
      %526 = vmatpush.xpose.msra.mxu0 0.0
      %527 = vmatpush.xpose.msra.mxu0 0.0
      %528 = vmatpush.xpose.msra.mxu0 0.0
      %529 = vmatpush.xpose.msra.mxu0 0.0
      %530 = vmatpush.xpose.msra.mxu0 0.0
      %531 = vmatpush.xpose.msra.mxu0 0.0
      %532 = vmatpush.xpose.msra.mxu0 0.0
      %533 = vmatpush.xpose.msra.mxu0 %v523
      %534 = vmatpush.xpose.msra.mxu0 %v521
      %535 = vmatpush.xpose.msra.mxu0 %v519
      %536 = vmatpush.xpose.msra.mxu0 %v517
      %537 = vmatpush.xpose.msra.mxu0 %v515
      %538 = vmatpush.xpose.msra.mxu0 %v513
      %539 = vmatpush.xpose.msra.mxu0 %v511
      %540 = vmatpush.xpose.msra.mxu0 %v509
      %541 = vmatmul.f32.gmra.mxu0 %v493
      %v542 = vpop.f32.mrf.mxu0
      %v543 = vadd.f32 0.0, %v542
      %544 = vmatmul.f32.gmra.mxu0 %v495
      %v545 = vpop.f32.mrf.mxu0
      %v546 = vadd.f32 0.0, %v545
      %547 = vmatmul.f32.gmra.mxu0 %v497
      %v548 = vpop.f32.mrf.mxu0
      %v549 = vadd.f32 0.0, %v548
      %550 = vmatmul.f32.gmra.mxu0 %v499
      %v551 = vpop.f32.mrf.mxu0
      %v552 = vadd.f32 0.0, %v551
      %553 = vmatmul.f32.gmra.mxu0 %v501
      %v554 = vpop.f32.mrf.mxu0
      %v555 = vadd.f32 0.0, %v554
      %556 = vmatmul.f32.gmra.mxu0 %v503
      %v557 = vpop.f32.mrf.mxu0
      %v558 = vadd.f32 0.0, %v557
      %559 = vmatmul.f32.gmra.mxu0 %v505
      %v560 = vpop.f32.mrf.mxu0
      %v561 = vadd.f32 0.0, %v560
      %562 = vmatmul.f32.gmra.mxu0 %v507
      %v563 = vpop.f32.mrf.mxu0
      %v564 = vadd.f32 0.0, %v563
      %565 = vdwg.mxu0
      %v566 = vsel %vm283, %v543, -inf
      %567 = vmax.xlane.f32.xlu0 %v566
      %v568 = vpop.xlane.xlu0 %567
      %v569 = vsel %vm283, %v546, -inf
      %570 = vmax.xlane.f32.xlu0 %v569
      %v571 = vpop.xlane.xlu0 %570
      %v572 = vsel %vm283, %v549, -inf
      %573 = vmax.xlane.f32.xlu0 %v572
      %v574 = vpop.xlane.xlu0 %573
      %v575 = vsel %vm283, %v552, -inf
      %576 = vmax.xlane.f32.xlu0 %v575
      %v577 = vpop.xlane.xlu0 %576
      %v578 = vsel %vm283, %v555, -inf
      %579 = vmax.xlane.f32.xlu0 %v578
      %v580 = vpop.xlane.xlu0 %579
      %v581 = vsel %vm283, %v558, -inf
      %582 = vmax.xlane.f32.xlu0 %v581
      %v583 = vpop.xlane.xlu0 %582
      %v584 = vsel %vm283, %v561, -inf
      %585 = vmax.xlane.f32.xlu0 %v584
      %v586 = vpop.xlane.xlu0 %585
      %v587 = vsel %vm283, %v564, -inf
      %588 = vmax.xlane.f32.xlu0 %v587
      %v589 = vpop.xlane.xlu0 %588
      %v590 = vsub.f32 %v543, %v568
      %v591 = vsub.f32 %v546, %v571
      %v592 = vsub.f32 %v549, %v574
      %v593 = vsub.f32 %v552, %v577
      %v594 = vsub.f32 %v555, %v580
      %v595 = vsub.f32 %v558, %v583
      %v596 = vsub.f32 %v561, %v586
      %v597 = vsub.f32 %v564, %v589
      %v598 = vmul.f32 %v590, 1.442695
      %v599 = vpow.pop %v598
      %v600 = vmul.f32 %v591, 1.442695
      %v601 = vpow.pop %v600
      %v602 = vmul.f32 %v592, 1.442695
      %v603 = vpow.pop %v602
      %v604 = vmul.f32 %v593, 1.442695
      %v605 = vpow.pop %v604
      %v606 = vmul.f32 %v594, 1.442695
      %v607 = vpow.pop %v606
      %v608 = vmul.f32 %v595, 1.442695
      %v609 = vpow.pop %v608
      %v610 = vmul.f32 %v596, 1.442695
      %v611 = vpow.pop %v610
      %v612 = vmul.f32 %v597, 1.442695
      %v613 = vpow.pop %v612
      %v614 = vsel %vm283, %v599, 0.0
      %615 = vadd.xlane.f32.xlu0 %v614
      %v616 = vpop.xlane.xlu0 %615
      %v617 = vsel %vm283, %v601, 0.0
      %618 = vadd.xlane.f32.xlu0 %v617
      %v619 = vpop.xlane.xlu0 %618
      %v620 = vsel %vm283, %v603, 0.0
      %621 = vadd.xlane.f32.xlu0 %v620
      %v622 = vpop.xlane.xlu0 %621
      %v623 = vsel %vm283, %v605, 0.0
      %624 = vadd.xlane.f32.xlu0 %v623
      %v625 = vpop.xlane.xlu0 %624
      %v626 = vsel %vm283, %v607, 0.0
      %627 = vadd.xlane.f32.xlu0 %v626
      %v628 = vpop.xlane.xlu0 %627
      %v629 = vsel %vm283, %v609, 0.0
      %630 = vadd.xlane.f32.xlu0 %v629
      %v631 = vpop.xlane.xlu0 %630
      %v632 = vsel %vm283, %v611, 0.0
      %633 = vadd.xlane.f32.xlu0 %v632
      %v634 = vpop.xlane.xlu0 %633
      %v635 = vsel %vm283, %v613, 0.0
      %636 = vadd.xlane.f32.xlu0 %v635
      %v637 = vpop.xlane.xlu0 %636
      %v638 = vrcp.pop %v616
      %v639 = vrcp.pop %v619
      %v640 = vrcp.pop %v622
      %v641 = vrcp.pop %v625
      %v642 = vrcp.pop %v628
      %v643 = vrcp.pop %v631
      %v644 = vrcp.pop %v634
      %v645 = vrcp.pop %v637
      %v646 = vmul.f32 %v599, %v638
      %v647 = vmul.f32 %v601, %v639
      %v648 = vmul.f32 %v603, %v640
      %v649 = vmul.f32 %v605, %v641
      %v650 = vmul.f32 %v607, %v642
      %v651 = vmul.f32 %v609, %v643
      %v652 = vmul.f32 %v611, %v644
      %v653 = vmul.f32 %v613, %v645
      %654 = vrot.lane.b32.xlu0 %v177, 88
      %v655 = vpop.permute.xlu0 %654
      %656 = vrot.lane.b32.xlu0 %v178, 88
      %v657 = vpop.permute.xlu0 %656
      %658 = vrot.lane.b32.xlu0 %v179, 88
      %v659 = vpop.permute.xlu0 %658
      %660 = vrot.lane.b32.xlu0 %v180, 88
      %v661 = vpop.permute.xlu0 %660
      %662 = vrot.lane.b32.xlu0 %v181, 88
      %v663 = vpop.permute.xlu0 %662
      %664 = vrot.lane.b32.xlu0 %v182, 88
      %v665 = vpop.permute.xlu0 %664
      %666 = vrot.lane.b32.xlu0 %v183, 88
      %v667 = vpop.permute.xlu0 %666
      %668 = vrot.lane.b32.xlu0 %v184, 88
      %v669 = vpop.permute.xlu0 %668
      %v679 = vsel %vm283, %v646, 0
      %v682 = vsel %vm283, %v647, 0
      %v685 = vsel %vm283, %v648, 0
      %v688 = vsel %vm283, %v649, 0
      %v691 = vsel %vm283, %v650, 0
      %v694 = vsel %vm283, %v651, 0
      %v697 = vsel %vm283, %v652, 0
      %v700 = vsel %vm283, %v653, 0
      %702 = vmatpush.msra.mxu0 0.0
      %703 = vmatpush.msra.mxu0 0.0
      %704 = vmatpush.msra.mxu0 0.0
      %705 = vmatpush.msra.mxu0 0.0
      %706 = vmatpush.msra.mxu0 0.0
      %707 = vmatpush.msra.mxu0 0.0
      %708 = vmatpush.msra.mxu0 0.0
      %709 = vmatpush.msra.mxu0 0.0
      %710 = vmatpush.msra.mxu0 %v669
      %711 = vmatpush.msra.mxu0 %v667
      %712 = vmatpush.msra.mxu0 %v665
      %713 = vmatpush.msra.mxu0 %v663
      %714 = vmatpush.msra.mxu0 %v661
      %715 = vmatpush.msra.mxu0 %v659
      %716 = vmatpush.msra.mxu0 %v657
      %717 = vmatpush.msra.mxu0 %v655
      %718 = vmatmul.f32.gmra.mxu0 %v679
      %v719 = vpop.f32.mrf.mxu0
      %v720 = vadd.f32 0.0, %v719
      %721 = vmatmul.f32.gmra.mxu0 %v682
      %v722 = vpop.f32.mrf.mxu0
      %v723 = vadd.f32 0.0, %v722
      %724 = vmatmul.f32.gmra.mxu0 %v685
      %v725 = vpop.f32.mrf.mxu0
      %v726 = vadd.f32 0.0, %v725
      %727 = vmatmul.f32.gmra.mxu0 %v688
      %v728 = vpop.f32.mrf.mxu0
      %v729 = vadd.f32 0.0, %v728
      %730 = vmatmul.f32.gmra.mxu0 %v691
      %v731 = vpop.f32.mrf.mxu0
      %v732 = vadd.f32 0.0, %v731
      %733 = vmatmul.f32.gmra.mxu0 %v694
      %v734 = vpop.f32.mrf.mxu0
      %v735 = vadd.f32 0.0, %v734
      %736 = vmatmul.f32.gmra.mxu0 %v697
      %v737 = vpop.f32.mrf.mxu0
      %v738 = vadd.f32 0.0, %v737
      %739 = vmatmul.f32.gmra.mxu0 %v700
      %v740 = vpop.f32.mrf.mxu0
      %v741 = vadd.f32 0.0, %v740
      %742 = vdwg.mxu0
      %743 = vrot.lane.b32.xlu0 %v185, 112
      %v744 = vpop.permute.xlu0 %743
      %745 = vrot.lane.b32.xlu0 %v186, 112
      %v746 = vpop.permute.xlu0 %745
      %747 = vrot.lane.b32.xlu0 %v187, 112
      %v748 = vpop.permute.xlu0 %747
      %749 = vrot.lane.b32.xlu0 %v188, 112
      %v750 = vpop.permute.xlu0 %749
      %751 = vrot.lane.b32.xlu0 %v189, 112
      %v752 = vpop.permute.xlu0 %751
      %753 = vrot.lane.b32.xlu0 %v190, 112
      %v754 = vpop.permute.xlu0 %753
      %755 = vrot.lane.b32.xlu0 %v191, 112
      %v756 = vpop.permute.xlu0 %755
      %757 = vrot.lane.b32.xlu0 %v192, 112
      %v758 = vpop.permute.xlu0 %757
      %759 = vrot.lane.b32.xlu0 %v177, 112
      %v760 = vpop.permute.xlu0 %759
      %761 = vrot.lane.b32.xlu0 %v178, 112
      %v762 = vpop.permute.xlu0 %761
      %763 = vrot.lane.b32.xlu0 %v179, 112
      %v764 = vpop.permute.xlu0 %763
      %765 = vrot.lane.b32.xlu0 %v180, 112
      %v766 = vpop.permute.xlu0 %765
      %767 = vrot.lane.b32.xlu0 %v181, 112
      %v768 = vpop.permute.xlu0 %767
      %769 = vrot.lane.b32.xlu0 %v182, 112
      %v770 = vpop.permute.xlu0 %769
      %771 = vrot.lane.b32.xlu0 %v183, 112
      %v772 = vpop.permute.xlu0 %771
      %773 = vrot.lane.b32.xlu0 %v184, 112
      %v774 = vpop.permute.xlu0 %773
      %v775 = vsel %vm193, %v744, 0
      %v777 = vsel %vm193, %v746, 0
      %v779 = vsel %vm193, %v748, 0
      %v781 = vsel %vm193, %v750, 0
      %v783 = vsel %vm193, %v752, 0
      %v785 = vsel %vm193, %v754, 0
      %v787 = vsel %vm193, %v756, 0
      %v789 = vsel %vm193, %v758, 0
      %v791 = vsel %vm193, %v760, 0
      %v793 = vsel %vm193, %v762, 0
      %v795 = vsel %vm193, %v764, 0
      %v797 = vsel %vm193, %v766, 0
      %v799 = vsel %vm193, %v768, 0
      %v801 = vsel %vm193, %v770, 0
      %v803 = vsel %vm193, %v772, 0
      %v805 = vsel %vm193, %v774, 0
      %807 = vmatpush.xpose.msra.mxu0 0.0
      %808 = vmatpush.xpose.msra.mxu0 0.0
      %809 = vmatpush.xpose.msra.mxu0 0.0
      %810 = vmatpush.xpose.msra.mxu0 0.0
      %811 = vmatpush.xpose.msra.mxu0 0.0
      %812 = vmatpush.xpose.msra.mxu0 0.0
      %813 = vmatpush.xpose.msra.mxu0 0.0
      %814 = vmatpush.xpose.msra.mxu0 0.0
      %815 = vmatpush.xpose.msra.mxu0 %v805
      %816 = vmatpush.xpose.msra.mxu0 %v803
      %817 = vmatpush.xpose.msra.mxu0 %v801
      %818 = vmatpush.xpose.msra.mxu0 %v799
      %819 = vmatpush.xpose.msra.mxu0 %v797
      %820 = vmatpush.xpose.msra.mxu0 %v795
      %821 = vmatpush.xpose.msra.mxu0 %v793
      %822 = vmatpush.xpose.msra.mxu0 %v791
      %823 = vmatmul.f32.gmra.mxu0 %v775
      %v824 = vpop.f32.mrf.mxu0
      %v825 = vadd.f32 0.0, %v824
      %826 = vmatmul.f32.gmra.mxu0 %v777
      %v827 = vpop.f32.mrf.mxu0
      %v828 = vadd.f32 0.0, %v827
      %829 = vmatmul.f32.gmra.mxu0 %v779
      %v830 = vpop.f32.mrf.mxu0
      %v831 = vadd.f32 0.0, %v830
      %832 = vmatmul.f32.gmra.mxu0 %v781
      %v833 = vpop.f32.mrf.mxu0
      %v834 = vadd.f32 0.0, %v833
      %835 = vmatmul.f32.gmra.mxu0 %v783
      %v836 = vpop.f32.mrf.mxu0
      %v837 = vadd.f32 0.0, %v836
      %838 = vmatmul.f32.gmra.mxu0 %v785
      %v839 = vpop.f32.mrf.mxu0
      %v840 = vadd.f32 0.0, %v839
      %841 = vmatmul.f32.gmra.mxu0 %v787
      %v842 = vpop.f32.mrf.mxu0
      %v843 = vadd.f32 0.0, %v842
      %844 = vmatmul.f32.gmra.mxu0 %v789
      %v845 = vpop.f32.mrf.mxu0
      %v846 = vadd.f32 0.0, %v845
      %847 = vdwg.mxu0
      %v848 = vsel %vm283, %v825, -inf
      %849 = vmax.xlane.f32.xlu0 %v848
      %v850 = vpop.xlane.xlu0 %849
      %v851 = vsel %vm283, %v828, -inf
      %852 = vmax.xlane.f32.xlu0 %v851
      %v853 = vpop.xlane.xlu0 %852
      %v854 = vsel %vm283, %v831, -inf
      %855 = vmax.xlane.f32.xlu0 %v854
      %v856 = vpop.xlane.xlu0 %855
      %v857 = vsel %vm283, %v834, -inf
      %858 = vmax.xlane.f32.xlu0 %v857
      %v859 = vpop.xlane.xlu0 %858
      %v860 = vsel %vm283, %v837, -inf
      %861 = vmax.xlane.f32.xlu0 %v860
      %v862 = vpop.xlane.xlu0 %861
      %v863 = vsel %vm283, %v840, -inf
      %864 = vmax.xlane.f32.xlu0 %v863
      %v865 = vpop.xlane.xlu0 %864
      %v866 = vsel %vm283, %v843, -inf
      %867 = vmax.xlane.f32.xlu0 %v866
      %v868 = vpop.xlane.xlu0 %867
      %v869 = vsel %vm283, %v846, -inf
      %870 = vmax.xlane.f32.xlu0 %v869
      %v871 = vpop.xlane.xlu0 %870
      %v872 = vsub.f32 %v825, %v850
      %v873 = vsub.f32 %v828, %v853
      %v874 = vsub.f32 %v831, %v856
      %v875 = vsub.f32 %v834, %v859
      %v876 = vsub.f32 %v837, %v862
      %v877 = vsub.f32 %v840, %v865
      %v878 = vsub.f32 %v843, %v868
      %v879 = vsub.f32 %v846, %v871
      %v880 = vmul.f32 %v872, 1.442695
      %v881 = vpow.pop %v880
      %v882 = vmul.f32 %v873, 1.442695
      %v883 = vpow.pop %v882
      %v884 = vmul.f32 %v874, 1.442695
      %v885 = vpow.pop %v884
      %v886 = vmul.f32 %v875, 1.442695
      %v887 = vpow.pop %v886
      %v888 = vmul.f32 %v876, 1.442695
      %v889 = vpow.pop %v888
      %v890 = vmul.f32 %v877, 1.442695
      %v891 = vpow.pop %v890
      %v892 = vmul.f32 %v878, 1.442695
      %v893 = vpow.pop %v892
      %v894 = vmul.f32 %v879, 1.442695
      %v895 = vpow.pop %v894
      %v896 = vsel %vm283, %v881, 0.0
      %897 = vadd.xlane.f32.xlu0 %v896
      %v898 = vpop.xlane.xlu0 %897
      %v899 = vsel %vm283, %v883, 0.0
      %900 = vadd.xlane.f32.xlu0 %v899
      %v901 = vpop.xlane.xlu0 %900
      %v902 = vsel %vm283, %v885, 0.0
      %903 = vadd.xlane.f32.xlu0 %v902
      %v904 = vpop.xlane.xlu0 %903
      %v905 = vsel %vm283, %v887, 0.0
      %906 = vadd.xlane.f32.xlu0 %v905
      %v907 = vpop.xlane.xlu0 %906
      %v908 = vsel %vm283, %v889, 0.0
      %909 = vadd.xlane.f32.xlu0 %v908
      %v910 = vpop.xlane.xlu0 %909
      %v911 = vsel %vm283, %v891, 0.0
      %912 = vadd.xlane.f32.xlu0 %v911
      %v913 = vpop.xlane.xlu0 %912
      %v914 = vsel %vm283, %v893, 0.0
      %915 = vadd.xlane.f32.xlu0 %v914
      %v916 = vpop.xlane.xlu0 %915
      %v917 = vsel %vm283, %v895, 0.0
      %918 = vadd.xlane.f32.xlu0 %v917
      %v919 = vpop.xlane.xlu0 %918
      %v920 = vrcp.pop %v898
      %v921 = vrcp.pop %v901
      %v922 = vrcp.pop %v904
      %v923 = vrcp.pop %v907
      %v924 = vrcp.pop %v910
      %v925 = vrcp.pop %v913
      %v926 = vrcp.pop %v916
      %v927 = vrcp.pop %v919
      %v928 = vmul.f32 %v881, %v920
      %v929 = vmul.f32 %v883, %v921
      %v930 = vmul.f32 %v885, %v922
      %v931 = vmul.f32 %v887, %v923
      %v932 = vmul.f32 %v889, %v924
      %v933 = vmul.f32 %v891, %v925
      %v934 = vmul.f32 %v893, %v926
      %v935 = vmul.f32 %v895, %v927
      %936 = vrot.lane.b32.xlu0 %v177, 80
      %v937 = vpop.permute.xlu0 %936
      %938 = vrot.lane.b32.xlu0 %v178, 80
      %v939 = vpop.permute.xlu0 %938
      %940 = vrot.lane.b32.xlu0 %v179, 80
      %v941 = vpop.permute.xlu0 %940
      %942 = vrot.lane.b32.xlu0 %v180, 80
      %v943 = vpop.permute.xlu0 %942
      %944 = vrot.lane.b32.xlu0 %v181, 80
      %v945 = vpop.permute.xlu0 %944
      %946 = vrot.lane.b32.xlu0 %v182, 80
      %v947 = vpop.permute.xlu0 %946
      %948 = vrot.lane.b32.xlu0 %v183, 80
      %v949 = vpop.permute.xlu0 %948
      %950 = vrot.lane.b32.xlu0 %v184, 80
      %v951 = vpop.permute.xlu0 %950
      %v961 = vsel %vm283, %v928, 0
      %v964 = vsel %vm283, %v929, 0
      %v967 = vsel %vm283, %v930, 0
      %v970 = vsel %vm283, %v931, 0
      %v973 = vsel %vm283, %v932, 0
      %v976 = vsel %vm283, %v933, 0
      %v979 = vsel %vm283, %v934, 0
      %v982 = vsel %vm283, %v935, 0
      %984 = vmatpush.msra.mxu0 0.0
      %985 = vmatpush.msra.mxu0 0.0
      %986 = vmatpush.msra.mxu0 0.0
      %987 = vmatpush.msra.mxu0 0.0
      %988 = vmatpush.msra.mxu0 0.0
      %989 = vmatpush.msra.mxu0 0.0
      %990 = vmatpush.msra.mxu0 0.0
      %991 = vmatpush.msra.mxu0 0.0
      %992 = vmatpush.msra.mxu0 %v951
      %993 = vmatpush.msra.mxu0 %v949
      %994 = vmatpush.msra.mxu0 %v947
      %995 = vmatpush.msra.mxu0 %v945
      %996 = vmatpush.msra.mxu0 %v943
      %997 = vmatpush.msra.mxu0 %v941
      %998 = vmatpush.msra.mxu0 %v939
      %999 = vmatpush.msra.mxu0 %v937
      %1000 = vmatmul.f32.gmra.mxu0 %v961
      %v1001 = vpop.f32.mrf.mxu0
      %v1002 = vadd.f32 0.0, %v1001
      %1003 = vmatmul.f32.gmra.mxu0 %v964
      %v1004 = vpop.f32.mrf.mxu0
      %v1005 = vadd.f32 0.0, %v1004
      %1006 = vmatmul.f32.gmra.mxu0 %v967
      %v1007 = vpop.f32.mrf.mxu0
      %v1008 = vadd.f32 0.0, %v1007
      %1009 = vmatmul.f32.gmra.mxu0 %v970
      %v1010 = vpop.f32.mrf.mxu0
      %v1011 = vadd.f32 0.0, %v1010
      %1012 = vmatmul.f32.gmra.mxu0 %v973
      %v1013 = vpop.f32.mrf.mxu0
      %v1014 = vadd.f32 0.0, %v1013
      %1015 = vmatmul.f32.gmra.mxu0 %v976
      %v1016 = vpop.f32.mrf.mxu0
      %v1017 = vadd.f32 0.0, %v1016
      %1018 = vmatmul.f32.gmra.mxu0 %v979
      %v1019 = vpop.f32.mrf.mxu0
      %v1020 = vadd.f32 0.0, %v1019
      %1021 = vmatmul.f32.gmra.mxu0 %v982
      %v1022 = vpop.f32.mrf.mxu0
      %v1023 = vadd.f32 0.0, %v1022
      %1024 = vdwg.mxu0
      %1025 = vrot.lane.b32.xlu0 %v185, 104
      %v1026 = vpop.permute.xlu0 %1025
      %1027 = vrot.lane.b32.xlu0 %v186, 104
      %v1028 = vpop.permute.xlu0 %1027
      %1029 = vrot.lane.b32.xlu0 %v187, 104
      %v1030 = vpop.permute.xlu0 %1029
      %1031 = vrot.lane.b32.xlu0 %v188, 104
      %v1032 = vpop.permute.xlu0 %1031
      %1033 = vrot.lane.b32.xlu0 %v189, 104
      %v1034 = vpop.permute.xlu0 %1033
      %1035 = vrot.lane.b32.xlu0 %v190, 104
      %v1036 = vpop.permute.xlu0 %1035
      %1037 = vrot.lane.b32.xlu0 %v191, 104
      %v1038 = vpop.permute.xlu0 %1037
      %1039 = vrot.lane.b32.xlu0 %v192, 104
      %v1040 = vpop.permute.xlu0 %1039
      %1041 = vrot.lane.b32.xlu0 %v177, 104
      %v1042 = vpop.permute.xlu0 %1041
      %1043 = vrot.lane.b32.xlu0 %v178, 104
      %v1044 = vpop.permute.xlu0 %1043
      %1045 = vrot.lane.b32.xlu0 %v179, 104
      %v1046 = vpop.permute.xlu0 %1045
      %1047 = vrot.lane.b32.xlu0 %v180, 104
      %v1048 = vpop.permute.xlu0 %1047
      %1049 = vrot.lane.b32.xlu0 %v181, 104
      %v1050 = vpop.permute.xlu0 %1049
      %1051 = vrot.lane.b32.xlu0 %v182, 104
      %v1052 = vpop.permute.xlu0 %1051
      %1053 = vrot.lane.b32.xlu0 %v183, 104
      %v1054 = vpop.permute.xlu0 %1053
      %1055 = vrot.lane.b32.xlu0 %v184, 104
      %v1056 = vpop.permute.xlu0 %1055
      %v1057 = vsel %vm193, %v1026, 0
      %v1059 = vsel %vm193, %v1028, 0
      %v1061 = vsel %vm193, %v1030, 0
      %v1063 = vsel %vm193, %v1032, 0
      %v1065 = vsel %vm193, %v1034, 0
      %v1067 = vsel %vm193, %v1036, 0
      %v1069 = vsel %vm193, %v1038, 0
      %v1071 = vsel %vm193, %v1040, 0
      %v1073 = vsel %vm193, %v1042, 0
      %v1075 = vsel %vm193, %v1044, 0
      %v1077 = vsel %vm193, %v1046, 0
      %v1079 = vsel %vm193, %v1048, 0
      %v1081 = vsel %vm193, %v1050, 0
      %v1083 = vsel %vm193, %v1052, 0
      %v1085 = vsel %vm193, %v1054, 0
      %v1087 = vsel %vm193, %v1056, 0
      %1089 = vmatpush.xpose.msra.mxu0 0.0
      %1090 = vmatpush.xpose.msra.mxu0 0.0
      %1091 = vmatpush.xpose.msra.mxu0 0.0
      %1092 = vmatpush.xpose.msra.mxu0 0.0
      %1093 = vmatpush.xpose.msra.mxu0 0.0
      %1094 = vmatpush.xpose.msra.mxu0 0.0
      %1095 = vmatpush.xpose.msra.mxu0 0.0
      %1096 = vmatpush.xpose.msra.mxu0 0.0
      %1097 = vmatpush.xpose.msra.mxu0 %v1087
      %1098 = vmatpush.xpose.msra.mxu0 %v1085
      %1099 = vmatpush.xpose.msra.mxu0 %v1083
      %1100 = vmatpush.xpose.msra.mxu0 %v1081
      %1101 = vmatpush.xpose.msra.mxu0 %v1079
      %1102 = vmatpush.xpose.msra.mxu0 %v1077
      %1103 = vmatpush.xpose.msra.mxu0 %v1075
      %1104 = vmatpush.xpose.msra.mxu0 %v1073
      %1105 = vmatmul.f32.gmra.mxu0 %v1057
      %v1106 = vpop.f32.mrf.mxu0
      %v1107 = vadd.f32 0.0, %v1106
      %1108 = vmatmul.f32.gmra.mxu0 %v1059
      %v1109 = vpop.f32.mrf.mxu0
      %v1110 = vadd.f32 0.0, %v1109
      %1111 = vmatmul.f32.gmra.mxu0 %v1061
      %v1112 = vpop.f32.mrf.mxu0
      %v1113 = vadd.f32 0.0, %v1112
      %1114 = vmatmul.f32.gmra.mxu0 %v1063
      %v1115 = vpop.f32.mrf.mxu0
      %v1116 = vadd.f32 0.0, %v1115
      %1117 = vmatmul.f32.gmra.mxu0 %v1065
      %v1118 = vpop.f32.mrf.mxu0
      %v1119 = vadd.f32 0.0, %v1118
      %1120 = vmatmul.f32.gmra.mxu0 %v1067
      %v1121 = vpop.f32.mrf.mxu0
      %v1122 = vadd.f32 0.0, %v1121
      %1123 = vmatmul.f32.gmra.mxu0 %v1069
      %v1124 = vpop.f32.mrf.mxu0
      %v1125 = vadd.f32 0.0, %v1124
      %1126 = vmatmul.f32.gmra.mxu0 %v1071
      %v1127 = vpop.f32.mrf.mxu0
      %v1128 = vadd.f32 0.0, %v1127
      %1129 = vdwg.mxu0
      %v1130 = vsel %vm283, %v1107, -inf
      %1131 = vmax.xlane.f32.xlu0 %v1130
      %v1132 = vpop.xlane.xlu0 %1131
      %v1133 = vsel %vm283, %v1110, -inf
      %1134 = vmax.xlane.f32.xlu0 %v1133
      %v1135 = vpop.xlane.xlu0 %1134
      %v1136 = vsel %vm283, %v1113, -inf
      %1137 = vmax.xlane.f32.xlu0 %v1136
      %v1138 = vpop.xlane.xlu0 %1137
      %v1139 = vsel %vm283, %v1116, -inf
      %1140 = vmax.xlane.f32.xlu0 %v1139
      %v1141 = vpop.xlane.xlu0 %1140
      %v1142 = vsel %vm283, %v1119, -inf
      %1143 = vmax.xlane.f32.xlu0 %v1142
      %v1144 = vpop.xlane.xlu0 %1143
      %v1145 = vsel %vm283, %v1122, -inf
      %1146 = vmax.xlane.f32.xlu0 %v1145
      %v1147 = vpop.xlane.xlu0 %1146
      %v1148 = vsel %vm283, %v1125, -inf
      %1149 = vmax.xlane.f32.xlu0 %v1148
      %v1150 = vpop.xlane.xlu0 %1149
      %v1151 = vsel %vm283, %v1128, -inf
      %1152 = vmax.xlane.f32.xlu0 %v1151
      %v1153 = vpop.xlane.xlu0 %1152
      %v1154 = vsub.f32 %v1107, %v1132
      %v1155 = vsub.f32 %v1110, %v1135
      %v1156 = vsub.f32 %v1113, %v1138
      %v1157 = vsub.f32 %v1116, %v1141
      %v1158 = vsub.f32 %v1119, %v1144
      %v1159 = vsub.f32 %v1122, %v1147
      %v1160 = vsub.f32 %v1125, %v1150
      %v1161 = vsub.f32 %v1128, %v1153
      %v1162 = vmul.f32 %v1154, 1.442695
      %v1163 = vpow.pop %v1162
      %v1164 = vmul.f32 %v1155, 1.442695
      %v1165 = vpow.pop %v1164
      %v1166 = vmul.f32 %v1156, 1.442695
      %v1167 = vpow.pop %v1166
      %v1168 = vmul.f32 %v1157, 1.442695
      %v1169 = vpow.pop %v1168
      %v1170 = vmul.f32 %v1158, 1.442695
      %v1171 = vpow.pop %v1170
      %v1172 = vmul.f32 %v1159, 1.442695
      %v1173 = vpow.pop %v1172
      %v1174 = vmul.f32 %v1160, 1.442695
      %v1175 = vpow.pop %v1174
      %v1176 = vmul.f32 %v1161, 1.442695
      %v1177 = vpow.pop %v1176
      %v1178 = vsel %vm283, %v1163, 0.0
      %1179 = vadd.xlane.f32.xlu0 %v1178
      %v1180 = vpop.xlane.xlu0 %1179
      %v1181 = vsel %vm283, %v1165, 0.0
      %1182 = vadd.xlane.f32.xlu0 %v1181
      %v1183 = vpop.xlane.xlu0 %1182
      %v1184 = vsel %vm283, %v1167, 0.0
      %1185 = vadd.xlane.f32.xlu0 %v1184
      %v1186 = vpop.xlane.xlu0 %1185
      %v1187 = vsel %vm283, %v1169, 0.0
      %1188 = vadd.xlane.f32.xlu0 %v1187
      %v1189 = vpop.xlane.xlu0 %1188
      %v1190 = vsel %vm283, %v1171, 0.0
      %1191 = vadd.xlane.f32.xlu0 %v1190
      %v1192 = vpop.xlane.xlu0 %1191
      %v1193 = vsel %vm283, %v1173, 0.0
      %1194 = vadd.xlane.f32.xlu0 %v1193
      %v1195 = vpop.xlane.xlu0 %1194
      %v1196 = vsel %vm283, %v1175, 0.0
      %1197 = vadd.xlane.f32.xlu0 %v1196
      %v1198 = vpop.xlane.xlu0 %1197
      %v1199 = vsel %vm283, %v1177, 0.0
      %1200 = vadd.xlane.f32.xlu0 %v1199
      %v1201 = vpop.xlane.xlu0 %1200
      %v1202 = vrcp.pop %v1180
      %v1203 = vrcp.pop %v1183
      %v1204 = vrcp.pop %v1186
      %v1205 = vrcp.pop %v1189
      %v1206 = vrcp.pop %v1192
      %v1207 = vrcp.pop %v1195
      %v1208 = vrcp.pop %v1198
      %v1209 = vrcp.pop %v1201
      %v1210 = vmul.f32 %v1163, %v1202
      %v1211 = vmul.f32 %v1165, %v1203
      %v1212 = vmul.f32 %v1167, %v1204
      %v1213 = vmul.f32 %v1169, %v1205
      %v1214 = vmul.f32 %v1171, %v1206
      %v1215 = vmul.f32 %v1173, %v1207
      %v1216 = vmul.f32 %v1175, %v1208
      %v1217 = vmul.f32 %v1177, %v1209
      %1218 = vrot.lane.b32.xlu0 %v177, 72
      %v1219 = vpop.permute.xlu0 %1218
      %1220 = vrot.lane.b32.xlu0 %v178, 72
      %v1221 = vpop.permute.xlu0 %1220
      %1222 = vrot.lane.b32.xlu0 %v179, 72
      %v1223 = vpop.permute.xlu0 %1222
      %1224 = vrot.lane.b32.xlu0 %v180, 72
      %v1225 = vpop.permute.xlu0 %1224
      %1226 = vrot.lane.b32.xlu0 %v181, 72
      %v1227 = vpop.permute.xlu0 %1226
      %1228 = vrot.lane.b32.xlu0 %v182, 72
      %v1229 = vpop.permute.xlu0 %1228
      %1230 = vrot.lane.b32.xlu0 %v183, 72
      %v1231 = vpop.permute.xlu0 %1230
      %1232 = vrot.lane.b32.xlu0 %v184, 72
      %v1233 = vpop.permute.xlu0 %1232
      %v1243 = vsel %vm283, %v1210, 0
      %v1246 = vsel %vm283, %v1211, 0
      %v1249 = vsel %vm283, %v1212, 0
      %v1252 = vsel %vm283, %v1213, 0
      %v1255 = vsel %vm283, %v1214, 0
      %v1258 = vsel %vm283, %v1215, 0
      %v1261 = vsel %vm283, %v1216, 0
      %v1264 = vsel %vm283, %v1217, 0
      %1266 = vmatpush.msra.mxu0 0.0
      %1267 = vmatpush.msra.mxu0 0.0
      %1268 = vmatpush.msra.mxu0 0.0
      %1269 = vmatpush.msra.mxu0 0.0
      %1270 = vmatpush.msra.mxu0 0.0
      %1271 = vmatpush.msra.mxu0 0.0
      %1272 = vmatpush.msra.mxu0 0.0
      %1273 = vmatpush.msra.mxu0 0.0
      %1274 = vmatpush.msra.mxu0 %v1233
      %1275 = vmatpush.msra.mxu0 %v1231
      %1276 = vmatpush.msra.mxu0 %v1229
      %1277 = vmatpush.msra.mxu0 %v1227
      %1278 = vmatpush.msra.mxu0 %v1225
      %1279 = vmatpush.msra.mxu0 %v1223
      %1280 = vmatpush.msra.mxu0 %v1221
      %1281 = vmatpush.msra.mxu0 %v1219
      %1282 = vmatmul.f32.gmra.mxu0 %v1243
      %v1283 = vpop.f32.mrf.mxu0
      %v1284 = vadd.f32 0.0, %v1283
      %1285 = vmatmul.f32.gmra.mxu0 %v1246
      %v1286 = vpop.f32.mrf.mxu0
      %v1287 = vadd.f32 0.0, %v1286
      %1288 = vmatmul.f32.gmra.mxu0 %v1249
      %v1289 = vpop.f32.mrf.mxu0
      %v1290 = vadd.f32 0.0, %v1289
      %1291 = vmatmul.f32.gmra.mxu0 %v1252
      %v1292 = vpop.f32.mrf.mxu0
      %v1293 = vadd.f32 0.0, %v1292
      %1294 = vmatmul.f32.gmra.mxu0 %v1255
      %v1295 = vpop.f32.mrf.mxu0
      %v1296 = vadd.f32 0.0, %v1295
      %1297 = vmatmul.f32.gmra.mxu0 %v1258
      %v1298 = vpop.f32.mrf.mxu0
      %v1299 = vadd.f32 0.0, %v1298
      %1300 = vmatmul.f32.gmra.mxu0 %v1261
      %v1301 = vpop.f32.mrf.mxu0
      %v1302 = vadd.f32 0.0, %v1301
      %1303 = vmatmul.f32.gmra.mxu0 %v1264
      %v1304 = vpop.f32.mrf.mxu0
      %v1305 = vadd.f32 0.0, %v1304
      %1306 = vdwg.mxu0
      %1315 = vrot.lane.b32.xlu0 %v720, 8
      %v1316 = vpop.permute.xlu0 %1315
      %1317 = vrot.lane.b32.xlu0 %v723, 8
      %v1318 = vpop.permute.xlu0 %1317
      %1319 = vrot.lane.b32.xlu0 %v726, 8
      %v1320 = vpop.permute.xlu0 %1319
      %1321 = vrot.lane.b32.xlu0 %v729, 8
      %v1322 = vpop.permute.xlu0 %1321
      %1323 = vrot.lane.b32.xlu0 %v732, 8
      %v1324 = vpop.permute.xlu0 %1323
      %1325 = vrot.lane.b32.xlu0 %v735, 8
      %v1326 = vpop.permute.xlu0 %1325
      %1327 = vrot.lane.b32.xlu0 %v738, 8
      %v1328 = vpop.permute.xlu0 %1327
      %1329 = vrot.lane.b32.xlu0 %v741, 8
      %v1330 = vpop.permute.xlu0 %1329
      %1347 = vrot.lane.b32.xlu0 %v1002, 16
      %v1348 = vpop.permute.xlu0 %1347
      %1349 = vrot.lane.b32.xlu0 %v1005, 16
      %v1350 = vpop.permute.xlu0 %1349
      %1351 = vrot.lane.b32.xlu0 %v1008, 16
      %v1352 = vpop.permute.xlu0 %1351
      %1353 = vrot.lane.b32.xlu0 %v1011, 16
      %v1354 = vpop.permute.xlu0 %1353
      %1355 = vrot.lane.b32.xlu0 %v1014, 16
      %v1356 = vpop.permute.xlu0 %1355
      %1357 = vrot.lane.b32.xlu0 %v1017, 16
      %v1358 = vpop.permute.xlu0 %1357
      %1359 = vrot.lane.b32.xlu0 %v1020, 16
      %v1360 = vpop.permute.xlu0 %1359
      %1361 = vrot.lane.b32.xlu0 %v1023, 16
      %v1362 = vpop.permute.xlu0 %1361
      %1379 = vrot.lane.b32.xlu0 %v1284, 24
      %v1380 = vpop.permute.xlu0 %1379
      %1381 = vrot.lane.b32.xlu0 %v1287, 24
      %v1382 = vpop.permute.xlu0 %1381
      %1383 = vrot.lane.b32.xlu0 %v1290, 24
      %v1384 = vpop.permute.xlu0 %1383
      %1385 = vrot.lane.b32.xlu0 %v1293, 24
      %v1386 = vpop.permute.xlu0 %1385
      %1387 = vrot.lane.b32.xlu0 %v1296, 24
      %v1388 = vpop.permute.xlu0 %1387
      %1389 = vrot.lane.b32.xlu0 %v1299, 24
      %v1390 = vpop.permute.xlu0 %1389
      %1391 = vrot.lane.b32.xlu0 %v1302, 24
      %v1392 = vpop.permute.xlu0 %1391
      %1393 = vrot.lane.b32.xlu0 %v1305, 24
      %v1394 = vpop.permute.xlu0 %1393
      %v1403 = vsel %vm193, %v438, %v1316
      %v1404 = vsel %vm193, %v441, %v1318
      %v1405 = vsel %vm193, %v444, %v1320
      %v1406 = vsel %vm193, %v447, %v1322
      %v1407 = vsel %vm193, %v450, %v1324
      %v1408 = vsel %vm193, %v453, %v1326
      %v1409 = vsel %vm193, %v456, %v1328
      %v1410 = vsel %vm193, %v459, %v1330
      %vm1411 = vcmask 130048
      %v1412 = vsel %vm1411, %v1403, %v1348
      %v1413 = vsel %vm1411, %v1404, %v1350
      %v1414 = vsel %vm1411, %v1405, %v1352
      %v1415 = vsel %vm1411, %v1406, %v1354
      %v1416 = vsel %vm1411, %v1407, %v1356
      %v1417 = vsel %vm1411, %v1408, %v1358
      %v1418 = vsel %vm1411, %v1409, %v1360
      %v1419 = vsel %vm1411, %v1410, %v1362
      %vm1420 = vcmask 195584
      %v1421 = vsel %vm1420, %v1412, %v1380
      %v1422 = vsel %vm1420, %v1413, %v1382
      %v1423 = vsel %vm1420, %v1414, %v1384
      %v1424 = vsel %vm1420, %v1415, %v1386
      %v1425 = vsel %vm1420, %v1416, %v1388
      %v1426 = vsel %vm1420, %v1417, %v1390
      %v1427 = vsel %vm1420, %v1418, %v1392
      %v1428 = vsel %vm1420, %v1419, %v1394
      %vm1429 = vcmask 261120
      %1430 = vst.msk [vmem:[%s167] sm:$0xff] %vm1429, %v1421
      %1431 = vst.msk [vmem:[%s167 + $0x8] sm:$0xff] %vm1429, %v1422
      %1432 = vst.msk [vmem:[%s167 + $0x10] sm:$0xff] %vm1429, %v1423
      %1433 = vst.msk [vmem:[%s167 + $0x18] sm:$0xff] %vm1429, %v1424
      %1434 = vst.msk [vmem:[%s167 + $0x20] sm:$0xff] %vm1429, %v1425
      %1435 = vst.msk [vmem:[%s167 + $0x28] sm:$0xff] %vm1429, %v1426
      %1436 = vst.msk [vmem:[%s167 + $0x30] sm:$0xff] %vm1429, %v1427
      %1437 = vst.msk [vmem:[%s167 + $0x38] sm:$0xff] %vm1429, %v1428
      %s1438 = smul.u32 8, %s13
      %p1439 = scmp.lt.s32.totalorder %s1438, 15
      %s1440 = scalar_select %p1439, %s1438, 15
      %s1441 = smul.addr %s1440, 8
      %s1442 = scalar_lea.vmem %s2, %s1441
      // Predicated region
      $region29: #{_lambda_.26} parent=27 // pred_check
        %p1443 = pneg %p83
      $region30: #{_lambda_.26} parent=27 // pred_check_branch
        %1445 = sbr.rel (%p1443) target = $region32
      $region31: #{_lambda_.26} parent=27 // pred_region
        %s1446 = smul.u32 8, %s13
      $region32: #{_lambda_.26} parent=27 // pred_fallthru
        _
    $region28: #{_lambda_.26} parent=5 // pred_fallthru
      _
    %p1447 = scmp.le.s32.totalorder 2, %s8
    // Predicated region
    $region33: #{_lambda_.26} parent=5 // pred_check
      %p1448 = pneg %p1447
    $region34: #{_lambda_.26} parent=5 // pred_check_branch
      %1450 = sbr.rel (%p1448) target = $region36
    $region35: #{_lambda_.26} parent=5 // pred_region
      %s1451 = ssub.s32 %s8, 2
      // Predicated region
      $region37: #{_lambda_.26} parent=35 // pred_check
        %p1452 = pneg %p89
      $region38: #{_lambda_.26} parent=35 // pred_check_branch
        %1454 = sbr.rel (%p1452) target = $region40
      $region39: #{_lambda_.26} parent=35 // pred_region
        %s1455 = smul.u32 8, %s14
        %p1456 = scmp.lt.s32.totalorder %s1455, 15
        %s1457 = scalar_select %p1456, %s1455, 15
        %s1458 = smul.addr %s1457, 8
        %s1459 = scalar_lea.vmem %s2, %s1458
      $region40: #{_lambda_.26} parent=35 // pred_fallthru
        _
    $region36: #{_lambda_.26} parent=5 // pred_fallthru
      _
  $region6: #{_lambda_.26} parent=0 // loop_footer
    %s12 = sadd.s32 1, %s8
  $region7: #{_lambda_.26} parent=0 // loop_footer_branch
    %7 = sbr.rel target = $region3
  $region8: #{_lambda_.26} parent=0 // loop_exit
    _

// kernel: _lambda_.28
$region0: #{_lambda_.28}
  #allocation0 [shape = 'u32[]', space=smem, size = 0x4, offset = 0x4, fixed_abs, tag = 'smem constant byte address 0x4 - core index']
  #allocation1 [shape = 'u32[72,128]{1,0:T(1,128)}', space=vmem, size = 0x9000, scoped, tag = 'internal scratch']
  %s0 = inlined_call_operand.vmem [shape: f32[128,32], index: 0, kind: input, shape index: {}]
  %s1 = inlined_call_operand.vmem [shape: f32[32,64], index: 1, kind: input, shape index: {}]
  %s2 = inlined_call_operand.vmem [shape: f32[1,64], index: 2, kind: input, shape index: {}]
  %s3 = inlined_call_operand.vmem [shape: f32[64,32], index: 3, kind: input, shape index: {}]
  %s4 = inlined_call_operand.vmem [shape: f32[1,32], index: 4, kind: input, shape index: {}]
  %s5 = inlined_call_operand.vmem [shape: f32[1,32], index: 5, kind: input, shape index: {}]
  %s6 = inlined_call_operand.vmem [shape: f32[1,32], index: 6, kind: input, shape index: {}]
  %s7 = inlined_call_operand.vmem [shape: f32[128,32], index: 7, kind: output, shape index: {}]
  %s8 = sld [smem:[#allocation0]]
  $region61: #{_lambda_.28} parent=0
    _
  %s10 = ssub.s32 1, %s8
  %s11 = scalar_select 0, %s10, %s8
  loop: start=0, step=1, limit=4
  $region2: #{_lambda_.28} parent=0 // loop_pre_header
    _
  $region3: #{_lambda_.28} parent=0 // loop_header
    %s13 = sphi 0, %s17
    %p14 = scmp.ge.s32.totalorder %s13, 4
    %s23 = sphi 0, %s25
    %s26 = sphi 0, %s23
    %s27 = sphi 0, %s26
    %s43 = sphi 0, %s27
    %s47 = sphi 0, %s47
    %s49 = sphi 0, %s47
    %s50 = sphi 0, %s49
    %s64 = sphi 0, %s50
    %s68 = sphi 0, %s68
    %s70 = sphi 0, %s68
    %s71 = sphi 0, %s70
    %s85 = sphi 0, %s71
    %s89 = sphi 0, %s89
    %s91 = sphi 0, %s89
    %s92 = sphi 0, %s91
    %s106 = sphi 0, %s92
    %s110 = sphi 0, %s110
    %s112 = sphi 0, %s110
    %s113 = sphi 0, %s112
    %s127 = sphi 0, %s113
    %s131 = sphi 0, %s131
    %s133 = sphi 0, %s131
    %s134 = sphi 0, %s133
    %s148 = sphi 0, %s134
    %s152 = sphi 0, %s152
    %s154 = sphi 0, %s152
    %s155 = sphi 0, %s154
    %s169 = sphi 0, %s155
    %s175 = sphi 0, %s177
    %s178 = sphi 0, %s175
    %s179 = sphi 0, %s178
    %s195 = sphi 0, %s179
  $region4: #{_lambda_.28} parent=0 // loop_header_branch
    %16 = sbr.rel (%p14) target = $region8
  $region5: #{_lambda_.28} parent=0 // loop_body
    %s18 = ssub.s32 %s13, 1
    %s19 = ssub.s32 %s13, 2
    %s20 = sadd.s32 %s13, 1
    %s21 = ssub.s32 %s13, %s20
    %p22 = scmp.eq.s32.totalorder %s21, 0
    %s24 = sadd.s32 %s23, 1
    %s25 = scalar_select %p22, %s23, %s24
    %p28 = pneg %p22
    %p29 = scmp.eq.s32.totalorder %s13, 1
    %p30 = por %p28, %p29
    %p31 = scmp.ne.s32.totalorder %s23, %s26
    %p32 = scmp.eq.s32.totalorder %s13, 0
    %p33 = por %p31, %p32
    %p34 = scmp.ne.s32.totalorder %s23, %s26
    %p35 = scmp.eq.s32.totalorder %s18, 1
    %p36 = por %p34, %p35
    %p37 = scmp.ne.s32.totalorder %s26, %s27
    %p38 = scmp.eq.s32.totalorder %s18, 0
    %p39 = por %p37, %p38
    %p40 = scmp.ne.s32.totalorder %s26, %s27
    %p41 = scmp.eq.s32.totalorder %s19, 1
    %p42 = por %p40, %p41
    %p44 = scmp.ne.s32.totalorder %s27, %s43
    %p45 = scmp.eq.s32.totalorder %s19, 0
    %p46 = por %p44, %p45
    %s48 = sadd.s32 %s47, 1
    %p51 = scmp.eq.s32.totalorder %s13, 1
    %p52 = scmp.ne.s32.totalorder %s47, %s49
    %p53 = scmp.eq.s32.totalorder %s13, 0
    %p54 = por %p52, %p53
    %p55 = scmp.ne.s32.totalorder %s47, %s49
    %p56 = scmp.eq.s32.totalorder %s18, 1
    %p57 = por %p55, %p56
    %p58 = scmp.ne.s32.totalorder %s49, %s50
    %p59 = scmp.eq.s32.totalorder %s18, 0
    %p60 = por %p58, %p59
    %p61 = scmp.ne.s32.totalorder %s49, %s50
    %p62 = scmp.eq.s32.totalorder %s19, 1
    %p63 = por %p61, %p62
    %p65 = scmp.ne.s32.totalorder %s50, %s64
    %p66 = scmp.eq.s32.totalorder %s19, 0
    %p67 = por %p65, %p66
    %s69 = sadd.s32 %s68, 1
    %p72 = scmp.eq.s32.totalorder %s13, 1
    %p73 = scmp.ne.s32.totalorder %s68, %s70
    %p74 = scmp.eq.s32.totalorder %s13, 0
    %p75 = por %p73, %p74
    %p76 = scmp.ne.s32.totalorder %s68, %s70
    %p77 = scmp.eq.s32.totalorder %s18, 1
    %p78 = por %p76, %p77
    %p79 = scmp.ne.s32.totalorder %s70, %s71
    %p80 = scmp.eq.s32.totalorder %s18, 0
    %p81 = por %p79, %p80
    %p82 = scmp.ne.s32.totalorder %s70, %s71
    %p83 = scmp.eq.s32.totalorder %s19, 1
    %p84 = por %p82, %p83
    %p86 = scmp.ne.s32.totalorder %s71, %s85
    %p87 = scmp.eq.s32.totalorder %s19, 0
    %p88 = por %p86, %p87
    %s90 = sadd.s32 %s89, 1
    %p93 = scmp.eq.s32.totalorder %s13, 1
    %p94 = scmp.ne.s32.totalorder %s89, %s91
    %p95 = scmp.eq.s32.totalorder %s13, 0
    %p96 = por %p94, %p95
    %p97 = scmp.ne.s32.totalorder %s89, %s91
    %p98 = scmp.eq.s32.totalorder %s18, 1
    %p99 = por %p97, %p98
    %p100 = scmp.ne.s32.totalorder %s91, %s92
    %p101 = scmp.eq.s32.totalorder %s18, 0
    %p102 = por %p100, %p101
    %p103 = scmp.ne.s32.totalorder %s91, %s92
    %p104 = scmp.eq.s32.totalorder %s19, 1
    %p105 = por %p103, %p104
    %p107 = scmp.ne.s32.totalorder %s92, %s106
    %p108 = scmp.eq.s32.totalorder %s19, 0
    %p109 = por %p107, %p108
    %s111 = sadd.s32 %s110, 1
    %p114 = scmp.eq.s32.totalorder %s13, 1
    %p115 = scmp.ne.s32.totalorder %s110, %s112
    %p116 = scmp.eq.s32.totalorder %s13, 0
    %p117 = por %p115, %p116
    %p118 = scmp.ne.s32.totalorder %s110, %s112
    %p119 = scmp.eq.s32.totalorder %s18, 1
    %p120 = por %p118, %p119
    %p121 = scmp.ne.s32.totalorder %s112, %s113
    %p122 = scmp.eq.s32.totalorder %s18, 0
    %p123 = por %p121, %p122
    %p124 = scmp.ne.s32.totalorder %s112, %s113
    %p125 = scmp.eq.s32.totalorder %s19, 1
    %p126 = por %p124, %p125
    %p128 = scmp.ne.s32.totalorder %s113, %s127
    %p129 = scmp.eq.s32.totalorder %s19, 0
    %p130 = por %p128, %p129
    %s132 = sadd.s32 %s131, 1
    %p135 = scmp.eq.s32.totalorder %s13, 1
    %p136 = scmp.ne.s32.totalorder %s131, %s133
    %p137 = scmp.eq.s32.totalorder %s13, 0
    %p138 = por %p136, %p137
    %p139 = scmp.ne.s32.totalorder %s131, %s133
    %p140 = scmp.eq.s32.totalorder %s18, 1
    %p141 = por %p139, %p140
    %p142 = scmp.ne.s32.totalorder %s133, %s134
    %p143 = scmp.eq.s32.totalorder %s18, 0
    %p144 = por %p142, %p143
    %p145 = scmp.ne.s32.totalorder %s133, %s134
    %p146 = scmp.eq.s32.totalorder %s19, 1
    %p147 = por %p145, %p146
    %p149 = scmp.ne.s32.totalorder %s134, %s148
    %p150 = scmp.eq.s32.totalorder %s19, 0
    %p151 = por %p149, %p150
    %s153 = sadd.s32 %s152, 1
    %p156 = scmp.eq.s32.totalorder %s13, 1
    %p157 = scmp.ne.s32.totalorder %s152, %s154
    %p158 = scmp.eq.s32.totalorder %s13, 0
    %p159 = por %p157, %p158
    %p160 = scmp.ne.s32.totalorder %s152, %s154
    %p161 = scmp.eq.s32.totalorder %s18, 1
    %p162 = por %p160, %p161
    %p163 = scmp.ne.s32.totalorder %s154, %s155
    %p164 = scmp.eq.s32.totalorder %s18, 0
    %p165 = por %p163, %p164
    %p166 = scmp.ne.s32.totalorder %s154, %s155
    %p167 = scmp.eq.s32.totalorder %s19, 1
    %p168 = por %p166, %p167
    %p170 = scmp.ne.s32.totalorder %s155, %s169
    %p171 = scmp.eq.s32.totalorder %s19, 0
    %p172 = por %p170, %p171
    %s173 = ssub.s32 %s13, %s20
    %p174 = scmp.eq.s32.totalorder %s173, 0
    %s176 = sadd.s32 %s175, 1
    %s177 = scalar_select %p174, %s175, %s176
    %p180 = pneg %p174
    %p181 = scmp.eq.s32.totalorder %s13, 1
    %p182 = por %p180, %p181
    %p183 = scmp.ne.s32.totalorder %s175, %s178
    %p184 = scmp.eq.s32.totalorder %s13, 0
    %p185 = por %p183, %p184
    %p186 = scmp.ne.s32.totalorder %s175, %s178
    %p187 = scmp.eq.s32.totalorder %s18, 1
    %p188 = por %p186, %p187
    %p189 = scmp.ne.s32.totalorder %s178, %s179
    %p190 = scmp.eq.s32.totalorder %s18, 0
    %p191 = por %p189, %p190
    %p192 = scmp.ne.s32.totalorder %s178, %s179
    %p193 = scmp.eq.s32.totalorder %s19, 1
    %p194 = por %p192, %p193
    %p196 = scmp.ne.s32.totalorder %s179, %s195
    %p197 = scmp.eq.s32.totalorder %s19, 0
    %p198 = por %p196, %p197
    %p199 = scmp.le.s32.totalorder 1, %s13
    %p200 = scmp.lt.s32.totalorder %s13, 3
    %p201 = pnand %p199, %p200
    %p202 = pneg %p201
    // Predicated region
    $region9: #{_lambda_.28} parent=5 // pred_check
      _
    $region10: #{_lambda_.28} parent=5 // pred_check_branch
      %204 = sbr.rel (%p201) target = $region12
    $region11: #{_lambda_.28} parent=5 // pred_region
      %s205 = ssub.s32 %s13, 1
      // Predicated region
      $region13: #{_lambda_.28} parent=11 // pred_check
        %p206 = pneg %p60
      $region14: #{_lambda_.28} parent=11 // pred_check_branch
        %208 = sbr.rel (%p206) target = $region16
      $region15: #{_lambda_.28} parent=11 // pred_region
        _
      $region16: #{_lambda_.28} parent=11 // pred_fallthru
        _
      // Predicated region
      $region17: #{_lambda_.28} parent=11 // pred_check
        %p209 = pneg %p81
      $region18: #{_lambda_.28} parent=11 // pred_check_branch
        %211 = sbr.rel (%p209) target = $region20
      $region19: #{_lambda_.28} parent=11 // pred_region
        _
      $region20: #{_lambda_.28} parent=11 // pred_fallthru
        _
      // Predicated region
      $region21: #{_lambda_.28} parent=11 // pred_check
        %p212 = pneg %p102
      $region22: #{_lambda_.28} parent=11 // pred_check_branch
        %214 = sbr.rel (%p212) target = $region24
      $region23: #{_lambda_.28} parent=11 // pred_region
        _
      $region24: #{_lambda_.28} parent=11 // pred_fallthru
        _
      // Predicated region
      $region25: #{_lambda_.28} parent=11 // pred_check
        %p215 = pneg %p123
      $region26: #{_lambda_.28} parent=11 // pred_check_branch
        %217 = sbr.rel (%p215) target = $region28
      $region27: #{_lambda_.28} parent=11 // pred_region
        _
      $region28: #{_lambda_.28} parent=11 // pred_fallthru
        _
      // Predicated region
      $region29: #{_lambda_.28} parent=11 // pred_check
        %p218 = pneg %p144
      $region30: #{_lambda_.28} parent=11 // pred_check_branch
        %220 = sbr.rel (%p218) target = $region32
      $region31: #{_lambda_.28} parent=11 // pred_region
        _
      $region32: #{_lambda_.28} parent=11 // pred_fallthru
        _
      // Predicated region
      $region33: #{_lambda_.28} parent=11 // pred_check
        %p221 = pneg %p165
      $region34: #{_lambda_.28} parent=11 // pred_check_branch
        %223 = sbr.rel (%p221) target = $region36
      $region35: #{_lambda_.28} parent=11 // pred_region
        _
      $region36: #{_lambda_.28} parent=11 // pred_fallthru
        _
    $region12: #{_lambda_.28} parent=5 // pred_fallthru
      _
    %p224 = scmp.lt.s32.totalorder %s13, 2
    // Predicated region
    $region37: #{_lambda_.28} parent=5 // pred_check
      %p225 = pneg %p224
    $region38: #{_lambda_.28} parent=5 // pred_check_branch
      %227 = sbr.rel (%p225) target = $region40
    $region39: #{_lambda_.28} parent=5 // pred_region
      // Predicated region
      $region41: #{_lambda_.28} parent=39 // pred_check
        %p228 = pneg %p33
      $region42: #{_lambda_.28} parent=39 // pred_check_branch
        %230 = sbr.rel (%p228) target = $region44
      $region43: #{_lambda_.28} parent=39 // pred_region
        %s231 = smul.u32 8, %s13
        %p232 = scmp.lt.s32.totalorder %s231, 15
        %s233 = scalar_select %p232, %s231, 15
        %s234 = smul.addr %s233, 8
        %s235 = scalar_lea.vmem %s0, %s234
        %s236 = smul.u32 8, %s13
      $region44: #{_lambda_.28} parent=39 // pred_fallthru
        _
    $region40: #{_lambda_.28} parent=5 // pred_fallthru
      _
    %p237 = scmp.le.s32.totalorder 1, %s13
    %p238 = scmp.lt.s32.totalorder %s13, 3
    %p239 = pnand %p237, %p238
    %p240 = pneg %p239
    // Predicated region
    $region45: #{_lambda_.28} parent=5 // pred_check
      _
    $region46: #{_lambda_.28} parent=5 // pred_check_branch
      %242 = sbr.rel (%p239) target = $region48
    $region47: #{_lambda_.28} parent=5 // pred_region
      %s243 = ssub.s32 %s13, 1
      %s244 = smul.u32 8, %s18
      %p245 = scmp.lt.s32.totalorder %s244, 15
      %s246 = scalar_select %p245, %s244, 15
      %s247 = smul.addr %s246, 8
      %s248 = scalar_lea.vmem %s0, %s247
      %p249 = pneg %p39
      %p250 = pneg %p36
      %p251 = pneg %p60
      %p252 = pneg %p57
      %p253 = pneg %p81
      %p254 = pneg %p78
      %p255 = pneg %p102
      %p256 = pneg %p99
      %p257 = pneg %p123
      %p258 = pneg %p120
      %p259 = pneg %p144
      %p260 = pneg %p141
      %p261 = pneg %p165
      %p262 = pneg %p162
      %p263 = pneg %p191
      %p264 = pneg %p188
      %s265 = smul.u32 8, %s18
      %p266 = scmp.lt.s32.totalorder %s265, 15
      %s267 = scalar_select %p266, %s265, 15
      %s268 = smul.addr %s267, 8
      %s269 = scalar_lea.vmem %s7, %s268
      %s270 = smul.u32 8, %s18
      %p271 = scmp.lt.s32.totalorder %s270, 15
      %s272 = scalar_select %p271, %s270, 15
      %s273 = smul.addr %s272, 8
      %s274 = scalar_lea.vmem %s0, %s273
      %s275 = smul.u32 8, %s18
      %s276 = smul.u32 8, %s18
      %p277 = scmp.lt.s32.totalorder %s276, 15
      %s278 = scalar_select %p277, %s276, 15
      %s279 = smul.addr %s278, 8
      %s280 = scalar_lea.vmem %s7, %s279
      %s281 = smul.u32 8, %s18
      %v282 = vld [vmem:[%s274] sm:$0xff]
      %v283 = vld [vmem:[%s274 + $0x8] sm:$0xff]
      %v284 = vld [vmem:[%s274 + $0x10] sm:$0xff]
      %v285 = vld [vmem:[%s274 + $0x18] sm:$0xff]
      %v286 = vld [vmem:[%s274 + $0x20] sm:$0xff]
      %v287 = vld [vmem:[%s274 + $0x28] sm:$0xff]
      %v288 = vld [vmem:[%s274 + $0x30] sm:$0xff]
      %v289 = vld [vmem:[%s274 + $0x38] sm:$0xff]
      %v290 = vld [vmem:[%s1] sm:$0xff]
      %v291 = vld [vmem:[%s1 + $0x8] sm:$0xff]
      %v292 = vld [vmem:[%s1 + $0x10] sm:$0xff]
      %v293 = vld [vmem:[%s1 + $0x18] sm:$0xff]
      %v294 = vld [vmem:[%s2] sm:$0x1]
      %v296 = vperm.slane %v294, 0
      %vm298 = vcmask 261120
      %v300 = vsel %vm298, %v282, 0
      %v303 = vsel %vm298, %v283, 0
      %v306 = vsel %vm298, %v284, 0
      %v309 = vsel %vm298, %v285, 0
      %v312 = vsel %vm298, %v286, 0
      %v315 = vsel %vm298, %v287, 0
      %v318 = vsel %vm298, %v288, 0
      %v321 = vsel %vm298, %v289, 0
      %323 = vmatpush.msra.mxu0 0.0
      %324 = vmatpush.msra.mxu0 0.0
      %325 = vmatpush.msra.mxu0 0.0
      %326 = vmatpush.msra.mxu0 0.0
      %327 = vmatpush.msra.mxu0 0.0
      %328 = vmatpush.msra.mxu0 0.0
      %329 = vmatpush.msra.mxu0 0.0
      %330 = vmatpush.msra.mxu0 0.0
      %331 = vmatpush.msra.mxu0 0.0
      %332 = vmatpush.msra.mxu0 0.0
      %333 = vmatpush.msra.mxu0 0.0
      %334 = vmatpush.msra.mxu0 0.0
      %335 = vmatpush.msra.mxu0 %v293
      %336 = vmatpush.msra.mxu0 %v292
      %337 = vmatpush.msra.mxu0 %v291
      %338 = vmatpush.msra.mxu0 %v290
      %339 = vmatmul.f32.gmra.mxu0 %v300
      %v340 = vpop.f32.mrf.mxu0
      %v341 = vadd.f32 %v296, %v340
      %342 = vmatmul.f32.gmra.mxu0 %v303
      %v343 = vpop.f32.mrf.mxu0
      %v344 = vadd.f32 %v296, %v343
      %345 = vmatmul.f32.gmra.mxu0 %v306
      %v346 = vpop.f32.mrf.mxu0
      %v347 = vadd.f32 %v296, %v346
      %348 = vmatmul.f32.gmra.mxu0 %v309
      %v349 = vpop.f32.mrf.mxu0
      %v350 = vadd.f32 %v296, %v349
      %351 = vmatmul.f32.gmra.mxu0 %v312
      %v352 = vpop.f32.mrf.mxu0
      %v353 = vadd.f32 %v296, %v352
      %354 = vmatmul.f32.gmra.mxu0 %v315
      %v355 = vpop.f32.mrf.mxu0
      %v356 = vadd.f32 %v296, %v355
      %357 = vmatmul.f32.gmra.mxu0 %v318
      %v358 = vpop.f32.mrf.mxu0
      %v359 = vadd.f32 %v296, %v358
      %360 = vmatmul.f32.gmra.mxu0 %v321
      %v361 = vpop.f32.mrf.mxu0
      %v362 = vadd.f32 %v296, %v361
      %363 = vdwg.mxu0
      %v364 = vmax.f32 %v341, 0.0
      %v365 = vmax.f32 %v344, 0.0
      %v366 = vmax.f32 %v347, 0.0
      %v367 = vmax.f32 %v350, 0.0
      %v368 = vmax.f32 %v353, 0.0
      %v369 = vmax.f32 %v356, 0.0
      %v370 = vmax.f32 %v359, 0.0
      %v371 = vmax.f32 %v362, 0.0
      %v372 = vld [vmem:[%s3] sm:$0xff]
      %v373 = vld [vmem:[%s3 + $0x8] sm:$0xff]
      %v374 = vld [vmem:[%s3 + $0x10] sm:$0xff]
      %v375 = vld [vmem:[%s3 + $0x18] sm:$0xff]
      %v376 = vld [vmem:[%s3 + $0x20] sm:$0xff]
      %v377 = vld [vmem:[%s3 + $0x28] sm:$0xff]
      %v378 = vld [vmem:[%s3 + $0x30] sm:$0xff]
      %v379 = vld [vmem:[%s3 + $0x38] sm:$0xff]
      %v380 = vld [vmem:[%s4] sm:$0x1]
      %v382 = vperm.slane %v380, 0
      %vm384 = vcmask 523264
      %v386 = vsel %vm384, %v364, 0
      %v389 = vsel %vm384, %v365, 0
      %v392 = vsel %vm384, %v366, 0
      %v395 = vsel %vm384, %v367, 0
      %v398 = vsel %vm384, %v368, 0
      %v401 = vsel %vm384, %v369, 0
      %v404 = vsel %vm384, %v370, 0
      %v407 = vsel %vm384, %v371, 0
      %409 = vmatpush.msra.mxu0 0.0
      %410 = vmatpush.msra.mxu0 0.0
      %411 = vmatpush.msra.mxu0 0.0
      %412 = vmatpush.msra.mxu0 0.0
      %413 = vmatpush.msra.mxu0 0.0
      %414 = vmatpush.msra.mxu0 0.0
      %415 = vmatpush.msra.mxu0 0.0
      %416 = vmatpush.msra.mxu0 0.0
      %417 = vmatpush.msra.mxu0 %v379
      %418 = vmatpush.msra.mxu0 %v378
      %419 = vmatpush.msra.mxu0 %v377
      %420 = vmatpush.msra.mxu0 %v376
      %421 = vmatpush.msra.mxu0 %v375
      %422 = vmatpush.msra.mxu0 %v374
      %423 = vmatpush.msra.mxu0 %v373
      %424 = vmatpush.msra.mxu0 %v372
      %425 = vmatmul.f32.gmra.mxu0 %v386
      %v426 = vpop.f32.mrf.mxu0
      %v427 = vadd.f32 %v382, %v426
      %428 = vmatmul.f32.gmra.mxu0 %v389
      %v429 = vpop.f32.mrf.mxu0
      %v430 = vadd.f32 %v382, %v429
      %431 = vmatmul.f32.gmra.mxu0 %v392
      %v432 = vpop.f32.mrf.mxu0
      %v433 = vadd.f32 %v382, %v432
      %434 = vmatmul.f32.gmra.mxu0 %v395
      %v435 = vpop.f32.mrf.mxu0
      %v436 = vadd.f32 %v382, %v435
      %437 = vmatmul.f32.gmra.mxu0 %v398
      %v438 = vpop.f32.mrf.mxu0
      %v439 = vadd.f32 %v382, %v438
      %440 = vmatmul.f32.gmra.mxu0 %v401
      %v441 = vpop.f32.mrf.mxu0
      %v442 = vadd.f32 %v382, %v441
      %443 = vmatmul.f32.gmra.mxu0 %v404
      %v444 = vpop.f32.mrf.mxu0
      %v445 = vadd.f32 %v382, %v444
      %446 = vmatmul.f32.gmra.mxu0 %v407
      %v447 = vpop.f32.mrf.mxu0
      %v448 = vadd.f32 %v382, %v447
      %449 = vdwg.mxu0
      %v450 = vadd.f32 %v282, %v427
      %v451 = vadd.f32 %v283, %v430
      %v452 = vadd.f32 %v284, %v433
      %v453 = vadd.f32 %v285, %v436
      %v454 = vadd.f32 %v286, %v439
      %v455 = vadd.f32 %v287, %v442
      %v456 = vadd.f32 %v288, %v445
      %v457 = vadd.f32 %v289, %v448
      %v458 = vsel %vm298, %v450, 0.0
      %459 = vadd.xlane.f32.xlu0 %v458
      %v460 = vpop.xlane.xlu0 %459
      %v461 = vsel %vm298, %v451, 0.0
      %462 = vadd.xlane.f32.xlu0 %v461
      %v463 = vpop.xlane.xlu0 %462
      %v464 = vsel %vm298, %v452, 0.0
      %465 = vadd.xlane.f32.xlu0 %v464
      %v466 = vpop.xlane.xlu0 %465
      %v467 = vsel %vm298, %v453, 0.0
      %468 = vadd.xlane.f32.xlu0 %v467
      %v469 = vpop.xlane.xlu0 %468
      %v470 = vsel %vm298, %v454, 0.0
      %471 = vadd.xlane.f32.xlu0 %v470
      %v472 = vpop.xlane.xlu0 %471
      %v473 = vsel %vm298, %v455, 0.0
      %474 = vadd.xlane.f32.xlu0 %v473
      %v475 = vpop.xlane.xlu0 %474
      %v476 = vsel %vm298, %v456, 0.0
      %477 = vadd.xlane.f32.xlu0 %v476
      %v478 = vpop.xlane.xlu0 %477
      %v479 = vsel %vm298, %v457, 0.0
      %480 = vadd.xlane.f32.xlu0 %v479
      %v481 = vpop.xlane.xlu0 %480
      %v482 = vrcp.pop 32.0
      %v483 = vmul.f32 32.0, %v482
      %v484 = vsub.f32 1.0, %v483
      %v485 = vmul.f32 %v482, %v484
      %v486 = vadd.f32 %v482, %v485
      %vm487 = vweird.f32 %v482
      %v488 = vsel %vm487, %v482, %v486
      %v489 = vmul.f32 %v460, %v488
      %v490 = vmul.f32 %v463, %v488
      %v491 = vmul.f32 %v466, %v488
      %v492 = vmul.f32 %v469, %v488
      %v493 = vmul.f32 %v472, %v488
      %v494 = vmul.f32 %v475, %v488
      %v495 = vmul.f32 %v478, %v488
      %v496 = vmul.f32 %v481, %v488
      %v497 = vsub.f32 %v450, %v489
      %v498 = vsub.f32 %v451, %v490
      %v499 = vsub.f32 %v452, %v491
      %v500 = vsub.f32 %v453, %v492
      %v501 = vsub.f32 %v454, %v493
      %v502 = vsub.f32 %v455, %v494
      %v503 = vsub.f32 %v456, %v495
      %v504 = vsub.f32 %v457, %v496
      %v505 = vmul.f32 %v497, %v497
      %v506 = vmul.f32 %v498, %v498
      %v507 = vmul.f32 %v499, %v499
      %v508 = vmul.f32 %v500, %v500
      %v509 = vmul.f32 %v501, %v501
      %v510 = vmul.f32 %v502, %v502
      %v511 = vmul.f32 %v503, %v503
      %v512 = vmul.f32 %v504, %v504
      %v513 = vsel %vm298, %v505, 0.0
      %514 = vadd.xlane.f32.xlu0 %v513
      %v515 = vpop.xlane.xlu0 %514
      %v516 = vsel %vm298, %v506, 0.0
      %517 = vadd.xlane.f32.xlu0 %v516
      %v518 = vpop.xlane.xlu0 %517
      %v519 = vsel %vm298, %v507, 0.0
      %520 = vadd.xlane.f32.xlu0 %v519
      %v521 = vpop.xlane.xlu0 %520
      %v522 = vsel %vm298, %v508, 0.0
      %523 = vadd.xlane.f32.xlu0 %v522
      %v524 = vpop.xlane.xlu0 %523
      %v525 = vsel %vm298, %v509, 0.0
      %526 = vadd.xlane.f32.xlu0 %v525
      %v527 = vpop.xlane.xlu0 %526
      %v528 = vsel %vm298, %v510, 0.0
      %529 = vadd.xlane.f32.xlu0 %v528
      %v530 = vpop.xlane.xlu0 %529
      %v531 = vsel %vm298, %v511, 0.0
      %532 = vadd.xlane.f32.xlu0 %v531
      %v533 = vpop.xlane.xlu0 %532
      %v534 = vsel %vm298, %v512, 0.0
      %535 = vadd.xlane.f32.xlu0 %v534
      %v536 = vpop.xlane.xlu0 %535
      %v537 = vmul.f32 %v515, %v488
      %v538 = vmul.f32 %v518, %v488
      %v539 = vmul.f32 %v521, %v488
      %v540 = vmul.f32 %v524, %v488
      %v541 = vmul.f32 %v527, %v488
      %v542 = vmul.f32 %v530, %v488
      %v543 = vmul.f32 %v533, %v488
      %v544 = vmul.f32 %v536, %v488
      %v545 = vadd.f32 %v537, 1e-05
      %v546 = vadd.f32 %v538, 1e-05
      %v547 = vadd.f32 %v539, 1e-05
      %v548 = vadd.f32 %v540, 1e-05
      %v549 = vadd.f32 %v541, 1e-05
      %v550 = vadd.f32 %v542, 1e-05
      %v551 = vadd.f32 %v543, 1e-05
      %v552 = vadd.f32 %v544, 1e-05
      %v553 = vrsqrt.pop %v545
      %v554 = vmul.f32 %v553, %v545
      %v555 = vmul.f32 %v554, %v553
      %v556 = vmul.f32 0.5, %v555
      %v557 = vsub.f32 1.5, %v556
      %v558 = vmul.f32 %v553, %v557
      %vm559 = vweird.f32 %v545
      %vm560 = vweird.f32 %v553
      %vm561 = vmor %vm559, %vm560
      %v562 = vsel %vm561, %v553, %v558
      %v563 = vrsqrt.pop %v546
      %v564 = vmul.f32 %v563, %v546
      %v565 = vmul.f32 %v564, %v563
      %v566 = vmul.f32 0.5, %v565
      %v567 = vsub.f32 1.5, %v566
      %v568 = vmul.f32 %v563, %v567
      %vm569 = vweird.f32 %v546
      %vm570 = vweird.f32 %v563
      %vm571 = vmor %vm569, %vm570
      %v572 = vsel %vm571, %v563, %v568
      %v573 = vrsqrt.pop %v547
      %v574 = vmul.f32 %v573, %v547
      %v575 = vmul.f32 %v574, %v573
      %v576 = vmul.f32 0.5, %v575
      %v577 = vsub.f32 1.5, %v576
      %v578 = vmul.f32 %v573, %v577
      %vm579 = vweird.f32 %v547
      %vm580 = vweird.f32 %v573
      %vm581 = vmor %vm579, %vm580
      %v582 = vsel %vm581, %v573, %v578
      %v583 = vrsqrt.pop %v548
      %v584 = vmul.f32 %v583, %v548
      %v585 = vmul.f32 %v584, %v583
      %v586 = vmul.f32 0.5, %v585
      %v587 = vsub.f32 1.5, %v586
      %v588 = vmul.f32 %v583, %v587
      %vm589 = vweird.f32 %v548
      %vm590 = vweird.f32 %v583
      %vm591 = vmor %vm589, %vm590
      %v592 = vsel %vm591, %v583, %v588
      %v593 = vrsqrt.pop %v549
      %v594 = vmul.f32 %v593, %v549
      %v595 = vmul.f32 %v594, %v593
      %v596 = vmul.f32 0.5, %v595
      %v597 = vsub.f32 1.5, %v596
      %v598 = vmul.f32 %v593, %v597
      %vm599 = vweird.f32 %v549
      %vm600 = vweird.f32 %v593
      %vm601 = vmor %vm599, %vm600
      %v602 = vsel %vm601, %v593, %v598
      %v603 = vrsqrt.pop %v550
      %v604 = vmul.f32 %v603, %v550
      %v605 = vmul.f32 %v604, %v603
      %v606 = vmul.f32 0.5, %v605
      %v607 = vsub.f32 1.5, %v606
      %v608 = vmul.f32 %v603, %v607
      %vm609 = vweird.f32 %v550
      %vm610 = vweird.f32 %v603
      %vm611 = vmor %vm609, %vm610
      %v612 = vsel %vm611, %v603, %v608
      %v613 = vrsqrt.pop %v551
      %v614 = vmul.f32 %v613, %v551
      %v615 = vmul.f32 %v614, %v613
      %v616 = vmul.f32 0.5, %v615
      %v617 = vsub.f32 1.5, %v616
      %v618 = vmul.f32 %v613, %v617
      %vm619 = vweird.f32 %v551
      %vm620 = vweird.f32 %v613
      %vm621 = vmor %vm619, %vm620
      %v622 = vsel %vm621, %v613, %v618
      %v623 = vrsqrt.pop %v552
      %v624 = vmul.f32 %v623, %v552
      %v625 = vmul.f32 %v624, %v623
      %v626 = vmul.f32 0.5, %v625
      %v627 = vsub.f32 1.5, %v626
      %v628 = vmul.f32 %v623, %v627
      %vm629 = vweird.f32 %v552
      %vm630 = vweird.f32 %v623
      %vm631 = vmor %vm629, %vm630
      %v632 = vsel %vm631, %v623, %v628
      %v633 = vmul.f32 %v497, %v562
      %v634 = vmul.f32 %v498, %v572
      %v635 = vmul.f32 %v499, %v582
      %v636 = vmul.f32 %v500, %v592
      %v637 = vmul.f32 %v501, %v602
      %v638 = vmul.f32 %v502, %v612
      %v639 = vmul.f32 %v503, %v622
      %v640 = vmul.f32 %v504, %v632
      %v641 = vld [vmem:[%s5] sm:$0x1]
      %v643 = vperm.slane %v641, 0
      %v645 = vmul.f32 %v633, %v643
      %v646 = vmul.f32 %v634, %v643
      %v647 = vmul.f32 %v635, %v643
      %v648 = vmul.f32 %v636, %v643
      %v649 = vmul.f32 %v637, %v643
      %v650 = vmul.f32 %v638, %v643
      %v651 = vmul.f32 %v639, %v643
      %v652 = vmul.f32 %v640, %v643
      %v653 = vld [vmem:[%s6] sm:$0x1]
      %v655 = vperm.slane %v653, 0
      %v657 = vadd.f32 %v645, %v655
      %v658 = vadd.f32 %v646, %v655
      %v659 = vadd.f32 %v647, %v655
      %v660 = vadd.f32 %v648, %v655
      %v661 = vadd.f32 %v649, %v655
      %v662 = vadd.f32 %v650, %v655
      %v663 = vadd.f32 %v651, %v655
      %v664 = vadd.f32 %v652, %v655
      %665 = vst.msk [vmem:[%s280] sm:$0xff] %vm298, %v657
      %666 = vst.msk [vmem:[%s280 + $0x8] sm:$0xff] %vm298, %v658
      %667 = vst.msk [vmem:[%s280 + $0x10] sm:$0xff] %vm298, %v659
      %668 = vst.msk [vmem:[%s280 + $0x18] sm:$0xff] %vm298, %v660
      %669 = vst.msk [vmem:[%s280 + $0x20] sm:$0xff] %vm298, %v661
      %670 = vst.msk [vmem:[%s280 + $0x28] sm:$0xff] %vm298, %v662
      %671 = vst.msk [vmem:[%s280 + $0x30] sm:$0xff] %vm298, %v663
      %672 = vst.msk [vmem:[%s280 + $0x38] sm:$0xff] %vm298, %v664
      %s673 = smul.u32 8, %s18
      %p674 = scmp.lt.s32.totalorder %s673, 15
      %s675 = scalar_select %p674, %s673, 15
      %s676 = smul.addr %s675, 8
      %s677 = scalar_lea.vmem %s7, %s676
      // Predicated region
      $region49: #{_lambda_.28} parent=47 // pred_check
        %p678 = pneg %p188
      $region50: #{_lambda_.28} parent=47 // pred_check_branch
        %680 = sbr.rel (%p678) target = $region52
      $region51: #{_lambda_.28} parent=47 // pred_region
        %s681 = smul.u32 8, %s18
      $region52: #{_lambda_.28} parent=47 // pred_fallthru
        _
    $region48: #{_lambda_.28} parent=5 // pred_fallthru
      _
    %p682 = scmp.le.s32.totalorder 2, %s13
    // Predicated region
    $region53: #{_lambda_.28} parent=5 // pred_check
      %p683 = pneg %p682
    $region54: #{_lambda_.28} parent=5 // pred_check_branch
      %685 = sbr.rel (%p683) target = $region56
    $region55: #{_lambda_.28} parent=5 // pred_region
      %s686 = ssub.s32 %s13, 2
      // Predicated region
      $region57: #{_lambda_.28} parent=55 // pred_check
        %p687 = pneg %p194
      $region58: #{_lambda_.28} parent=55 // pred_check_branch
        %689 = sbr.rel (%p687) target = $region60
      $region59: #{_lambda_.28} parent=55 // pred_region
        %s690 = smul.u32 8, %s19
        %p691 = scmp.lt.s32.totalorder %s690, 15
        %s692 = scalar_select %p691, %s690, 15
        %s693 = smul.addr %s692, 8
        %s694 = scalar_lea.vmem %s7, %s693
      $region60: #{_lambda_.28} parent=55 // pred_fallthru
        _
    $region56: #{_lambda_.28} parent=5 // pred_fallthru
      _
  $region6: #{_lambda_.28} parent=0 // loop_footer
    %s17 = sadd.s32 1, %s13
  $region7: #{_lambda_.28} parent=0 // loop_footer_branch
    %12 = sbr.rel target = $region3
  $region8: #{_lambda_.28} parent=0 // loop_exit
    _

// kernel: _lambda_.27
$region0: #{_lambda_.27}
  #allocation0 [shape = 'u32[]', space=smem, size = 0x4, offset = 0x4, fixed_abs, tag = 'smem constant byte address 0x4 - core index']
  #allocation1 [shape = 'u32[72,128]{1,0:T(1,128)}', space=vmem, size = 0x9000, scoped, tag = 'internal scratch']
  %s0 = inlined_call_operand.vmem [shape: f32[128,32], index: 0, kind: input, shape index: {}]
  %s1 = inlined_call_operand.vmem [shape: f32[32,32], index: 1, kind: input, shape index: {}]
  %s2 = inlined_call_operand.vmem [shape: f32[1,32], index: 2, kind: input, shape index: {}]
  %s3 = inlined_call_operand.vmem [shape: f32[128,32], index: 3, kind: input, shape index: {}]
  %s4 = inlined_call_operand.vmem [shape: f32[1,32], index: 4, kind: input, shape index: {}]
  %s5 = inlined_call_operand.vmem [shape: f32[1,32], index: 5, kind: input, shape index: {}]
  %s6 = inlined_call_operand.vmem [shape: f32[128,32], index: 6, kind: output, shape index: {}]
  %s7 = sld [smem:[#allocation0]]
  $region57: #{_lambda_.27} parent=0
    _
  %s9 = ssub.s32 1, %s7
  %s10 = scalar_select 0, %s9, %s7
  loop: start=0, step=1, limit=4
  $region2: #{_lambda_.27} parent=0 // loop_pre_header
    _
  $region3: #{_lambda_.27} parent=0 // loop_header
    %s12 = sphi 0, %s16
    %p13 = scmp.ge.s32.totalorder %s12, 4
    %s22 = sphi 0, %s24
    %s25 = sphi 0, %s22
    %s26 = sphi 0, %s25
    %s42 = sphi 0, %s26
    %s46 = sphi 0, %s46
    %s48 = sphi 0, %s46
    %s49 = sphi 0, %s48
    %s63 = sphi 0, %s49
    %s67 = sphi 0, %s67
    %s69 = sphi 0, %s67
    %s70 = sphi 0, %s69
    %s84 = sphi 0, %s70
    %s90 = sphi 0, %s92
    %s93 = sphi 0, %s90
    %s94 = sphi 0, %s93
    %s110 = sphi 0, %s94
    %s114 = sphi 0, %s114
    %s116 = sphi 0, %s114
    %s117 = sphi 0, %s116
    %s131 = sphi 0, %s117
    %s135 = sphi 0, %s135
    %s137 = sphi 0, %s135
    %s138 = sphi 0, %s137
    %s152 = sphi 0, %s138
    %s158 = sphi 0, %s160
    %s161 = sphi 0, %s158
    %s162 = sphi 0, %s161
    %s178 = sphi 0, %s162
  $region4: #{_lambda_.27} parent=0 // loop_header_branch
    %15 = sbr.rel (%p13) target = $region8
  $region5: #{_lambda_.27} parent=0 // loop_body
    %s17 = ssub.s32 %s12, 1
    %s18 = ssub.s32 %s12, 2
    %s19 = sadd.s32 %s12, 1
    %s20 = ssub.s32 %s12, %s19
    %p21 = scmp.eq.s32.totalorder %s20, 0
    %s23 = sadd.s32 %s22, 1
    %s24 = scalar_select %p21, %s22, %s23
    %p27 = pneg %p21
    %p28 = scmp.eq.s32.totalorder %s12, 1
    %p29 = por %p27, %p28
    %p30 = scmp.ne.s32.totalorder %s22, %s25
    %p31 = scmp.eq.s32.totalorder %s12, 0
    %p32 = por %p30, %p31
    %p33 = scmp.ne.s32.totalorder %s22, %s25
    %p34 = scmp.eq.s32.totalorder %s17, 1
    %p35 = por %p33, %p34
    %p36 = scmp.ne.s32.totalorder %s25, %s26
    %p37 = scmp.eq.s32.totalorder %s17, 0
    %p38 = por %p36, %p37
    %p39 = scmp.ne.s32.totalorder %s25, %s26
    %p40 = scmp.eq.s32.totalorder %s18, 1
    %p41 = por %p39, %p40
    %p43 = scmp.ne.s32.totalorder %s26, %s42
    %p44 = scmp.eq.s32.totalorder %s18, 0
    %p45 = por %p43, %p44
    %s47 = sadd.s32 %s46, 1
    %p50 = scmp.eq.s32.totalorder %s12, 1
    %p51 = scmp.ne.s32.totalorder %s46, %s48
    %p52 = scmp.eq.s32.totalorder %s12, 0
    %p53 = por %p51, %p52
    %p54 = scmp.ne.s32.totalorder %s46, %s48
    %p55 = scmp.eq.s32.totalorder %s17, 1
    %p56 = por %p54, %p55
    %p57 = scmp.ne.s32.totalorder %s48, %s49
    %p58 = scmp.eq.s32.totalorder %s17, 0
    %p59 = por %p57, %p58
    %p60 = scmp.ne.s32.totalorder %s48, %s49
    %p61 = scmp.eq.s32.totalorder %s18, 1
    %p62 = por %p60, %p61
    %p64 = scmp.ne.s32.totalorder %s49, %s63
    %p65 = scmp.eq.s32.totalorder %s18, 0
    %p66 = por %p64, %p65
    %s68 = sadd.s32 %s67, 1
    %p71 = scmp.eq.s32.totalorder %s12, 1
    %p72 = scmp.ne.s32.totalorder %s67, %s69
    %p73 = scmp.eq.s32.totalorder %s12, 0
    %p74 = por %p72, %p73
    %p75 = scmp.ne.s32.totalorder %s67, %s69
    %p76 = scmp.eq.s32.totalorder %s17, 1
    %p77 = por %p75, %p76
    %p78 = scmp.ne.s32.totalorder %s69, %s70
    %p79 = scmp.eq.s32.totalorder %s17, 0
    %p80 = por %p78, %p79
    %p81 = scmp.ne.s32.totalorder %s69, %s70
    %p82 = scmp.eq.s32.totalorder %s18, 1
    %p83 = por %p81, %p82
    %p85 = scmp.ne.s32.totalorder %s70, %s84
    %p86 = scmp.eq.s32.totalorder %s18, 0
    %p87 = por %p85, %p86
    %s88 = ssub.s32 %s12, %s19
    %p89 = scmp.eq.s32.totalorder %s88, 0
    %s91 = sadd.s32 %s90, 1
    %s92 = scalar_select %p89, %s90, %s91
    %p95 = pneg %p89
    %p96 = scmp.eq.s32.totalorder %s12, 1
    %p97 = por %p95, %p96
    %p98 = scmp.ne.s32.totalorder %s90, %s93
    %p99 = scmp.eq.s32.totalorder %s12, 0
    %p100 = por %p98, %p99
    %p101 = scmp.ne.s32.totalorder %s90, %s93
    %p102 = scmp.eq.s32.totalorder %s17, 1
    %p103 = por %p101, %p102
    %p104 = scmp.ne.s32.totalorder %s93, %s94
    %p105 = scmp.eq.s32.totalorder %s17, 0
    %p106 = por %p104, %p105
    %p107 = scmp.ne.s32.totalorder %s93, %s94
    %p108 = scmp.eq.s32.totalorder %s18, 1
    %p109 = por %p107, %p108
    %p111 = scmp.ne.s32.totalorder %s94, %s110
    %p112 = scmp.eq.s32.totalorder %s18, 0
    %p113 = por %p111, %p112
    %s115 = sadd.s32 %s114, 1
    %p118 = scmp.eq.s32.totalorder %s12, 1
    %p119 = scmp.ne.s32.totalorder %s114, %s116
    %p120 = scmp.eq.s32.totalorder %s12, 0
    %p121 = por %p119, %p120
    %p122 = scmp.ne.s32.totalorder %s114, %s116
    %p123 = scmp.eq.s32.totalorder %s17, 1
    %p124 = por %p122, %p123
    %p125 = scmp.ne.s32.totalorder %s116, %s117
    %p126 = scmp.eq.s32.totalorder %s17, 0
    %p127 = por %p125, %p126
    %p128 = scmp.ne.s32.totalorder %s116, %s117
    %p129 = scmp.eq.s32.totalorder %s18, 1
    %p130 = por %p128, %p129
    %p132 = scmp.ne.s32.totalorder %s117, %s131
    %p133 = scmp.eq.s32.totalorder %s18, 0
    %p134 = por %p132, %p133
    %s136 = sadd.s32 %s135, 1
    %p139 = scmp.eq.s32.totalorder %s12, 1
    %p140 = scmp.ne.s32.totalorder %s135, %s137
    %p141 = scmp.eq.s32.totalorder %s12, 0
    %p142 = por %p140, %p141
    %p143 = scmp.ne.s32.totalorder %s135, %s137
    %p144 = scmp.eq.s32.totalorder %s17, 1
    %p145 = por %p143, %p144
    %p146 = scmp.ne.s32.totalorder %s137, %s138
    %p147 = scmp.eq.s32.totalorder %s17, 0
    %p148 = por %p146, %p147
    %p149 = scmp.ne.s32.totalorder %s137, %s138
    %p150 = scmp.eq.s32.totalorder %s18, 1
    %p151 = por %p149, %p150
    %p153 = scmp.ne.s32.totalorder %s138, %s152
    %p154 = scmp.eq.s32.totalorder %s18, 0
    %p155 = por %p153, %p154
    %s156 = ssub.s32 %s12, %s19
    %p157 = scmp.eq.s32.totalorder %s156, 0
    %s159 = sadd.s32 %s158, 1
    %s160 = scalar_select %p157, %s158, %s159
    %p163 = pneg %p157
    %p164 = scmp.eq.s32.totalorder %s12, 1
    %p165 = por %p163, %p164
    %p166 = scmp.ne.s32.totalorder %s158, %s161
    %p167 = scmp.eq.s32.totalorder %s12, 0
    %p168 = por %p166, %p167
    %p169 = scmp.ne.s32.totalorder %s158, %s161
    %p170 = scmp.eq.s32.totalorder %s17, 1
    %p171 = por %p169, %p170
    %p172 = scmp.ne.s32.totalorder %s161, %s162
    %p173 = scmp.eq.s32.totalorder %s17, 0
    %p174 = por %p172, %p173
    %p175 = scmp.ne.s32.totalorder %s161, %s162
    %p176 = scmp.eq.s32.totalorder %s18, 1
    %p177 = por %p175, %p176
    %p179 = scmp.ne.s32.totalorder %s162, %s178
    %p180 = scmp.eq.s32.totalorder %s18, 0
    %p181 = por %p179, %p180
    %p182 = scmp.le.s32.totalorder 1, %s12
    %p183 = scmp.lt.s32.totalorder %s12, 3
    %p184 = pnand %p182, %p183
    %p185 = pneg %p184
    // Predicated region
    $region9: #{_lambda_.27} parent=5 // pred_check
      _
    $region10: #{_lambda_.27} parent=5 // pred_check_branch
      %187 = sbr.rel (%p184) target = $region12
    $region11: #{_lambda_.27} parent=5 // pred_region
      %s188 = ssub.s32 %s12, 1
      // Predicated region
      $region13: #{_lambda_.27} parent=11 // pred_check
        %p189 = pneg %p59
      $region14: #{_lambda_.27} parent=11 // pred_check_branch
        %191 = sbr.rel (%p189) target = $region16
      $region15: #{_lambda_.27} parent=11 // pred_region
        _
      $region16: #{_lambda_.27} parent=11 // pred_fallthru
        _
      // Predicated region
      $region17: #{_lambda_.27} parent=11 // pred_check
        %p192 = pneg %p80
      $region18: #{_lambda_.27} parent=11 // pred_check_branch
        %194 = sbr.rel (%p192) target = $region20
      $region19: #{_lambda_.27} parent=11 // pred_region
        _
      $region20: #{_lambda_.27} parent=11 // pred_fallthru
        _
      // Predicated region
      $region21: #{_lambda_.27} parent=11 // pred_check
        %p195 = pneg %p127
      $region22: #{_lambda_.27} parent=11 // pred_check_branch
        %197 = sbr.rel (%p195) target = $region24
      $region23: #{_lambda_.27} parent=11 // pred_region
        _
      $region24: #{_lambda_.27} parent=11 // pred_fallthru
        _
      // Predicated region
      $region25: #{_lambda_.27} parent=11 // pred_check
        %p198 = pneg %p148
      $region26: #{_lambda_.27} parent=11 // pred_check_branch
        %200 = sbr.rel (%p198) target = $region28
      $region27: #{_lambda_.27} parent=11 // pred_region
        _
      $region28: #{_lambda_.27} parent=11 // pred_fallthru
        _
    $region12: #{_lambda_.27} parent=5 // pred_fallthru
      _
    %p201 = scmp.lt.s32.totalorder %s12, 2
    // Predicated region
    $region29: #{_lambda_.27} parent=5 // pred_check
      %p202 = pneg %p201
    $region30: #{_lambda_.27} parent=5 // pred_check_branch
      %204 = sbr.rel (%p202) target = $region32
    $region31: #{_lambda_.27} parent=5 // pred_region
      // Predicated region
      $region33: #{_lambda_.27} parent=31 // pred_check
        %p205 = pneg %p32
      $region34: #{_lambda_.27} parent=31 // pred_check_branch
        %207 = sbr.rel (%p205) target = $region36
      $region35: #{_lambda_.27} parent=31 // pred_region
        %s208 = smul.u32 8, %s12
        %p209 = scmp.lt.s32.totalorder %s208, 15
        %s210 = scalar_select %p209, %s208, 15
        %s211 = smul.addr %s210, 8
        %s212 = scalar_lea.vmem %s0, %s211
        %s213 = smul.u32 8, %s12
      $region36: #{_lambda_.27} parent=31 // pred_fallthru
        _
      // Predicated region
      $region37: #{_lambda_.27} parent=31 // pred_check
        %p214 = pneg %p100
      $region38: #{_lambda_.27} parent=31 // pred_check_branch
        %216 = sbr.rel (%p214) target = $region40
      $region39: #{_lambda_.27} parent=31 // pred_region
        %s217 = smul.u32 8, %s12
        %p218 = scmp.lt.s32.totalorder %s217, 15
        %s219 = scalar_select %p218, %s217, 15
        %s220 = smul.addr %s219, 8
        %s221 = scalar_lea.vmem %s3, %s220
        %s222 = smul.u32 8, %s12
      $region40: #{_lambda_.27} parent=31 // pred_fallthru
        _
    $region32: #{_lambda_.27} parent=5 // pred_fallthru
      _
    %p223 = scmp.le.s32.totalorder 1, %s12
    %p224 = scmp.lt.s32.totalorder %s12, 3
    %p225 = pnand %p223, %p224
    %p226 = pneg %p225
    // Predicated region
    $region41: #{_lambda_.27} parent=5 // pred_check
      _
    $region42: #{_lambda_.27} parent=5 // pred_check_branch
      %228 = sbr.rel (%p225) target = $region44
    $region43: #{_lambda_.27} parent=5 // pred_region
      %s229 = ssub.s32 %s12, 1
      %s230 = smul.u32 8, %s17
      %p231 = scmp.lt.s32.totalorder %s230, 15
      %s232 = scalar_select %p231, %s230, 15
      %s233 = smul.addr %s232, 8
      %s234 = scalar_lea.vmem %s0, %s233
      %p235 = pneg %p38
      %p236 = pneg %p35
      %p237 = pneg %p59
      %p238 = pneg %p56
      %p239 = pneg %p80
      %p240 = pneg %p77
      %s241 = smul.u32 8, %s17
      %p242 = scmp.lt.s32.totalorder %s241, 15
      %s243 = scalar_select %p242, %s241, 15
      %s244 = smul.addr %s243, 8
      %s245 = scalar_lea.vmem %s3, %s244
      %p246 = pneg %p106
      %p247 = pneg %p103
      %p248 = pneg %p127
      %p249 = pneg %p124
      %p250 = pneg %p148
      %p251 = pneg %p145
      %p252 = pneg %p174
      %p253 = pneg %p171
      %s254 = smul.u32 8, %s17
      %p255 = scmp.lt.s32.totalorder %s254, 15
      %s256 = scalar_select %p255, %s254, 15
      %s257 = smul.addr %s256, 8
      %s258 = scalar_lea.vmem %s6, %s257
      %s259 = smul.u32 8, %s17
      %p260 = scmp.lt.s32.totalorder %s259, 15
      %s261 = scalar_select %p260, %s259, 15
      %s262 = smul.addr %s261, 8
      %s263 = scalar_lea.vmem %s0, %s262
      %s264 = smul.u32 8, %s17
      %s265 = smul.u32 8, %s17
      %p266 = scmp.lt.s32.totalorder %s265, 15
      %s267 = scalar_select %p266, %s265, 15
      %s268 = smul.addr %s267, 8
      %s269 = scalar_lea.vmem %s3, %s268
      %s270 = smul.u32 8, %s17
      %s271 = smul.u32 8, %s17
      %p272 = scmp.lt.s32.totalorder %s271, 15
      %s273 = scalar_select %p272, %s271, 15
      %s274 = smul.addr %s273, 8
      %s275 = scalar_lea.vmem %s6, %s274
      %s276 = smul.u32 8, %s17
      %v277 = vld [vmem:[%s263] sm:$0xff]
      %v278 = vld [vmem:[%s263 + $0x8] sm:$0xff]
      %v279 = vld [vmem:[%s263 + $0x10] sm:$0xff]
      %v280 = vld [vmem:[%s263 + $0x18] sm:$0xff]
      %v281 = vld [vmem:[%s263 + $0x20] sm:$0xff]
      %v282 = vld [vmem:[%s263 + $0x28] sm:$0xff]
      %v283 = vld [vmem:[%s263 + $0x30] sm:$0xff]
      %v284 = vld [vmem:[%s263 + $0x38] sm:$0xff]
      %v285 = vld [vmem:[%s1] sm:$0xff]
      %v286 = vld [vmem:[%s1 + $0x8] sm:$0xff]
      %v287 = vld [vmem:[%s1 + $0x10] sm:$0xff]
      %v288 = vld [vmem:[%s1 + $0x18] sm:$0xff]
      %v289 = vld [vmem:[%s2] sm:$0x1]
      %v291 = vperm.slane %v289, 0
      %vm293 = vcmask 261120
      %v295 = vsel %vm293, %v277, 0
      %v298 = vsel %vm293, %v278, 0
      %v301 = vsel %vm293, %v279, 0
      %v304 = vsel %vm293, %v280, 0
      %v307 = vsel %vm293, %v281, 0
      %v310 = vsel %vm293, %v282, 0
      %v313 = vsel %vm293, %v283, 0
      %v316 = vsel %vm293, %v284, 0
      %318 = vmatpush.msra.mxu0 0.0
      %319 = vmatpush.msra.mxu0 0.0
      %320 = vmatpush.msra.mxu0 0.0
      %321 = vmatpush.msra.mxu0 0.0
      %322 = vmatpush.msra.mxu0 0.0
      %323 = vmatpush.msra.mxu0 0.0
      %324 = vmatpush.msra.mxu0 0.0
      %325 = vmatpush.msra.mxu0 0.0
      %326 = vmatpush.msra.mxu0 0.0
      %327 = vmatpush.msra.mxu0 0.0
      %328 = vmatpush.msra.mxu0 0.0
      %329 = vmatpush.msra.mxu0 0.0
      %330 = vmatpush.msra.mxu0 %v288
      %331 = vmatpush.msra.mxu0 %v287
      %332 = vmatpush.msra.mxu0 %v286
      %333 = vmatpush.msra.mxu0 %v285
      %334 = vmatmul.f32.gmra.mxu0 %v295
      %v335 = vpop.f32.mrf.mxu0
      %v336 = vadd.f32 %v291, %v335
      %337 = vmatmul.f32.gmra.mxu0 %v298
      %v338 = vpop.f32.mrf.mxu0
      %v339 = vadd.f32 %v291, %v338
      %340 = vmatmul.f32.gmra.mxu0 %v301
      %v341 = vpop.f32.mrf.mxu0
      %v342 = vadd.f32 %v291, %v341
      %343 = vmatmul.f32.gmra.mxu0 %v304
      %v344 = vpop.f32.mrf.mxu0
      %v345 = vadd.f32 %v291, %v344
      %346 = vmatmul.f32.gmra.mxu0 %v307
      %v347 = vpop.f32.mrf.mxu0
      %v348 = vadd.f32 %v291, %v347
      %349 = vmatmul.f32.gmra.mxu0 %v310
      %v350 = vpop.f32.mrf.mxu0
      %v351 = vadd.f32 %v291, %v350
      %352 = vmatmul.f32.gmra.mxu0 %v313
      %v353 = vpop.f32.mrf.mxu0
      %v354 = vadd.f32 %v291, %v353
      %355 = vmatmul.f32.gmra.mxu0 %v316
      %v356 = vpop.f32.mrf.mxu0
      %v357 = vadd.f32 %v291, %v356
      %358 = vdwg.mxu0
      %v359 = vld [vmem:[%s269] sm:$0xff]
      %v360 = vld [vmem:[%s269 + $0x8] sm:$0xff]
      %v361 = vld [vmem:[%s269 + $0x10] sm:$0xff]
      %v362 = vld [vmem:[%s269 + $0x18] sm:$0xff]
      %v363 = vld [vmem:[%s269 + $0x20] sm:$0xff]
      %v364 = vld [vmem:[%s269 + $0x28] sm:$0xff]
      %v365 = vld [vmem:[%s269 + $0x30] sm:$0xff]
      %v366 = vld [vmem:[%s269 + $0x38] sm:$0xff]
      %v367 = vadd.f32 %v359, %v336
      %v368 = vadd.f32 %v360, %v339
      %v369 = vadd.f32 %v361, %v342
      %v370 = vadd.f32 %v362, %v345
      %v371 = vadd.f32 %v363, %v348
      %v372 = vadd.f32 %v364, %v351
      %v373 = vadd.f32 %v365, %v354
      %v374 = vadd.f32 %v366, %v357
      %v375 = vsel %vm293, %v367, 0.0
      %376 = vadd.xlane.f32.xlu0 %v375
      %v377 = vpop.xlane.xlu0 %376
      %v378 = vsel %vm293, %v368, 0.0
      %379 = vadd.xlane.f32.xlu0 %v378
      %v380 = vpop.xlane.xlu0 %379
      %v381 = vsel %vm293, %v369, 0.0
      %382 = vadd.xlane.f32.xlu0 %v381
      %v383 = vpop.xlane.xlu0 %382
      %v384 = vsel %vm293, %v370, 0.0
      %385 = vadd.xlane.f32.xlu0 %v384
      %v386 = vpop.xlane.xlu0 %385
      %v387 = vsel %vm293, %v371, 0.0
      %388 = vadd.xlane.f32.xlu0 %v387
      %v389 = vpop.xlane.xlu0 %388
      %v390 = vsel %vm293, %v372, 0.0
      %391 = vadd.xlane.f32.xlu0 %v390
      %v392 = vpop.xlane.xlu0 %391
      %v393 = vsel %vm293, %v373, 0.0
      %394 = vadd.xlane.f32.xlu0 %v393
      %v395 = vpop.xlane.xlu0 %394
      %v396 = vsel %vm293, %v374, 0.0
      %397 = vadd.xlane.f32.xlu0 %v396
      %v398 = vpop.xlane.xlu0 %397
      %v399 = vrcp.pop 32.0
      %v400 = vmul.f32 32.0, %v399
      %v401 = vsub.f32 1.0, %v400
      %v402 = vmul.f32 %v399, %v401
      %v403 = vadd.f32 %v399, %v402
      %vm404 = vweird.f32 %v399
      %v405 = vsel %vm404, %v399, %v403
      %v406 = vmul.f32 %v377, %v405
      %v407 = vmul.f32 %v380, %v405
      %v408 = vmul.f32 %v383, %v405
      %v409 = vmul.f32 %v386, %v405
      %v410 = vmul.f32 %v389, %v405
      %v411 = vmul.f32 %v392, %v405
      %v412 = vmul.f32 %v395, %v405
      %v413 = vmul.f32 %v398, %v405
      %v414 = vsub.f32 %v367, %v406
      %v415 = vsub.f32 %v368, %v407
      %v416 = vsub.f32 %v369, %v408
      %v417 = vsub.f32 %v370, %v409
      %v418 = vsub.f32 %v371, %v410
      %v419 = vsub.f32 %v372, %v411
      %v420 = vsub.f32 %v373, %v412
      %v421 = vsub.f32 %v374, %v413
      %v422 = vmul.f32 %v414, %v414
      %v423 = vmul.f32 %v415, %v415
      %v424 = vmul.f32 %v416, %v416
      %v425 = vmul.f32 %v417, %v417
      %v426 = vmul.f32 %v418, %v418
      %v427 = vmul.f32 %v419, %v419
      %v428 = vmul.f32 %v420, %v420
      %v429 = vmul.f32 %v421, %v421
      %v430 = vsel %vm293, %v422, 0.0
      %431 = vadd.xlane.f32.xlu0 %v430
      %v432 = vpop.xlane.xlu0 %431
      %v433 = vsel %vm293, %v423, 0.0
      %434 = vadd.xlane.f32.xlu0 %v433
      %v435 = vpop.xlane.xlu0 %434
      %v436 = vsel %vm293, %v424, 0.0
      %437 = vadd.xlane.f32.xlu0 %v436
      %v438 = vpop.xlane.xlu0 %437
      %v439 = vsel %vm293, %v425, 0.0
      %440 = vadd.xlane.f32.xlu0 %v439
      %v441 = vpop.xlane.xlu0 %440
      %v442 = vsel %vm293, %v426, 0.0
      %443 = vadd.xlane.f32.xlu0 %v442
      %v444 = vpop.xlane.xlu0 %443
      %v445 = vsel %vm293, %v427, 0.0
      %446 = vadd.xlane.f32.xlu0 %v445
      %v447 = vpop.xlane.xlu0 %446
      %v448 = vsel %vm293, %v428, 0.0
      %449 = vadd.xlane.f32.xlu0 %v448
      %v450 = vpop.xlane.xlu0 %449
      %v451 = vsel %vm293, %v429, 0.0
      %452 = vadd.xlane.f32.xlu0 %v451
      %v453 = vpop.xlane.xlu0 %452
      %v454 = vmul.f32 %v432, %v405
      %v455 = vmul.f32 %v435, %v405
      %v456 = vmul.f32 %v438, %v405
      %v457 = vmul.f32 %v441, %v405
      %v458 = vmul.f32 %v444, %v405
      %v459 = vmul.f32 %v447, %v405
      %v460 = vmul.f32 %v450, %v405
      %v461 = vmul.f32 %v453, %v405
      %v462 = vadd.f32 %v454, 1e-05
      %v463 = vadd.f32 %v455, 1e-05
      %v464 = vadd.f32 %v456, 1e-05
      %v465 = vadd.f32 %v457, 1e-05
      %v466 = vadd.f32 %v458, 1e-05
      %v467 = vadd.f32 %v459, 1e-05
      %v468 = vadd.f32 %v460, 1e-05
      %v469 = vadd.f32 %v461, 1e-05
      %v470 = vrsqrt.pop %v462
      %v471 = vmul.f32 %v470, %v462
      %v472 = vmul.f32 %v471, %v470
      %v473 = vmul.f32 0.5, %v472
      %v474 = vsub.f32 1.5, %v473
      %v475 = vmul.f32 %v470, %v474
      %vm476 = vweird.f32 %v462
      %vm477 = vweird.f32 %v470
      %vm478 = vmor %vm476, %vm477
      %v479 = vsel %vm478, %v470, %v475
      %v480 = vrsqrt.pop %v463
      %v481 = vmul.f32 %v480, %v463
      %v482 = vmul.f32 %v481, %v480
      %v483 = vmul.f32 0.5, %v482
      %v484 = vsub.f32 1.5, %v483
      %v485 = vmul.f32 %v480, %v484
      %vm486 = vweird.f32 %v463
      %vm487 = vweird.f32 %v480
      %vm488 = vmor %vm486, %vm487
      %v489 = vsel %vm488, %v480, %v485
      %v490 = vrsqrt.pop %v464
      %v491 = vmul.f32 %v490, %v464
      %v492 = vmul.f32 %v491, %v490
      %v493 = vmul.f32 0.5, %v492
      %v494 = vsub.f32 1.5, %v493
      %v495 = vmul.f32 %v490, %v494
      %vm496 = vweird.f32 %v464
      %vm497 = vweird.f32 %v490
      %vm498 = vmor %vm496, %vm497
      %v499 = vsel %vm498, %v490, %v495
      %v500 = vrsqrt.pop %v465
      %v501 = vmul.f32 %v500, %v465
      %v502 = vmul.f32 %v501, %v500
      %v503 = vmul.f32 0.5, %v502
      %v504 = vsub.f32 1.5, %v503
      %v505 = vmul.f32 %v500, %v504
      %vm506 = vweird.f32 %v465
      %vm507 = vweird.f32 %v500
      %vm508 = vmor %vm506, %vm507
      %v509 = vsel %vm508, %v500, %v505
      %v510 = vrsqrt.pop %v466
      %v511 = vmul.f32 %v510, %v466
      %v512 = vmul.f32 %v511, %v510
      %v513 = vmul.f32 0.5, %v512
      %v514 = vsub.f32 1.5, %v513
      %v515 = vmul.f32 %v510, %v514
      %vm516 = vweird.f32 %v466
      %vm517 = vweird.f32 %v510
      %vm518 = vmor %vm516, %vm517
      %v519 = vsel %vm518, %v510, %v515
      %v520 = vrsqrt.pop %v467
      %v521 = vmul.f32 %v520, %v467
      %v522 = vmul.f32 %v521, %v520
      %v523 = vmul.f32 0.5, %v522
      %v524 = vsub.f32 1.5, %v523
      %v525 = vmul.f32 %v520, %v524
      %vm526 = vweird.f32 %v467
      %vm527 = vweird.f32 %v520
      %vm528 = vmor %vm526, %vm527
      %v529 = vsel %vm528, %v520, %v525
      %v530 = vrsqrt.pop %v468
      %v531 = vmul.f32 %v530, %v468
      %v532 = vmul.f32 %v531, %v530
      %v533 = vmul.f32 0.5, %v532
      %v534 = vsub.f32 1.5, %v533
      %v535 = vmul.f32 %v530, %v534
      %vm536 = vweird.f32 %v468
      %vm537 = vweird.f32 %v530
      %vm538 = vmor %vm536, %vm537
      %v539 = vsel %vm538, %v530, %v535
      %v540 = vrsqrt.pop %v469
      %v541 = vmul.f32 %v540, %v469
      %v542 = vmul.f32 %v541, %v540
      %v543 = vmul.f32 0.5, %v542
      %v544 = vsub.f32 1.5, %v543
      %v545 = vmul.f32 %v540, %v544
      %vm546 = vweird.f32 %v469
      %vm547 = vweird.f32 %v540
      %vm548 = vmor %vm546, %vm547
      %v549 = vsel %vm548, %v540, %v545
      %v550 = vmul.f32 %v414, %v479
      %v551 = vmul.f32 %v415, %v489
      %v552 = vmul.f32 %v416, %v499
      %v553 = vmul.f32 %v417, %v509
      %v554 = vmul.f32 %v418, %v519
      %v555 = vmul.f32 %v419, %v529
      %v556 = vmul.f32 %v420, %v539
      %v557 = vmul.f32 %v421, %v549
      %v558 = vld [vmem:[%s4] sm:$0x1]
      %v560 = vperm.slane %v558, 0
      %v562 = vmul.f32 %v550, %v560
      %v563 = vmul.f32 %v551, %v560
      %v564 = vmul.f32 %v552, %v560
      %v565 = vmul.f32 %v553, %v560
      %v566 = vmul.f32 %v554, %v560
      %v567 = vmul.f32 %v555, %v560
      %v568 = vmul.f32 %v556, %v560
      %v569 = vmul.f32 %v557, %v560
      %v570 = vld [vmem:[%s5] sm:$0x1]
      %v572 = vperm.slane %v570, 0
      %v574 = vadd.f32 %v562, %v572
      %v575 = vadd.f32 %v563, %v572
      %v576 = vadd.f32 %v564, %v572
      %v577 = vadd.f32 %v565, %v572
      %v578 = vadd.f32 %v566, %v572
      %v579 = vadd.f32 %v567, %v572
      %v580 = vadd.f32 %v568, %v572
      %v581 = vadd.f32 %v569, %v572
      %582 = vst.msk [vmem:[%s275] sm:$0xff] %vm293, %v574
      %583 = vst.msk [vmem:[%s275 + $0x8] sm:$0xff] %vm293, %v575
      %584 = vst.msk [vmem:[%s275 + $0x10] sm:$0xff] %vm293, %v576
      %585 = vst.msk [vmem:[%s275 + $0x18] sm:$0xff] %vm293, %v577
      %586 = vst.msk [vmem:[%s275 + $0x20] sm:$0xff] %vm293, %v578
      %587 = vst.msk [vmem:[%s275 + $0x28] sm:$0xff] %vm293, %v579
      %588 = vst.msk [vmem:[%s275 + $0x30] sm:$0xff] %vm293, %v580
      %589 = vst.msk [vmem:[%s275 + $0x38] sm:$0xff] %vm293, %v581
      %s590 = smul.u32 8, %s17
      %p591 = scmp.lt.s32.totalorder %s590, 15
      %s592 = scalar_select %p591, %s590, 15
      %s593 = smul.addr %s592, 8
      %s594 = scalar_lea.vmem %s6, %s593
      // Predicated region
      $region45: #{_lambda_.27} parent=43 // pred_check
        %p595 = pneg %p171
      $region46: #{_lambda_.27} parent=43 // pred_check_branch
        %597 = sbr.rel (%p595) target = $region48
      $region47: #{_lambda_.27} parent=43 // pred_region
        %s598 = smul.u32 8, %s17
      $region48: #{_lambda_.27} parent=43 // pred_fallthru
        _
    $region44: #{_lambda_.27} parent=5 // pred_fallthru
      _
    %p599 = scmp.le.s32.totalorder 2, %s12
    // Predicated region
    $region49: #{_lambda_.27} parent=5 // pred_check
      %p600 = pneg %p599
    $region50: #{_lambda_.27} parent=5 // pred_check_branch
      %602 = sbr.rel (%p600) target = $region52
    $region51: #{_lambda_.27} parent=5 // pred_region
      %s603 = ssub.s32 %s12, 2
      // Predicated region
      $region53: #{_lambda_.27} parent=51 // pred_check
        %p604 = pneg %p177
      $region54: #{_lambda_.27} parent=51 // pred_check_branch
        %606 = sbr.rel (%p604) target = $region56
      $region55: #{_lambda_.27} parent=51 // pred_region
        %s607 = smul.u32 8, %s18
        %p608 = scmp.lt.s32.totalorder %s607, 15
        %s609 = scalar_select %p608, %s607, 15
        %s610 = smul.addr %s609, 8
        %s611 = scalar_lea.vmem %s6, %s610
      $region56: #{_lambda_.27} parent=51 // pred_fallthru
        _
    $region52: #{_lambda_.27} parent=5 // pred_fallthru
      _
  $region6: #{_lambda_.27} parent=0 // loop_footer
    %s16 = sadd.s32 1, %s12
  $region7: #{_lambda_.27} parent=0 // loop_footer_branch
    %11 = sbr.rel target = $region3
  $region8: #{_lambda_.27} parent=0 // loop_exit
    _

// kernel: _lambda_.38
$region0: #{_lambda_.38}
  #allocation0 [shape = 'u32[]', space=smem, size = 0x4, offset = 0x4, fixed_abs, tag = 'smem constant byte address 0x4 - core index']
  #allocation1 [shape = 'u32[72,128]{1,0:T(1,128)}', space=vmem, size = 0x9000, scoped, tag = 'internal scratch']
  %s0 = inlined_call_operand.vmem [shape: f32[128,32], index: 0, kind: input, shape index: {}]
  %s1 = inlined_call_operand.vmem [shape: f32[32,96], index: 1, kind: input, shape index: {}]
  %s2 = inlined_call_operand.vmem [shape: f32[1,96], index: 2, kind: input, shape index: {}]
  %s3 = inlined_call_operand.vmem [shape: f32[128,96], index: 3, kind: output, shape index: {}]
  %s4 = sld [smem:[#allocation0]]
  $region45: #{_lambda_.38} parent=0
    _
  %s6 = ssub.s32 1, %s4
  %s7 = scalar_select 0, %s6, %s4
  loop: start=0, step=1, limit=4
  $region2: #{_lambda_.38} parent=0 // loop_pre_header
    _
  $region3: #{_lambda_.38} parent=0 // loop_header
    %s9 = sphi 0, %s13
    %p10 = scmp.ge.s32.totalorder %s9, 4
    %s19 = sphi 0, %s21
    %s22 = sphi 0, %s19
    %s23 = sphi 0, %s22
    %s39 = sphi 0, %s23
    %s43 = sphi 0, %s43
    %s45 = sphi 0, %s43
    %s46 = sphi 0, %s45
    %s60 = sphi 0, %s46
    %s64 = sphi 0, %s64
    %s66 = sphi 0, %s64
    %s67 = sphi 0, %s66
    %s81 = sphi 0, %s67
    %s87 = sphi 0, %s89
    %s90 = sphi 0, %s87
    %s91 = sphi 0, %s90
    %s107 = sphi 0, %s91
  $region4: #{_lambda_.38} parent=0 // loop_header_branch
    %12 = sbr.rel (%p10) target = $region8
  $region5: #{_lambda_.38} parent=0 // loop_body
    %s14 = ssub.s32 %s9, 1
    %s15 = ssub.s32 %s9, 2
    %s16 = sadd.s32 %s9, 1
    %s17 = ssub.s32 %s9, %s16
    %p18 = scmp.eq.s32.totalorder %s17, 0
    %s20 = sadd.s32 %s19, 1
    %s21 = scalar_select %p18, %s19, %s20
    %p24 = pneg %p18
    %p25 = scmp.eq.s32.totalorder %s9, 1
    %p26 = por %p24, %p25
    %p27 = scmp.ne.s32.totalorder %s19, %s22
    %p28 = scmp.eq.s32.totalorder %s9, 0
    %p29 = por %p27, %p28
    %p30 = scmp.ne.s32.totalorder %s19, %s22
    %p31 = scmp.eq.s32.totalorder %s14, 1
    %p32 = por %p30, %p31
    %p33 = scmp.ne.s32.totalorder %s22, %s23
    %p34 = scmp.eq.s32.totalorder %s14, 0
    %p35 = por %p33, %p34
    %p36 = scmp.ne.s32.totalorder %s22, %s23
    %p37 = scmp.eq.s32.totalorder %s15, 1
    %p38 = por %p36, %p37
    %p40 = scmp.ne.s32.totalorder %s23, %s39
    %p41 = scmp.eq.s32.totalorder %s15, 0
    %p42 = por %p40, %p41
    %s44 = sadd.s32 %s43, 1
    %p47 = scmp.eq.s32.totalorder %s9, 1
    %p48 = scmp.ne.s32.totalorder %s43, %s45
    %p49 = scmp.eq.s32.totalorder %s9, 0
    %p50 = por %p48, %p49
    %p51 = scmp.ne.s32.totalorder %s43, %s45
    %p52 = scmp.eq.s32.totalorder %s14, 1
    %p53 = por %p51, %p52
    %p54 = scmp.ne.s32.totalorder %s45, %s46
    %p55 = scmp.eq.s32.totalorder %s14, 0
    %p56 = por %p54, %p55
    %p57 = scmp.ne.s32.totalorder %s45, %s46
    %p58 = scmp.eq.s32.totalorder %s15, 1
    %p59 = por %p57, %p58
    %p61 = scmp.ne.s32.totalorder %s46, %s60
    %p62 = scmp.eq.s32.totalorder %s15, 0
    %p63 = por %p61, %p62
    %s65 = sadd.s32 %s64, 1
    %p68 = scmp.eq.s32.totalorder %s9, 1
    %p69 = scmp.ne.s32.totalorder %s64, %s66
    %p70 = scmp.eq.s32.totalorder %s9, 0
    %p71 = por %p69, %p70
    %p72 = scmp.ne.s32.totalorder %s64, %s66
    %p73 = scmp.eq.s32.totalorder %s14, 1
    %p74 = por %p72, %p73
    %p75 = scmp.ne.s32.totalorder %s66, %s67
    %p76 = scmp.eq.s32.totalorder %s14, 0
    %p77 = por %p75, %p76
    %p78 = scmp.ne.s32.totalorder %s66, %s67
    %p79 = scmp.eq.s32.totalorder %s15, 1
    %p80 = por %p78, %p79
    %p82 = scmp.ne.s32.totalorder %s67, %s81
    %p83 = scmp.eq.s32.totalorder %s15, 0
    %p84 = por %p82, %p83
    %s85 = ssub.s32 %s9, %s16
    %p86 = scmp.eq.s32.totalorder %s85, 0
    %s88 = sadd.s32 %s87, 1
    %s89 = scalar_select %p86, %s87, %s88
    %p92 = pneg %p86
    %p93 = scmp.eq.s32.totalorder %s9, 1
    %p94 = por %p92, %p93
    %p95 = scmp.ne.s32.totalorder %s87, %s90
    %p96 = scmp.eq.s32.totalorder %s9, 0
    %p97 = por %p95, %p96
    %p98 = scmp.ne.s32.totalorder %s87, %s90
    %p99 = scmp.eq.s32.totalorder %s14, 1
    %p100 = por %p98, %p99
    %p101 = scmp.ne.s32.totalorder %s90, %s91
    %p102 = scmp.eq.s32.totalorder %s14, 0
    %p103 = por %p101, %p102
    %p104 = scmp.ne.s32.totalorder %s90, %s91
    %p105 = scmp.eq.s32.totalorder %s15, 1
    %p106 = por %p104, %p105
    %p108 = scmp.ne.s32.totalorder %s91, %s107
    %p109 = scmp.eq.s32.totalorder %s15, 0
    %p110 = por %p108, %p109
    %p111 = scmp.le.s32.totalorder 1, %s9
    %p112 = scmp.lt.s32.totalorder %s9, 3
    %p113 = pnand %p111, %p112
    %p114 = pneg %p113
    // Predicated region
    $region9: #{_lambda_.38} parent=5 // pred_check
      _
    $region10: #{_lambda_.38} parent=5 // pred_check_branch
      %116 = sbr.rel (%p113) target = $region12
    $region11: #{_lambda_.38} parent=5 // pred_region
      %s117 = ssub.s32 %s9, 1
      // Predicated region
      $region13: #{_lambda_.38} parent=11 // pred_check
        %p118 = pneg %p56
      $region14: #{_lambda_.38} parent=11 // pred_check_branch
        %120 = sbr.rel (%p118) target = $region16
      $region15: #{_lambda_.38} parent=11 // pred_region
        _
      $region16: #{_lambda_.38} parent=11 // pred_fallthru
        _
      // Predicated region
      $region17: #{_lambda_.38} parent=11 // pred_check
        %p121 = pneg %p77
      $region18: #{_lambda_.38} parent=11 // pred_check_branch
        %123 = sbr.rel (%p121) target = $region20
      $region19: #{_lambda_.38} parent=11 // pred_region
        _
      $region20: #{_lambda_.38} parent=11 // pred_fallthru
        _
    $region12: #{_lambda_.38} parent=5 // pred_fallthru
      _
    %p124 = scmp.lt.s32.totalorder %s9, 2
    // Predicated region
    $region21: #{_lambda_.38} parent=5 // pred_check
      %p125 = pneg %p124
    $region22: #{_lambda_.38} parent=5 // pred_check_branch
      %127 = sbr.rel (%p125) target = $region24
    $region23: #{_lambda_.38} parent=5 // pred_region
      // Predicated region
      $region25: #{_lambda_.38} parent=23 // pred_check
        %p128 = pneg %p29
      $region26: #{_lambda_.38} parent=23 // pred_check_branch
        %130 = sbr.rel (%p128) target = $region28
      $region27: #{_lambda_.38} parent=23 // pred_region
        %s131 = smul.u32 8, %s9
        %p132 = scmp.lt.s32.totalorder %s131, 15
        %s133 = scalar_select %p132, %s131, 15
        %s134 = smul.addr %s133, 8
        %s135 = scalar_lea.vmem %s0, %s134
        %s136 = smul.u32 8, %s9
      $region28: #{_lambda_.38} parent=23 // pred_fallthru
        _
    $region24: #{_lambda_.38} parent=5 // pred_fallthru
      _
    %p137 = scmp.le.s32.totalorder 1, %s9
    %p138 = scmp.lt.s32.totalorder %s9, 3
    %p139 = pnand %p137, %p138
    %p140 = pneg %p139
    // Predicated region
    $region29: #{_lambda_.38} parent=5 // pred_check
      _
    $region30: #{_lambda_.38} parent=5 // pred_check_branch
      %142 = sbr.rel (%p139) target = $region32
    $region31: #{_lambda_.38} parent=5 // pred_region
      %s143 = ssub.s32 %s9, 1
      %s144 = smul.u32 8, %s14
      %p145 = scmp.lt.s32.totalorder %s144, 15
      %s146 = scalar_select %p145, %s144, 15
      %s147 = smul.addr %s146, 8
      %s148 = scalar_lea.vmem %s0, %s147
      %p149 = pneg %p35
      %p150 = pneg %p32
      %p151 = pneg %p56
      %p152 = pneg %p53
      %p153 = pneg %p77
      %p154 = pneg %p74
      %p155 = pneg %p103
      %p156 = pneg %p100
      %s157 = smul.u32 8, %s14
      %p158 = scmp.lt.s32.totalorder %s157, 15
      %s159 = scalar_select %p158, %s157, 15
      %s160 = smul.addr %s159, 8
      %s161 = scalar_lea.vmem %s3, %s160
      %s162 = smul.u32 8, %s14
      %p163 = scmp.lt.s32.totalorder %s162, 15
      %s164 = scalar_select %p163, %s162, 15
      %s165 = smul.addr %s164, 8
      %s166 = scalar_lea.vmem %s0, %s165
      %s167 = smul.u32 8, %s14
      %s168 = smul.u32 8, %s14
      %p169 = scmp.lt.s32.totalorder %s168, 15
      %s170 = scalar_select %p169, %s168, 15
      %s171 = smul.addr %s170, 8
      %s172 = scalar_lea.vmem %s3, %s171
      %s173 = smul.u32 8, %s14
      %v174 = vld [vmem:[%s166] sm:$0xff]
      %v175 = vld [vmem:[%s166 + $0x8] sm:$0xff]
      %v176 = vld [vmem:[%s166 + $0x10] sm:$0xff]
      %v177 = vld [vmem:[%s166 + $0x18] sm:$0xff]
      %v178 = vld [vmem:[%s166 + $0x20] sm:$0xff]
      %v179 = vld [vmem:[%s166 + $0x28] sm:$0xff]
      %v180 = vld [vmem:[%s166 + $0x30] sm:$0xff]
      %v181 = vld [vmem:[%s166 + $0x38] sm:$0xff]
      %v182 = vld [vmem:[%s1] sm:$0xff]
      %v183 = vld [vmem:[%s1 + $0x8] sm:$0xff]
      %v184 = vld [vmem:[%s1 + $0x10] sm:$0xff]
      %v185 = vld [vmem:[%s1 + $0x18] sm:$0xff]
      %v186 = vld [vmem:[%s2] sm:$0x1]
      %v188 = vperm.slane %v186, 0
      %vm190 = vcmask 261120
      %v192 = vsel %vm190, %v174, 0
      %v195 = vsel %vm190, %v175, 0
      %v198 = vsel %vm190, %v176, 0
      %v201 = vsel %vm190, %v177, 0
      %v204 = vsel %vm190, %v178, 0
      %v207 = vsel %vm190, %v179, 0
      %v210 = vsel %vm190, %v180, 0
      %v213 = vsel %vm190, %v181, 0
      %215 = vmatpush.msra.mxu0 0.0
      %216 = vmatpush.msra.mxu0 0.0
      %217 = vmatpush.msra.mxu0 0.0
      %218 = vmatpush.msra.mxu0 0.0
      %219 = vmatpush.msra.mxu0 0.0
      %220 = vmatpush.msra.mxu0 0.0
      %221 = vmatpush.msra.mxu0 0.0
      %222 = vmatpush.msra.mxu0 0.0
      %223 = vmatpush.msra.mxu0 0.0
      %224 = vmatpush.msra.mxu0 0.0
      %225 = vmatpush.msra.mxu0 0.0
      %226 = vmatpush.msra.mxu0 0.0
      %227 = vmatpush.msra.mxu0 %v185
      %228 = vmatpush.msra.mxu0 %v184
      %229 = vmatpush.msra.mxu0 %v183
      %230 = vmatpush.msra.mxu0 %v182
      %231 = vmatmul.f32.gmra.mxu0 %v192
      %v232 = vpop.f32.mrf.mxu0
      %v233 = vadd.f32 %v188, %v232
      %234 = vmatmul.f32.gmra.mxu0 %v195
      %v235 = vpop.f32.mrf.mxu0
      %v236 = vadd.f32 %v188, %v235
      %237 = vmatmul.f32.gmra.mxu0 %v198
      %v238 = vpop.f32.mrf.mxu0
      %v239 = vadd.f32 %v188, %v238
      %240 = vmatmul.f32.gmra.mxu0 %v201
      %v241 = vpop.f32.mrf.mxu0
      %v242 = vadd.f32 %v188, %v241
      %243 = vmatmul.f32.gmra.mxu0 %v204
      %v244 = vpop.f32.mrf.mxu0
      %v245 = vadd.f32 %v188, %v244
      %246 = vmatmul.f32.gmra.mxu0 %v207
      %v247 = vpop.f32.mrf.mxu0
      %v248 = vadd.f32 %v188, %v247
      %249 = vmatmul.f32.gmra.mxu0 %v210
      %v250 = vpop.f32.mrf.mxu0
      %v251 = vadd.f32 %v188, %v250
      %252 = vmatmul.f32.gmra.mxu0 %v213
      %v253 = vpop.f32.mrf.mxu0
      %v254 = vadd.f32 %v188, %v253
      %255 = vdwg.mxu0
      %vm256 = vcmask 785408
      %257 = vst.msk [vmem:[%s172] sm:$0xff] %vm256, %v233
      %258 = vst.msk [vmem:[%s172 + $0x8] sm:$0xff] %vm256, %v236
      %259 = vst.msk [vmem:[%s172 + $0x10] sm:$0xff] %vm256, %v239
      %260 = vst.msk [vmem:[%s172 + $0x18] sm:$0xff] %vm256, %v242
      %261 = vst.msk [vmem:[%s172 + $0x20] sm:$0xff] %vm256, %v245
      %262 = vst.msk [vmem:[%s172 + $0x28] sm:$0xff] %vm256, %v248
      %263 = vst.msk [vmem:[%s172 + $0x30] sm:$0xff] %vm256, %v251
      %264 = vst.msk [vmem:[%s172 + $0x38] sm:$0xff] %vm256, %v254
      %s265 = smul.u32 8, %s14
      %p266 = scmp.lt.s32.totalorder %s265, 15
      %s267 = scalar_select %p266, %s265, 15
      %s268 = smul.addr %s267, 8
      %s269 = scalar_lea.vmem %s3, %s268
      // Predicated region
      $region33: #{_lambda_.38} parent=31 // pred_check
        %p270 = pneg %p100
      $region34: #{_lambda_.38} parent=31 // pred_check_branch
        %272 = sbr.rel (%p270) target = $region36
      $region35: #{_lambda_.38} parent=31 // pred_region
        %s273 = smul.u32 8, %s14
      $region36: #{_lambda_.38} parent=31 // pred_fallthru
        _
    $region32: #{_lambda_.38} parent=5 // pred_fallthru
      _
    %p274 = scmp.le.s32.totalorder 2, %s9
    // Predicated region
    $region37: #{_lambda_.38} parent=5 // pred_check
      %p275 = pneg %p274
    $region38: #{_lambda_.38} parent=5 // pred_check_branch
      %277 = sbr.rel (%p275) target = $region40
    $region39: #{_lambda_.38} parent=5 // pred_region
      %s278 = ssub.s32 %s9, 2
      // Predicated region
      $region41: #{_lambda_.38} parent=39 // pred_check
        %p279 = pneg %p106
      $region42: #{_lambda_.38} parent=39 // pred_check_branch
        %281 = sbr.rel (%p279) target = $region44
      $region43: #{_lambda_.38} parent=39 // pred_region
        %s282 = smul.u32 8, %s15
        %p283 = scmp.lt.s32.totalorder %s282, 15
        %s284 = scalar_select %p283, %s282, 15
        %s285 = smul.addr %s284, 8
        %s286 = scalar_lea.vmem %s3, %s285
      $region44: #{_lambda_.38} parent=39 // pred_fallthru
        _
    $region40: #{_lambda_.38} parent=5 // pred_fallthru
      _
  $region6: #{_lambda_.38} parent=0 // loop_footer
    %s13 = sadd.s32 1, %s9
  $region7: #{_lambda_.38} parent=0 // loop_footer_branch
    %8 = sbr.rel target = $region3
  $region8: #{_lambda_.38} parent=0 // loop_exit
    _

// kernel: _lambda_.43
$region0: #{_lambda_.43}
  #allocation0 [shape = 'u32[]', space=smem, size = 0x4, offset = 0x4, fixed_abs, tag = 'smem constant byte address 0x4 - core index']
  #allocation1 [shape = 'u32[72,128]{1,0:T(1,128)}', space=vmem, size = 0x9000, scoped, tag = 'internal scratch']
  #allocation2 [shape = 'f32[1,1]{1,0:T(1,128)S(1)}', space=vmem, size = 0x200, scoped, tag = 'scoped memory for _lambda_.43']
  %s0 = inlined_call_operand.vmem [shape: f32[128,32], index: 0, kind: input, shape index: {}]
  %s1 = inlined_call_operand.vmem [shape: f32[1,32], index: 1, kind: input, shape index: {}]
  %s2 = inlined_call_operand.<no memory space> [shape: f32[1,1], index: 2, kind: input, shape index: {}]
  %s3 = inlined_call_operand.vmem [shape: f32[128,1], index: 3, kind: output, shape index: {}]
  %s4 = sld [smem:[#allocation0]]
  $region45: #{_lambda_.43} parent=0
    _
  %s6 = ssub.s32 1, %s4
  %s7 = scalar_select 0, %s6, %s4
  %v8 = vstv %s2
  %9 = vst [vmem:[#allocation2] sm:$0x1] %v8
  loop: start=0, step=1, limit=4
  $region2: #{_lambda_.43} parent=0 // loop_pre_header
    _
  $region3: #{_lambda_.43} parent=0 // loop_header
    %s11 = sphi 0, %s15
    %p12 = scmp.ge.s32.totalorder %s11, 4
    %s21 = sphi 0, %s23
    %s24 = sphi 0, %s21
    %s25 = sphi 0, %s24
    %s41 = sphi 0, %s25
    %s45 = sphi 0, %s45
    %s47 = sphi 0, %s45
    %s48 = sphi 0, %s47
    %s62 = sphi 0, %s48
    %s66 = sphi 0, %s66
    %s68 = sphi 0, %s66
    %s69 = sphi 0, %s68
    %s83 = sphi 0, %s69
    %s89 = sphi 0, %s91
    %s92 = sphi 0, %s89
    %s93 = sphi 0, %s92
    %s109 = sphi 0, %s93
  $region4: #{_lambda_.43} parent=0 // loop_header_branch
    %14 = sbr.rel (%p12) target = $region8
  $region5: #{_lambda_.43} parent=0 // loop_body
    %s16 = ssub.s32 %s11, 1
    %s17 = ssub.s32 %s11, 2
    %s18 = sadd.s32 %s11, 1
    %s19 = ssub.s32 %s11, %s18
    %p20 = scmp.eq.s32.totalorder %s19, 0
    %s22 = sadd.s32 %s21, 1
    %s23 = scalar_select %p20, %s21, %s22
    %p26 = pneg %p20
    %p27 = scmp.eq.s32.totalorder %s11, 1
    %p28 = por %p26, %p27
    %p29 = scmp.ne.s32.totalorder %s21, %s24
    %p30 = scmp.eq.s32.totalorder %s11, 0
    %p31 = por %p29, %p30
    %p32 = scmp.ne.s32.totalorder %s21, %s24
    %p33 = scmp.eq.s32.totalorder %s16, 1
    %p34 = por %p32, %p33
    %p35 = scmp.ne.s32.totalorder %s24, %s25
    %p36 = scmp.eq.s32.totalorder %s16, 0
    %p37 = por %p35, %p36
    %p38 = scmp.ne.s32.totalorder %s24, %s25
    %p39 = scmp.eq.s32.totalorder %s17, 1
    %p40 = por %p38, %p39
    %p42 = scmp.ne.s32.totalorder %s25, %s41
    %p43 = scmp.eq.s32.totalorder %s17, 0
    %p44 = por %p42, %p43
    %s46 = sadd.s32 %s45, 1
    %p49 = scmp.eq.s32.totalorder %s11, 1
    %p50 = scmp.ne.s32.totalorder %s45, %s47
    %p51 = scmp.eq.s32.totalorder %s11, 0
    %p52 = por %p50, %p51
    %p53 = scmp.ne.s32.totalorder %s45, %s47
    %p54 = scmp.eq.s32.totalorder %s16, 1
    %p55 = por %p53, %p54
    %p56 = scmp.ne.s32.totalorder %s47, %s48
    %p57 = scmp.eq.s32.totalorder %s16, 0
    %p58 = por %p56, %p57
    %p59 = scmp.ne.s32.totalorder %s47, %s48
    %p60 = scmp.eq.s32.totalorder %s17, 1
    %p61 = por %p59, %p60
    %p63 = scmp.ne.s32.totalorder %s48, %s62
    %p64 = scmp.eq.s32.totalorder %s17, 0
    %p65 = por %p63, %p64
    %s67 = sadd.s32 %s66, 1
    %p70 = scmp.eq.s32.totalorder %s11, 1
    %p71 = scmp.ne.s32.totalorder %s66, %s68
    %p72 = scmp.eq.s32.totalorder %s11, 0
    %p73 = por %p71, %p72
    %p74 = scmp.ne.s32.totalorder %s66, %s68
    %p75 = scmp.eq.s32.totalorder %s16, 1
    %p76 = por %p74, %p75
    %p77 = scmp.ne.s32.totalorder %s68, %s69
    %p78 = scmp.eq.s32.totalorder %s16, 0
    %p79 = por %p77, %p78
    %p80 = scmp.ne.s32.totalorder %s68, %s69
    %p81 = scmp.eq.s32.totalorder %s17, 1
    %p82 = por %p80, %p81
    %p84 = scmp.ne.s32.totalorder %s69, %s83
    %p85 = scmp.eq.s32.totalorder %s17, 0
    %p86 = por %p84, %p85
    %s87 = ssub.s32 %s11, %s18
    %p88 = scmp.eq.s32.totalorder %s87, 0
    %s90 = sadd.s32 %s89, 1
    %s91 = scalar_select %p88, %s89, %s90
    %p94 = pneg %p88
    %p95 = scmp.eq.s32.totalorder %s11, 1
    %p96 = por %p94, %p95
    %p97 = scmp.ne.s32.totalorder %s89, %s92
    %p98 = scmp.eq.s32.totalorder %s11, 0
    %p99 = por %p97, %p98
    %p100 = scmp.ne.s32.totalorder %s89, %s92
    %p101 = scmp.eq.s32.totalorder %s16, 1
    %p102 = por %p100, %p101
    %p103 = scmp.ne.s32.totalorder %s92, %s93
    %p104 = scmp.eq.s32.totalorder %s16, 0
    %p105 = por %p103, %p104
    %p106 = scmp.ne.s32.totalorder %s92, %s93
    %p107 = scmp.eq.s32.totalorder %s17, 1
    %p108 = por %p106, %p107
    %p110 = scmp.ne.s32.totalorder %s93, %s109
    %p111 = scmp.eq.s32.totalorder %s17, 0
    %p112 = por %p110, %p111
    %p113 = scmp.le.s32.totalorder 1, %s11
    %p114 = scmp.lt.s32.totalorder %s11, 3
    %p115 = pnand %p113, %p114
    %p116 = pneg %p115
    // Predicated region
    $region9: #{_lambda_.43} parent=5 // pred_check
      _
    $region10: #{_lambda_.43} parent=5 // pred_check_branch
      %118 = sbr.rel (%p115) target = $region12
    $region11: #{_lambda_.43} parent=5 // pred_region
      %s119 = ssub.s32 %s11, 1
      // Predicated region
      $region13: #{_lambda_.43} parent=11 // pred_check
        %p120 = pneg %p58
      $region14: #{_lambda_.43} parent=11 // pred_check_branch
        %122 = sbr.rel (%p120) target = $region16
      $region15: #{_lambda_.43} parent=11 // pred_region
        _
      $region16: #{_lambda_.43} parent=11 // pred_fallthru
        _
      // Predicated region
      $region17: #{_lambda_.43} parent=11 // pred_check
        %p123 = pneg %p79
      $region18: #{_lambda_.43} parent=11 // pred_check_branch
        %125 = sbr.rel (%p123) target = $region20
      $region19: #{_lambda_.43} parent=11 // pred_region
        _
      $region20: #{_lambda_.43} parent=11 // pred_fallthru
        _
    $region12: #{_lambda_.43} parent=5 // pred_fallthru
      _
    %p126 = scmp.lt.s32.totalorder %s11, 2
    // Predicated region
    $region21: #{_lambda_.43} parent=5 // pred_check
      %p127 = pneg %p126
    $region22: #{_lambda_.43} parent=5 // pred_check_branch
      %129 = sbr.rel (%p127) target = $region24
    $region23: #{_lambda_.43} parent=5 // pred_region
      // Predicated region
      $region25: #{_lambda_.43} parent=23 // pred_check
        %p130 = pneg %p31
      $region26: #{_lambda_.43} parent=23 // pred_check_branch
        %132 = sbr.rel (%p130) target = $region28
      $region27: #{_lambda_.43} parent=23 // pred_region
        %s133 = smul.u32 8, %s11
        %p134 = scmp.lt.s32.totalorder %s133, 15
        %s135 = scalar_select %p134, %s133, 15
        %s136 = smul.addr %s135, 8
        %s137 = scalar_lea.vmem %s0, %s136
        %s138 = smul.u32 8, %s11
      $region28: #{_lambda_.43} parent=23 // pred_fallthru
        _
    $region24: #{_lambda_.43} parent=5 // pred_fallthru
      _
    %p139 = scmp.le.s32.totalorder 1, %s11
    %p140 = scmp.lt.s32.totalorder %s11, 3
    %p141 = pnand %p139, %p140
    %p142 = pneg %p141
    // Predicated region
    $region29: #{_lambda_.43} parent=5 // pred_check
      _
    $region30: #{_lambda_.43} parent=5 // pred_check_branch
      %144 = sbr.rel (%p141) target = $region32
    $region31: #{_lambda_.43} parent=5 // pred_region
      %s145 = ssub.s32 %s11, 1
      %s146 = smul.u32 8, %s16
      %p147 = scmp.lt.s32.totalorder %s146, 15
      %s148 = scalar_select %p147, %s146, 15
      %s149 = smul.addr %s148, 8
      %s150 = scalar_lea.vmem %s0, %s149
      %p151 = pneg %p37
      %p152 = pneg %p34
      %p153 = pneg %p58
      %p154 = pneg %p55
      %p155 = pneg %p79
      %p156 = pneg %p76
      %p157 = pneg %p105
      %p158 = pneg %p102
      %s159 = smul.u32 8, %s16
      %p160 = scmp.lt.s32.totalorder %s159, 15
      %s161 = scalar_select %p160, %s159, 15
      %s162 = smul.addr %s161, 8
      %s163 = scalar_lea.vmem %s3, %s162
      %s164 = smul.u32 8, %s16
      %p165 = scmp.lt.s32.totalorder %s164, 15
      %s166 = scalar_select %p165, %s164, 15
      %s167 = smul.addr %s166, 8
      %s168 = scalar_lea.vmem %s0, %s167
      %s169 = smul.u32 8, %s16
      %s170 = smul.u32 8, %s16
      %p171 = scmp.lt.s32.totalorder %s170, 15
      %s172 = scalar_select %p171, %s170, 15
      %s173 = smul.addr %s172, 8
      %s174 = scalar_lea.vmem %s3, %s173
      %s175 = smul.u32 8, %s16
      %v176 = vld [vmem:[%s168] sm:$0xff]
      %v177 = vld [vmem:[%s168 + $0x8] sm:$0xff]
      %v178 = vld [vmem:[%s168 + $0x10] sm:$0xff]
      %v179 = vld [vmem:[%s168 + $0x18] sm:$0xff]
      %v180 = vld [vmem:[%s168 + $0x20] sm:$0xff]
      %v181 = vld [vmem:[%s168 + $0x28] sm:$0xff]
      %v182 = vld [vmem:[%s168 + $0x30] sm:$0xff]
      %v183 = vld [vmem:[%s168 + $0x38] sm:$0xff]
      %v184 = vld [vmem:[%s1] sm:$0x1]
      %v186 = vperm.slane %v184, 0
      %v188 = vmul.f32 %v176, %v186
      %v189 = vmul.f32 %v177, %v186
      %v190 = vmul.f32 %v178, %v186
      %v191 = vmul.f32 %v179, %v186
      %v192 = vmul.f32 %v180, %v186
      %v193 = vmul.f32 %v181, %v186
      %v194 = vmul.f32 %v182, %v186
      %v195 = vmul.f32 %v183, %v186
      %vm196 = vcmask 261120
      %v197 = vsel %vm196, %v188, 0.0
      %198 = vadd.xlane.f32.xlu0 %v197
      %v199 = vpop.xlane.xlu0 %198
      %v200 = vsel %vm196, %v189, 0.0
      %201 = vadd.xlane.f32.xlu0 %v200
      %v202 = vpop.xlane.xlu0 %201
      %v203 = vsel %vm196, %v190, 0.0
      %204 = vadd.xlane.f32.xlu0 %v203
      %v205 = vpop.xlane.xlu0 %204
      %v206 = vsel %vm196, %v191, 0.0
      %207 = vadd.xlane.f32.xlu0 %v206
      %v208 = vpop.xlane.xlu0 %207
      %v209 = vsel %vm196, %v192, 0.0
      %210 = vadd.xlane.f32.xlu0 %v209
      %v211 = vpop.xlane.xlu0 %210
      %v212 = vsel %vm196, %v193, 0.0
      %213 = vadd.xlane.f32.xlu0 %v212
      %v214 = vpop.xlane.xlu0 %213
      %v215 = vsel %vm196, %v194, 0.0
      %216 = vadd.xlane.f32.xlu0 %v215
      %v217 = vpop.xlane.xlu0 %216
      %v218 = vsel %vm196, %v195, 0.0
      %219 = vadd.xlane.f32.xlu0 %v218
      %v220 = vpop.xlane.xlu0 %219
      %v221 = vld [vmem:[#allocation2] sm:$0x1]
      %v223 = vperm.slane %v221, 0
      %v225 = vadd.f32 %v199, %v223
      %v226 = vadd.f32 %v202, %v223
      %v227 = vadd.f32 %v205, %v223
      %v228 = vadd.f32 %v208, %v223
      %v229 = vadd.f32 %v211, %v223
      %v230 = vadd.f32 %v214, %v223
      %v231 = vadd.f32 %v217, %v223
      %v232 = vadd.f32 %v220, %v223
      %v233 = vxor.u32 %v225, 2147483648
      %v234 = vxor.u32 %v226, 2147483648
      %v235 = vxor.u32 %v227, 2147483648
      %v236 = vxor.u32 %v228, 2147483648
      %v237 = vxor.u32 %v229, 2147483648
      %v238 = vxor.u32 %v230, 2147483648
      %v239 = vxor.u32 %v231, 2147483648
      %v240 = vxor.u32 %v232, 2147483648
      %v241 = vmul.f32 %v233, 1.442695
      %v242 = vpow.pop %v241
      %v243 = vmul.f32 %v234, 1.442695
      %v244 = vpow.pop %v243
      %v245 = vmul.f32 %v235, 1.442695
      %v246 = vpow.pop %v245
      %v247 = vmul.f32 %v236, 1.442695
      %v248 = vpow.pop %v247
      %v249 = vmul.f32 %v237, 1.442695
      %v250 = vpow.pop %v249
      %v251 = vmul.f32 %v238, 1.442695
      %v252 = vpow.pop %v251
      %v253 = vmul.f32 %v239, 1.442695
      %v254 = vpow.pop %v253
      %v255 = vmul.f32 %v240, 1.442695
      %v256 = vpow.pop %v255
      %v257 = vadd.f32 %v242, 1.0
      %v258 = vadd.f32 %v244, 1.0
      %v259 = vadd.f32 %v246, 1.0
      %v260 = vadd.f32 %v248, 1.0
      %v261 = vadd.f32 %v250, 1.0
      %v262 = vadd.f32 %v252, 1.0
      %v263 = vadd.f32 %v254, 1.0
      %v264 = vadd.f32 %v256, 1.0
      %v265 = vrcp.pop %v257
      %v266 = vmul.f32 %v257, %v265
      %v267 = vsub.f32 1.0, %v266
      %v268 = vmul.f32 %v265, %v267
      %v269 = vadd.f32 %v265, %v268
      %vm270 = vweird.f32 %v257
      %vm271 = vweird.f32 %v265
      %vm272 = vmor %vm270, %vm271
      %v273 = vsel %vm272, %v265, %v269
      %v274 = vand.u32 2147483647, %v257
      %vm275 = vcmp.eq.f32.partialorder %v274, 8.507059e+37
      %v276 = vand.u32 %v257, 2147483648
      %v277 = vor.u32 1.1754944e-38, %v276
      %v278 = vsel %vm275, %v277, %v273
      %v279 = vmul.f32 1.0, %v278
      %v280 = vrcp.pop %v258
      %v281 = vmul.f32 %v258, %v280
      %v282 = vsub.f32 1.0, %v281
      %v283 = vmul.f32 %v280, %v282
      %v284 = vadd.f32 %v280, %v283
      %vm285 = vweird.f32 %v258
      %vm286 = vweird.f32 %v280
      %vm287 = vmor %vm285, %vm286
      %v288 = vsel %vm287, %v280, %v284
      %v289 = vand.u32 2147483647, %v258
      %vm290 = vcmp.eq.f32.partialorder %v289, 8.507059e+37
      %v291 = vand.u32 %v258, 2147483648
      %v292 = vor.u32 1.1754944e-38, %v291
      %v293 = vsel %vm290, %v292, %v288
      %v294 = vmul.f32 1.0, %v293
      %v295 = vrcp.pop %v259
      %v296 = vmul.f32 %v259, %v295
      %v297 = vsub.f32 1.0, %v296
      %v298 = vmul.f32 %v295, %v297
      %v299 = vadd.f32 %v295, %v298
      %vm300 = vweird.f32 %v259
      %vm301 = vweird.f32 %v295
      %vm302 = vmor %vm300, %vm301
      %v303 = vsel %vm302, %v295, %v299
      %v304 = vand.u32 2147483647, %v259
      %vm305 = vcmp.eq.f32.partialorder %v304, 8.507059e+37
      %v306 = vand.u32 %v259, 2147483648
      %v307 = vor.u32 1.1754944e-38, %v306
      %v308 = vsel %vm305, %v307, %v303
      %v309 = vmul.f32 1.0, %v308
      %v310 = vrcp.pop %v260
      %v311 = vmul.f32 %v260, %v310
      %v312 = vsub.f32 1.0, %v311
      %v313 = vmul.f32 %v310, %v312
      %v314 = vadd.f32 %v310, %v313
      %vm315 = vweird.f32 %v260
      %vm316 = vweird.f32 %v310
      %vm317 = vmor %vm315, %vm316
      %v318 = vsel %vm317, %v310, %v314
      %v319 = vand.u32 2147483647, %v260
      %vm320 = vcmp.eq.f32.partialorder %v319, 8.507059e+37
      %v321 = vand.u32 %v260, 2147483648
      %v322 = vor.u32 1.1754944e-38, %v321
      %v323 = vsel %vm320, %v322, %v318
      %v324 = vmul.f32 1.0, %v323
      %v325 = vrcp.pop %v261
      %v326 = vmul.f32 %v261, %v325
      %v327 = vsub.f32 1.0, %v326
      %v328 = vmul.f32 %v325, %v327
      %v329 = vadd.f32 %v325, %v328
      %vm330 = vweird.f32 %v261
      %vm331 = vweird.f32 %v325
      %vm332 = vmor %vm330, %vm331
      %v333 = vsel %vm332, %v325, %v329
      %v334 = vand.u32 2147483647, %v261
      %vm335 = vcmp.eq.f32.partialorder %v334, 8.507059e+37
      %v336 = vand.u32 %v261, 2147483648
      %v337 = vor.u32 1.1754944e-38, %v336
      %v338 = vsel %vm335, %v337, %v333
      %v339 = vmul.f32 1.0, %v338
      %v340 = vrcp.pop %v262
      %v341 = vmul.f32 %v262, %v340
      %v342 = vsub.f32 1.0, %v341
      %v343 = vmul.f32 %v340, %v342
      %v344 = vadd.f32 %v340, %v343
      %vm345 = vweird.f32 %v262
      %vm346 = vweird.f32 %v340
      %vm347 = vmor %vm345, %vm346
      %v348 = vsel %vm347, %v340, %v344
      %v349 = vand.u32 2147483647, %v262
      %vm350 = vcmp.eq.f32.partialorder %v349, 8.507059e+37
      %v351 = vand.u32 %v262, 2147483648
      %v352 = vor.u32 1.1754944e-38, %v351
      %v353 = vsel %vm350, %v352, %v348
      %v354 = vmul.f32 1.0, %v353
      %v355 = vrcp.pop %v263
      %v356 = vmul.f32 %v263, %v355
      %v357 = vsub.f32 1.0, %v356
      %v358 = vmul.f32 %v355, %v357
      %v359 = vadd.f32 %v355, %v358
      %vm360 = vweird.f32 %v263
      %vm361 = vweird.f32 %v355
      %vm362 = vmor %vm360, %vm361
      %v363 = vsel %vm362, %v355, %v359
      %v364 = vand.u32 2147483647, %v263
      %vm365 = vcmp.eq.f32.partialorder %v364, 8.507059e+37
      %v366 = vand.u32 %v263, 2147483648
      %v367 = vor.u32 1.1754944e-38, %v366
      %v368 = vsel %vm365, %v367, %v363
      %v369 = vmul.f32 1.0, %v368
      %v370 = vrcp.pop %v264
      %v371 = vmul.f32 %v264, %v370
      %v372 = vsub.f32 1.0, %v371
      %v373 = vmul.f32 %v370, %v372
      %v374 = vadd.f32 %v370, %v373
      %vm375 = vweird.f32 %v264
      %vm376 = vweird.f32 %v370
      %vm377 = vmor %vm375, %vm376
      %v378 = vsel %vm377, %v370, %v374
      %v379 = vand.u32 2147483647, %v264
      %vm380 = vcmp.eq.f32.partialorder %v379, 8.507059e+37
      %v381 = vand.u32 %v264, 2147483648
      %v382 = vor.u32 1.1754944e-38, %v381
      %v383 = vsel %vm380, %v382, %v378
      %v384 = vmul.f32 1.0, %v383
      %vm385 = vcmask 7168
      %386 = vst.msk [vmem:[%s174] sm:$0xff] %vm385, %v279
      %387 = vst.msk [vmem:[%s174 + $0x8] sm:$0xff] %vm385, %v294
      %388 = vst.msk [vmem:[%s174 + $0x10] sm:$0xff] %vm385, %v309
      %389 = vst.msk [vmem:[%s174 + $0x18] sm:$0xff] %vm385, %v324
      %390 = vst.msk [vmem:[%s174 + $0x20] sm:$0xff] %vm385, %v339
      %391 = vst.msk [vmem:[%s174 + $0x28] sm:$0xff] %vm385, %v354
      %392 = vst.msk [vmem:[%s174 + $0x30] sm:$0xff] %vm385, %v369
      %393 = vst.msk [vmem:[%s174 + $0x38] sm:$0xff] %vm385, %v384
      %s394 = smul.u32 8, %s16
      %p395 = scmp.lt.s32.totalorder %s394, 15
      %s396 = scalar_select %p395, %s394, 15
      %s397 = smul.addr %s396, 8
      %s398 = scalar_lea.vmem %s3, %s397
      // Predicated region
      $region33: #{_lambda_.43} parent=31 // pred_check
        %p399 = pneg %p102
      $region34: #{_lambda_.43} parent=31 // pred_check_branch
        %401 = sbr.rel (%p399) target = $region36
      $region35: #{_lambda_.43} parent=31 // pred_region
        %s402 = smul.u32 8, %s16
      $region36: #{_lambda_.43} parent=31 // pred_fallthru
        _
    $region32: #{_lambda_.43} parent=5 // pred_fallthru
      _
    %p403 = scmp.le.s32.totalorder 2, %s11
    // Predicated region
    $region37: #{_lambda_.43} parent=5 // pred_check
      %p404 = pneg %p403
    $region38: #{_lambda_.43} parent=5 // pred_check_branch
      %406 = sbr.rel (%p404) target = $region40
    $region39: #{_lambda_.43} parent=5 // pred_region
      %s407 = ssub.s32 %s11, 2
      // Predicated region
      $region41: #{_lambda_.43} parent=39 // pred_check
        %p408 = pneg %p108
      $region42: #{_lambda_.43} parent=39 // pred_check_branch
        %410 = sbr.rel (%p408) target = $region44
      $region43: #{_lambda_.43} parent=39 // pred_region
        %s411 = smul.u32 8, %s17
        %p412 = scmp.lt.s32.totalorder %s411, 15
        %s413 = scalar_select %p412, %s411, 15
        %s414 = smul.addr %s413, 8
        %s415 = scalar_lea.vmem %s3, %s414
      $region44: #{_lambda_.43} parent=39 // pred_fallthru
        _
    $region40: #{_lambda_.43} parent=5 // pred_fallthru
      _
  $region6: #{_lambda_.43} parent=0 // loop_footer
    %s15 = sadd.s32 1, %s11
  $region7: #{_lambda_.43} parent=0 // loop_footer_branch
    %10 = sbr.rel target = $region3
  $region8: #{_lambda_.43} parent=0 // loop_exit
    _

// kernel: _lambda_.39
$region0: #{_lambda_.39}
  #allocation0 [shape = 'u32[]', space=smem, size = 0x4, offset = 0x4, fixed_abs, tag = 'smem constant byte address 0x4 - core index']
  #allocation1 [shape = 'u32[72,128]{1,0:T(1,128)}', space=vmem, size = 0x9000, scoped, tag = 'internal scratch']
  %s0 = inlined_call_operand.vmem [shape: f32[128,96], index: 0, kind: input, shape index: {}]
  %s1 = inlined_call_operand.vmem [shape: f32[128,32], index: 1, kind: output, shape index: {}]
  %s2 = sld [smem:[#allocation0]]
  $region37: #{_lambda_.39} parent=0
    _
  %s4 = ssub.s32 1, %s2
  %s5 = scalar_select 0, %s4, %s2
  loop: start=0, step=1, limit=4
  $region2: #{_lambda_.39} parent=0 // loop_pre_header
    _
  $region3: #{_lambda_.39} parent=0 // loop_header
    %s7 = sphi 0, %s11
    %p8 = scmp.ge.s32.totalorder %s7, 4
    %s17 = sphi 0, %s19
    %s20 = sphi 0, %s17
    %s21 = sphi 0, %s20
    %s37 = sphi 0, %s21
    %s43 = sphi 0, %s45
    %s46 = sphi 0, %s43
    %s47 = sphi 0, %s46
    %s63 = sphi 0, %s47
  $region4: #{_lambda_.39} parent=0 // loop_header_branch
    %10 = sbr.rel (%p8) target = $region8
  $region5: #{_lambda_.39} parent=0 // loop_body
    %s12 = ssub.s32 %s7, 1
    %s13 = ssub.s32 %s7, 2
    %s14 = sadd.s32 %s7, 1
    %s15 = ssub.s32 %s7, %s14
    %p16 = scmp.eq.s32.totalorder %s15, 0
    %s18 = sadd.s32 %s17, 1
    %s19 = scalar_select %p16, %s17, %s18
    %p22 = pneg %p16
    %p23 = scmp.eq.s32.totalorder %s7, 1
    %p24 = por %p22, %p23
    %p25 = scmp.ne.s32.totalorder %s17, %s20
    %p26 = scmp.eq.s32.totalorder %s7, 0
    %p27 = por %p25, %p26
    %p28 = scmp.ne.s32.totalorder %s17, %s20
    %p29 = scmp.eq.s32.totalorder %s12, 1
    %p30 = por %p28, %p29
    %p31 = scmp.ne.s32.totalorder %s20, %s21
    %p32 = scmp.eq.s32.totalorder %s12, 0
    %p33 = por %p31, %p32
    %p34 = scmp.ne.s32.totalorder %s20, %s21
    %p35 = scmp.eq.s32.totalorder %s13, 1
    %p36 = por %p34, %p35
    %p38 = scmp.ne.s32.totalorder %s21, %s37
    %p39 = scmp.eq.s32.totalorder %s13, 0
    %p40 = por %p38, %p39
    %s41 = ssub.s32 %s7, %s14
    %p42 = scmp.eq.s32.totalorder %s41, 0
    %s44 = sadd.s32 %s43, 1
    %s45 = scalar_select %p42, %s43, %s44
    %p48 = pneg %p42
    %p49 = scmp.eq.s32.totalorder %s7, 1
    %p50 = por %p48, %p49
    %p51 = scmp.ne.s32.totalorder %s43, %s46
    %p52 = scmp.eq.s32.totalorder %s7, 0
    %p53 = por %p51, %p52
    %p54 = scmp.ne.s32.totalorder %s43, %s46
    %p55 = scmp.eq.s32.totalorder %s12, 1
    %p56 = por %p54, %p55
    %p57 = scmp.ne.s32.totalorder %s46, %s47
    %p58 = scmp.eq.s32.totalorder %s12, 0
    %p59 = por %p57, %p58
    %p60 = scmp.ne.s32.totalorder %s46, %s47
    %p61 = scmp.eq.s32.totalorder %s13, 1
    %p62 = por %p60, %p61
    %p64 = scmp.ne.s32.totalorder %s47, %s63
    %p65 = scmp.eq.s32.totalorder %s13, 0
    %p66 = por %p64, %p65
    %p67 = scmp.le.s32.totalorder 1, %s7
    %p68 = scmp.lt.s32.totalorder %s7, 3
    %p69 = pnand %p67, %p68
    %p70 = pneg %p69
    // Predicated region
    $region9: #{_lambda_.39} parent=5 // pred_check
      _
    $region10: #{_lambda_.39} parent=5 // pred_check_branch
      %72 = sbr.rel (%p69) target = $region12
    $region11: #{_lambda_.39} parent=5 // pred_region
      %s73 = ssub.s32 %s7, 1
    $region12: #{_lambda_.39} parent=5 // pred_fallthru
      _
    %p74 = scmp.lt.s32.totalorder %s7, 2
    // Predicated region
    $region13: #{_lambda_.39} parent=5 // pred_check
      %p75 = pneg %p74
    $region14: #{_lambda_.39} parent=5 // pred_check_branch
      %77 = sbr.rel (%p75) target = $region16
    $region15: #{_lambda_.39} parent=5 // pred_region
      // Predicated region
      $region17: #{_lambda_.39} parent=15 // pred_check
        %p78 = pneg %p27
      $region18: #{_lambda_.39} parent=15 // pred_check_branch
        %80 = sbr.rel (%p78) target = $region20
      $region19: #{_lambda_.39} parent=15 // pred_region
        %s81 = smul.u32 8, %s7
        %p82 = scmp.lt.s32.totalorder %s81, 15
        %s83 = scalar_select %p82, %s81, 15
        %s84 = smul.addr %s83, 8
        %s85 = scalar_lea.vmem %s0, %s84
        %s86 = smul.u32 8, %s7
      $region20: #{_lambda_.39} parent=15 // pred_fallthru
        _
    $region16: #{_lambda_.39} parent=5 // pred_fallthru
      _
    %p87 = scmp.le.s32.totalorder 1, %s7
    %p88 = scmp.lt.s32.totalorder %s7, 3
    %p89 = pnand %p87, %p88
    %p90 = pneg %p89
    // Predicated region
    $region21: #{_lambda_.39} parent=5 // pred_check
      _
    $region22: #{_lambda_.39} parent=5 // pred_check_branch
      %92 = sbr.rel (%p89) target = $region24
    $region23: #{_lambda_.39} parent=5 // pred_region
      %s93 = ssub.s32 %s7, 1
      %s94 = smul.u32 8, %s12
      %p95 = scmp.lt.s32.totalorder %s94, 15
      %s96 = scalar_select %p95, %s94, 15
      %s97 = smul.addr %s96, 8
      %s98 = scalar_lea.vmem %s0, %s97
      %p99 = pneg %p33
      %p100 = pneg %p30
      %p101 = pneg %p59
      %p102 = pneg %p56
      %s103 = smul.u32 8, %s12
      %p104 = scmp.lt.s32.totalorder %s103, 15
      %s105 = scalar_select %p104, %s103, 15
      %s106 = smul.addr %s105, 8
      %s107 = scalar_lea.vmem %s1, %s106
      %s108 = smul.u32 8, %s12
      %p109 = scmp.lt.s32.totalorder %s108, 15
      %s110 = scalar_select %p109, %s108, 15
      %s111 = smul.addr %s110, 8
      %s112 = scalar_lea.vmem %s0, %s111
      %s113 = smul.u32 8, %s12
      %s114 = smul.u32 8, %s12
      %p115 = scmp.lt.s32.totalorder %s114, 15
      %s116 = scalar_select %p115, %s114, 15
      %s117 = smul.addr %s116, 8
      %s118 = scalar_lea.vmem %s1, %s117
      %s119 = smul.u32 8, %s12
      %v120 = vld [vmem:[%s112] sm:$0xff]
      %v121 = vld [vmem:[%s112 + $0x8] sm:$0xff]
      %v122 = vld [vmem:[%s112 + $0x10] sm:$0xff]
      %v123 = vld [vmem:[%s112 + $0x18] sm:$0xff]
      %v124 = vld [vmem:[%s112 + $0x20] sm:$0xff]
      %v125 = vld [vmem:[%s112 + $0x28] sm:$0xff]
      %v126 = vld [vmem:[%s112 + $0x30] sm:$0xff]
      %v127 = vld [vmem:[%s112 + $0x38] sm:$0xff]
      %v128 = vmul.f32 %v120, 0.35355338
      %v129 = vmul.f32 %v121, 0.35355338
      %v130 = vmul.f32 %v122, 0.35355338
      %v131 = vmul.f32 %v123, 0.35355338
      %v132 = vmul.f32 %v124, 0.35355338
      %v133 = vmul.f32 %v125, 0.35355338
      %v134 = vmul.f32 %v126, 0.35355338
      %v135 = vmul.f32 %v127, 0.35355338
      %144 = vrot.lane.b32.xlu0 %v120, 96
      %v145 = vpop.permute.xlu0 %144
      %146 = vrot.lane.b32.xlu0 %v121, 96
      %v147 = vpop.permute.xlu0 %146
      %148 = vrot.lane.b32.xlu0 %v122, 96
      %v149 = vpop.permute.xlu0 %148
      %150 = vrot.lane.b32.xlu0 %v123, 96
      %v151 = vpop.permute.xlu0 %150
      %152 = vrot.lane.b32.xlu0 %v124, 96
      %v153 = vpop.permute.xlu0 %152
      %154 = vrot.lane.b32.xlu0 %v125, 96
      %v155 = vpop.permute.xlu0 %154
      %156 = vrot.lane.b32.xlu0 %v126, 96
      %v157 = vpop.permute.xlu0 %156
      %158 = vrot.lane.b32.xlu0 %v127, 96
      %v159 = vpop.permute.xlu0 %158
      %vm160 = vcmask 64512
      %v162 = vsel %vm160, %v128, 0
      %v165 = vsel %vm160, %v129, 0
      %v168 = vsel %vm160, %v130, 0
      %v171 = vsel %vm160, %v131, 0
      %v174 = vsel %vm160, %v132, 0
      %v177 = vsel %vm160, %v133, 0
      %v180 = vsel %vm160, %v134, 0
      %v183 = vsel %vm160, %v135, 0
      %v185 = vsel %vm160, %v145, 0
      %v187 = vsel %vm160, %v147, 0
      %v189 = vsel %vm160, %v149, 0
      %v191 = vsel %vm160, %v151, 0
      %v193 = vsel %vm160, %v153, 0
      %v195 = vsel %vm160, %v155, 0
      %v197 = vsel %vm160, %v157, 0
      %v199 = vsel %vm160, %v159, 0
      %201 = vmatpush.xpose.msra.mxu0 0.0
      %202 = vmatpush.xpose.msra.mxu0 0.0
      %203 = vmatpush.xpose.msra.mxu0 0.0
      %204 = vmatpush.xpose.msra.mxu0 0.0
      %205 = vmatpush.xpose.msra.mxu0 0.0
      %206 = vmatpush.xpose.msra.mxu0 0.0
      %207 = vmatpush.xpose.msra.mxu0 0.0
      %208 = vmatpush.xpose.msra.mxu0 0.0
      %209 = vmatpush.xpose.msra.mxu0 %v199
      %210 = vmatpush.xpose.msra.mxu0 %v197
      %211 = vmatpush.xpose.msra.mxu0 %v195
      %212 = vmatpush.xpose.msra.mxu0 %v193
      %213 = vmatpush.xpose.msra.mxu0 %v191
      %214 = vmatpush.xpose.msra.mxu0 %v189
      %215 = vmatpush.xpose.msra.mxu0 %v187
      %216 = vmatpush.xpose.msra.mxu0 %v185
      %217 = vmatmul.f32.gmra.mxu0 %v162
      %v218 = vpop.f32.mrf.mxu0
      %v219 = vadd.f32 0.0, %v218
      %220 = vmatmul.f32.gmra.mxu0 %v165
      %v221 = vpop.f32.mrf.mxu0
      %v222 = vadd.f32 0.0, %v221
      %223 = vmatmul.f32.gmra.mxu0 %v168
      %v224 = vpop.f32.mrf.mxu0
      %v225 = vadd.f32 0.0, %v224
      %226 = vmatmul.f32.gmra.mxu0 %v171
      %v227 = vpop.f32.mrf.mxu0
      %v228 = vadd.f32 0.0, %v227
      %229 = vmatmul.f32.gmra.mxu0 %v174
      %v230 = vpop.f32.mrf.mxu0
      %v231 = vadd.f32 0.0, %v230
      %232 = vmatmul.f32.gmra.mxu0 %v177
      %v233 = vpop.f32.mrf.mxu0
      %v234 = vadd.f32 0.0, %v233
      %235 = vmatmul.f32.gmra.mxu0 %v180
      %v236 = vpop.f32.mrf.mxu0
      %v237 = vadd.f32 0.0, %v236
      %238 = vmatmul.f32.gmra.mxu0 %v183
      %v239 = vpop.f32.mrf.mxu0
      %v240 = vadd.f32 0.0, %v239
      %241 = vdwg.mxu0
      %vm242 = vcmask 523264
      %v243 = vsel %vm242, %v219, -inf
      %244 = vmax.xlane.f32.xlu0 %v243
      %v245 = vpop.xlane.xlu0 %244
      %v246 = vsel %vm242, %v222, -inf
      %247 = vmax.xlane.f32.xlu0 %v246
      %v248 = vpop.xlane.xlu0 %247
      %v249 = vsel %vm242, %v225, -inf
      %250 = vmax.xlane.f32.xlu0 %v249
      %v251 = vpop.xlane.xlu0 %250
      %v252 = vsel %vm242, %v228, -inf
      %253 = vmax.xlane.f32.xlu0 %v252
      %v254 = vpop.xlane.xlu0 %253
      %v255 = vsel %vm242, %v231, -inf
      %256 = vmax.xlane.f32.xlu0 %v255
      %v257 = vpop.xlane.xlu0 %256
      %v258 = vsel %vm242, %v234, -inf
      %259 = vmax.xlane.f32.xlu0 %v258
      %v260 = vpop.xlane.xlu0 %259
      %v261 = vsel %vm242, %v237, -inf
      %262 = vmax.xlane.f32.xlu0 %v261
      %v263 = vpop.xlane.xlu0 %262
      %v264 = vsel %vm242, %v240, -inf
      %265 = vmax.xlane.f32.xlu0 %v264
      %v266 = vpop.xlane.xlu0 %265
      %v267 = vsub.f32 %v219, %v245
      %v268 = vsub.f32 %v222, %v248
      %v269 = vsub.f32 %v225, %v251
      %v270 = vsub.f32 %v228, %v254
      %v271 = vsub.f32 %v231, %v257
      %v272 = vsub.f32 %v234, %v260
      %v273 = vsub.f32 %v237, %v263
      %v274 = vsub.f32 %v240, %v266
      %v275 = vmul.f32 %v267, 1.442695
      %v276 = vpow.pop %v275
      %v277 = vmul.f32 %v268, 1.442695
      %v278 = vpow.pop %v277
      %v279 = vmul.f32 %v269, 1.442695
      %v280 = vpow.pop %v279
      %v281 = vmul.f32 %v270, 1.442695
      %v282 = vpow.pop %v281
      %v283 = vmul.f32 %v271, 1.442695
      %v284 = vpow.pop %v283
      %v285 = vmul.f32 %v272, 1.442695
      %v286 = vpow.pop %v285
      %v287 = vmul.f32 %v273, 1.442695
      %v288 = vpow.pop %v287
      %v289 = vmul.f32 %v274, 1.442695
      %v290 = vpow.pop %v289
      %v291 = vsel %vm242, %v276, 0.0
      %292 = vadd.xlane.f32.xlu0 %v291
      %v293 = vpop.xlane.xlu0 %292
      %v294 = vsel %vm242, %v278, 0.0
      %295 = vadd.xlane.f32.xlu0 %v294
      %v296 = vpop.xlane.xlu0 %295
      %v297 = vsel %vm242, %v280, 0.0
      %298 = vadd.xlane.f32.xlu0 %v297
      %v299 = vpop.xlane.xlu0 %298
      %v300 = vsel %vm242, %v282, 0.0
      %301 = vadd.xlane.f32.xlu0 %v300
      %v302 = vpop.xlane.xlu0 %301
      %v303 = vsel %vm242, %v284, 0.0
      %304 = vadd.xlane.f32.xlu0 %v303
      %v305 = vpop.xlane.xlu0 %304
      %v306 = vsel %vm242, %v286, 0.0
      %307 = vadd.xlane.f32.xlu0 %v306
      %v308 = vpop.xlane.xlu0 %307
      %v309 = vsel %vm242, %v288, 0.0
      %310 = vadd.xlane.f32.xlu0 %v309
      %v311 = vpop.xlane.xlu0 %310
      %v312 = vsel %vm242, %v290, 0.0
      %313 = vadd.xlane.f32.xlu0 %v312
      %v314 = vpop.xlane.xlu0 %313
      %v315 = vrcp.pop %v293
      %v316 = vrcp.pop %v296
      %v317 = vrcp.pop %v299
      %v318 = vrcp.pop %v302
      %v319 = vrcp.pop %v305
      %v320 = vrcp.pop %v308
      %v321 = vrcp.pop %v311
      %v322 = vrcp.pop %v314
      %v323 = vmul.f32 %v276, %v315
      %v324 = vmul.f32 %v278, %v316
      %v325 = vmul.f32 %v280, %v317
      %v326 = vmul.f32 %v282, %v318
      %v327 = vmul.f32 %v284, %v319
      %v328 = vmul.f32 %v286, %v320
      %v329 = vmul.f32 %v288, %v321
      %v330 = vmul.f32 %v290, %v322
      %331 = vrot.lane.b32.xlu0 %v120, 64
      %v332 = vpop.permute.xlu0 %331
      %333 = vrot.lane.b32.xlu0 %v121, 64
      %v334 = vpop.permute.xlu0 %333
      %335 = vrot.lane.b32.xlu0 %v122, 64
      %v336 = vpop.permute.xlu0 %335
      %337 = vrot.lane.b32.xlu0 %v123, 64
      %v338 = vpop.permute.xlu0 %337
      %339 = vrot.lane.b32.xlu0 %v124, 64
      %v340 = vpop.permute.xlu0 %339
      %341 = vrot.lane.b32.xlu0 %v125, 64
      %v342 = vpop.permute.xlu0 %341
      %343 = vrot.lane.b32.xlu0 %v126, 64
      %v344 = vpop.permute.xlu0 %343
      %345 = vrot.lane.b32.xlu0 %v127, 64
      %v346 = vpop.permute.xlu0 %345
      %v356 = vsel %vm242, %v323, 0
      %v359 = vsel %vm242, %v324, 0
      %v362 = vsel %vm242, %v325, 0
      %v365 = vsel %vm242, %v326, 0
      %v368 = vsel %vm242, %v327, 0
      %v371 = vsel %vm242, %v328, 0
      %v374 = vsel %vm242, %v329, 0
      %v377 = vsel %vm242, %v330, 0
      %379 = vmatpush.msra.mxu0 0.0
      %380 = vmatpush.msra.mxu0 0.0
      %381 = vmatpush.msra.mxu0 0.0
      %382 = vmatpush.msra.mxu0 0.0
      %383 = vmatpush.msra.mxu0 0.0
      %384 = vmatpush.msra.mxu0 0.0
      %385 = vmatpush.msra.mxu0 0.0
      %386 = vmatpush.msra.mxu0 0.0
      %387 = vmatpush.msra.mxu0 %v346
      %388 = vmatpush.msra.mxu0 %v344
      %389 = vmatpush.msra.mxu0 %v342
      %390 = vmatpush.msra.mxu0 %v340
      %391 = vmatpush.msra.mxu0 %v338
      %392 = vmatpush.msra.mxu0 %v336
      %393 = vmatpush.msra.mxu0 %v334
      %394 = vmatpush.msra.mxu0 %v332
      %395 = vmatmul.f32.gmra.mxu0 %v356
      %v396 = vpop.f32.mrf.mxu0
      %v397 = vadd.f32 0.0, %v396
      %398 = vmatmul.f32.gmra.mxu0 %v359
      %v399 = vpop.f32.mrf.mxu0
      %v400 = vadd.f32 0.0, %v399
      %401 = vmatmul.f32.gmra.mxu0 %v362
      %v402 = vpop.f32.mrf.mxu0
      %v403 = vadd.f32 0.0, %v402
      %404 = vmatmul.f32.gmra.mxu0 %v365
      %v405 = vpop.f32.mrf.mxu0
      %v406 = vadd.f32 0.0, %v405
      %407 = vmatmul.f32.gmra.mxu0 %v368
      %v408 = vpop.f32.mrf.mxu0
      %v409 = vadd.f32 0.0, %v408
      %410 = vmatmul.f32.gmra.mxu0 %v371
      %v411 = vpop.f32.mrf.mxu0
      %v412 = vadd.f32 0.0, %v411
      %413 = vmatmul.f32.gmra.mxu0 %v374
      %v414 = vpop.f32.mrf.mxu0
      %v415 = vadd.f32 0.0, %v414
      %416 = vmatmul.f32.gmra.mxu0 %v377
      %v417 = vpop.f32.mrf.mxu0
      %v418 = vadd.f32 0.0, %v417
      %419 = vdwg.mxu0
      %420 = vrot.lane.b32.xlu0 %v128, 120
      %v421 = vpop.permute.xlu0 %420
      %422 = vrot.lane.b32.xlu0 %v129, 120
      %v423 = vpop.permute.xlu0 %422
      %424 = vrot.lane.b32.xlu0 %v130, 120
      %v425 = vpop.permute.xlu0 %424
      %426 = vrot.lane.b32.xlu0 %v131, 120
      %v427 = vpop.permute.xlu0 %426
      %428 = vrot.lane.b32.xlu0 %v132, 120
      %v429 = vpop.permute.xlu0 %428
      %430 = vrot.lane.b32.xlu0 %v133, 120
      %v431 = vpop.permute.xlu0 %430
      %432 = vrot.lane.b32.xlu0 %v134, 120
      %v433 = vpop.permute.xlu0 %432
      %434 = vrot.lane.b32.xlu0 %v135, 120
      %v435 = vpop.permute.xlu0 %434
      %436 = vrot.lane.b32.xlu0 %v120, 88
      %v437 = vpop.permute.xlu0 %436
      %438 = vrot.lane.b32.xlu0 %v121, 88
      %v439 = vpop.permute.xlu0 %438
      %440 = vrot.lane.b32.xlu0 %v122, 88
      %v441 = vpop.permute.xlu0 %440
      %442 = vrot.lane.b32.xlu0 %v123, 88
      %v443 = vpop.permute.xlu0 %442
      %444 = vrot.lane.b32.xlu0 %v124, 88
      %v445 = vpop.permute.xlu0 %444
      %446 = vrot.lane.b32.xlu0 %v125, 88
      %v447 = vpop.permute.xlu0 %446
      %448 = vrot.lane.b32.xlu0 %v126, 88
      %v449 = vpop.permute.xlu0 %448
      %450 = vrot.lane.b32.xlu0 %v127, 88
      %v451 = vpop.permute.xlu0 %450
      %v452 = vsel %vm160, %v421, 0
      %v454 = vsel %vm160, %v423, 0
      %v456 = vsel %vm160, %v425, 0
      %v458 = vsel %vm160, %v427, 0
      %v460 = vsel %vm160, %v429, 0
      %v462 = vsel %vm160, %v431, 0
      %v464 = vsel %vm160, %v433, 0
      %v466 = vsel %vm160, %v435, 0
      %v468 = vsel %vm160, %v437, 0
      %v470 = vsel %vm160, %v439, 0
      %v472 = vsel %vm160, %v441, 0
      %v474 = vsel %vm160, %v443, 0
      %v476 = vsel %vm160, %v445, 0
      %v478 = vsel %vm160, %v447, 0
      %v480 = vsel %vm160, %v449, 0
      %v482 = vsel %vm160, %v451, 0
      %484 = vmatpush.xpose.msra.mxu0 0.0
      %485 = vmatpush.xpose.msra.mxu0 0.0
      %486 = vmatpush.xpose.msra.mxu0 0.0
      %487 = vmatpush.xpose.msra.mxu0 0.0
      %488 = vmatpush.xpose.msra.mxu0 0.0
      %489 = vmatpush.xpose.msra.mxu0 0.0
      %490 = vmatpush.xpose.msra.mxu0 0.0
      %491 = vmatpush.xpose.msra.mxu0 0.0
      %492 = vmatpush.xpose.msra.mxu0 %v482
      %493 = vmatpush.xpose.msra.mxu0 %v480
      %494 = vmatpush.xpose.msra.mxu0 %v478
      %495 = vmatpush.xpose.msra.mxu0 %v476
      %496 = vmatpush.xpose.msra.mxu0 %v474
      %497 = vmatpush.xpose.msra.mxu0 %v472
      %498 = vmatpush.xpose.msra.mxu0 %v470
      %499 = vmatpush.xpose.msra.mxu0 %v468
      %500 = vmatmul.f32.gmra.mxu0 %v452
      %v501 = vpop.f32.mrf.mxu0
      %v502 = vadd.f32 0.0, %v501
      %503 = vmatmul.f32.gmra.mxu0 %v454
      %v504 = vpop.f32.mrf.mxu0
      %v505 = vadd.f32 0.0, %v504
      %506 = vmatmul.f32.gmra.mxu0 %v456
      %v507 = vpop.f32.mrf.mxu0
      %v508 = vadd.f32 0.0, %v507
      %509 = vmatmul.f32.gmra.mxu0 %v458
      %v510 = vpop.f32.mrf.mxu0
      %v511 = vadd.f32 0.0, %v510
      %512 = vmatmul.f32.gmra.mxu0 %v460
      %v513 = vpop.f32.mrf.mxu0
      %v514 = vadd.f32 0.0, %v513
      %515 = vmatmul.f32.gmra.mxu0 %v462
      %v516 = vpop.f32.mrf.mxu0
      %v517 = vadd.f32 0.0, %v516
      %518 = vmatmul.f32.gmra.mxu0 %v464
      %v519 = vpop.f32.mrf.mxu0
      %v520 = vadd.f32 0.0, %v519
      %521 = vmatmul.f32.gmra.mxu0 %v466
      %v522 = vpop.f32.mrf.mxu0
      %v523 = vadd.f32 0.0, %v522
      %524 = vdwg.mxu0
      %v525 = vsel %vm242, %v502, -inf
      %526 = vmax.xlane.f32.xlu0 %v525
      %v527 = vpop.xlane.xlu0 %526
      %v528 = vsel %vm242, %v505, -inf
      %529 = vmax.xlane.f32.xlu0 %v528
      %v530 = vpop.xlane.xlu0 %529
      %v531 = vsel %vm242, %v508, -inf
      %532 = vmax.xlane.f32.xlu0 %v531
      %v533 = vpop.xlane.xlu0 %532
      %v534 = vsel %vm242, %v511, -inf
      %535 = vmax.xlane.f32.xlu0 %v534
      %v536 = vpop.xlane.xlu0 %535
      %v537 = vsel %vm242, %v514, -inf
      %538 = vmax.xlane.f32.xlu0 %v537
      %v539 = vpop.xlane.xlu0 %538
      %v540 = vsel %vm242, %v517, -inf
      %541 = vmax.xlane.f32.xlu0 %v540
      %v542 = vpop.xlane.xlu0 %541
      %v543 = vsel %vm242, %v520, -inf
      %544 = vmax.xlane.f32.xlu0 %v543
      %v545 = vpop.xlane.xlu0 %544
      %v546 = vsel %vm242, %v523, -inf
      %547 = vmax.xlane.f32.xlu0 %v546
      %v548 = vpop.xlane.xlu0 %547
      %v549 = vsub.f32 %v502, %v527
      %v550 = vsub.f32 %v505, %v530
      %v551 = vsub.f32 %v508, %v533
      %v552 = vsub.f32 %v511, %v536
      %v553 = vsub.f32 %v514, %v539
      %v554 = vsub.f32 %v517, %v542
      %v555 = vsub.f32 %v520, %v545
      %v556 = vsub.f32 %v523, %v548
      %v557 = vmul.f32 %v549, 1.442695
      %v558 = vpow.pop %v557
      %v559 = vmul.f32 %v550, 1.442695
      %v560 = vpow.pop %v559
      %v561 = vmul.f32 %v551, 1.442695
      %v562 = vpow.pop %v561
      %v563 = vmul.f32 %v552, 1.442695
      %v564 = vpow.pop %v563
      %v565 = vmul.f32 %v553, 1.442695
      %v566 = vpow.pop %v565
      %v567 = vmul.f32 %v554, 1.442695
      %v568 = vpow.pop %v567
      %v569 = vmul.f32 %v555, 1.442695
      %v570 = vpow.pop %v569
      %v571 = vmul.f32 %v556, 1.442695
      %v572 = vpow.pop %v571
      %v573 = vsel %vm242, %v558, 0.0
      %574 = vadd.xlane.f32.xlu0 %v573
      %v575 = vpop.xlane.xlu0 %574
      %v576 = vsel %vm242, %v560, 0.0
      %577 = vadd.xlane.f32.xlu0 %v576
      %v578 = vpop.xlane.xlu0 %577
      %v579 = vsel %vm242, %v562, 0.0
      %580 = vadd.xlane.f32.xlu0 %v579
      %v581 = vpop.xlane.xlu0 %580
      %v582 = vsel %vm242, %v564, 0.0
      %583 = vadd.xlane.f32.xlu0 %v582
      %v584 = vpop.xlane.xlu0 %583
      %v585 = vsel %vm242, %v566, 0.0
      %586 = vadd.xlane.f32.xlu0 %v585
      %v587 = vpop.xlane.xlu0 %586
      %v588 = vsel %vm242, %v568, 0.0
      %589 = vadd.xlane.f32.xlu0 %v588
      %v590 = vpop.xlane.xlu0 %589
      %v591 = vsel %vm242, %v570, 0.0
      %592 = vadd.xlane.f32.xlu0 %v591
      %v593 = vpop.xlane.xlu0 %592
      %v594 = vsel %vm242, %v572, 0.0
      %595 = vadd.xlane.f32.xlu0 %v594
      %v596 = vpop.xlane.xlu0 %595
      %v597 = vrcp.pop %v575
      %v598 = vrcp.pop %v578
      %v599 = vrcp.pop %v581
      %v600 = vrcp.pop %v584
      %v601 = vrcp.pop %v587
      %v602 = vrcp.pop %v590
      %v603 = vrcp.pop %v593
      %v604 = vrcp.pop %v596
      %v605 = vmul.f32 %v558, %v597
      %v606 = vmul.f32 %v560, %v598
      %v607 = vmul.f32 %v562, %v599
      %v608 = vmul.f32 %v564, %v600
      %v609 = vmul.f32 %v566, %v601
      %v610 = vmul.f32 %v568, %v602
      %v611 = vmul.f32 %v570, %v603
      %v612 = vmul.f32 %v572, %v604
      %613 = vrot.lane.b32.xlu0 %v120, 56
      %v614 = vpop.permute.xlu0 %613
      %615 = vrot.lane.b32.xlu0 %v121, 56
      %v616 = vpop.permute.xlu0 %615
      %617 = vrot.lane.b32.xlu0 %v122, 56
      %v618 = vpop.permute.xlu0 %617
      %619 = vrot.lane.b32.xlu0 %v123, 56
      %v620 = vpop.permute.xlu0 %619
      %621 = vrot.lane.b32.xlu0 %v124, 56
      %v622 = vpop.permute.xlu0 %621
      %623 = vrot.lane.b32.xlu0 %v125, 56
      %v624 = vpop.permute.xlu0 %623
      %625 = vrot.lane.b32.xlu0 %v126, 56
      %v626 = vpop.permute.xlu0 %625
      %627 = vrot.lane.b32.xlu0 %v127, 56
      %v628 = vpop.permute.xlu0 %627
      %v638 = vsel %vm242, %v605, 0
      %v641 = vsel %vm242, %v606, 0
      %v644 = vsel %vm242, %v607, 0
      %v647 = vsel %vm242, %v608, 0
      %v650 = vsel %vm242, %v609, 0
      %v653 = vsel %vm242, %v610, 0
      %v656 = vsel %vm242, %v611, 0
      %v659 = vsel %vm242, %v612, 0
      %661 = vmatpush.msra.mxu0 0.0
      %662 = vmatpush.msra.mxu0 0.0
      %663 = vmatpush.msra.mxu0 0.0
      %664 = vmatpush.msra.mxu0 0.0
      %665 = vmatpush.msra.mxu0 0.0
      %666 = vmatpush.msra.mxu0 0.0
      %667 = vmatpush.msra.mxu0 0.0
      %668 = vmatpush.msra.mxu0 0.0
      %669 = vmatpush.msra.mxu0 %v628
      %670 = vmatpush.msra.mxu0 %v626
      %671 = vmatpush.msra.mxu0 %v624
      %672 = vmatpush.msra.mxu0 %v622
      %673 = vmatpush.msra.mxu0 %v620
      %674 = vmatpush.msra.mxu0 %v618
      %675 = vmatpush.msra.mxu0 %v616
      %676 = vmatpush.msra.mxu0 %v614
      %677 = vmatmul.f32.gmra.mxu0 %v638
      %v678 = vpop.f32.mrf.mxu0
      %v679 = vadd.f32 0.0, %v678
      %680 = vmatmul.f32.gmra.mxu0 %v641
      %v681 = vpop.f32.mrf.mxu0
      %v682 = vadd.f32 0.0, %v681
      %683 = vmatmul.f32.gmra.mxu0 %v644
      %v684 = vpop.f32.mrf.mxu0
      %v685 = vadd.f32 0.0, %v684
      %686 = vmatmul.f32.gmra.mxu0 %v647
      %v687 = vpop.f32.mrf.mxu0
      %v688 = vadd.f32 0.0, %v687
      %689 = vmatmul.f32.gmra.mxu0 %v650
      %v690 = vpop.f32.mrf.mxu0
      %v691 = vadd.f32 0.0, %v690
      %692 = vmatmul.f32.gmra.mxu0 %v653
      %v693 = vpop.f32.mrf.mxu0
      %v694 = vadd.f32 0.0, %v693
      %695 = vmatmul.f32.gmra.mxu0 %v656
      %v696 = vpop.f32.mrf.mxu0
      %v697 = vadd.f32 0.0, %v696
      %698 = vmatmul.f32.gmra.mxu0 %v659
      %v699 = vpop.f32.mrf.mxu0
      %v700 = vadd.f32 0.0, %v699
      %701 = vdwg.mxu0
      %702 = vrot.lane.b32.xlu0 %v128, 112
      %v703 = vpop.permute.xlu0 %702
      %704 = vrot.lane.b32.xlu0 %v129, 112
      %v705 = vpop.permute.xlu0 %704
      %706 = vrot.lane.b32.xlu0 %v130, 112
      %v707 = vpop.permute.xlu0 %706
      %708 = vrot.lane.b32.xlu0 %v131, 112
      %v709 = vpop.permute.xlu0 %708
      %710 = vrot.lane.b32.xlu0 %v132, 112
      %v711 = vpop.permute.xlu0 %710
      %712 = vrot.lane.b32.xlu0 %v133, 112
      %v713 = vpop.permute.xlu0 %712
      %714 = vrot.lane.b32.xlu0 %v134, 112
      %v715 = vpop.permute.xlu0 %714
      %716 = vrot.lane.b32.xlu0 %v135, 112
      %v717 = vpop.permute.xlu0 %716
      %718 = vrot.lane.b32.xlu0 %v120, 80
      %v719 = vpop.permute.xlu0 %718
      %720 = vrot.lane.b32.xlu0 %v121, 80
      %v721 = vpop.permute.xlu0 %720
      %722 = vrot.lane.b32.xlu0 %v122, 80
      %v723 = vpop.permute.xlu0 %722
      %724 = vrot.lane.b32.xlu0 %v123, 80
      %v725 = vpop.permute.xlu0 %724
      %726 = vrot.lane.b32.xlu0 %v124, 80
      %v727 = vpop.permute.xlu0 %726
      %728 = vrot.lane.b32.xlu0 %v125, 80
      %v729 = vpop.permute.xlu0 %728
      %730 = vrot.lane.b32.xlu0 %v126, 80
      %v731 = vpop.permute.xlu0 %730
      %732 = vrot.lane.b32.xlu0 %v127, 80
      %v733 = vpop.permute.xlu0 %732
      %v734 = vsel %vm160, %v703, 0
      %v736 = vsel %vm160, %v705, 0
      %v738 = vsel %vm160, %v707, 0
      %v740 = vsel %vm160, %v709, 0
      %v742 = vsel %vm160, %v711, 0
      %v744 = vsel %vm160, %v713, 0
      %v746 = vsel %vm160, %v715, 0
      %v748 = vsel %vm160, %v717, 0
      %v750 = vsel %vm160, %v719, 0
      %v752 = vsel %vm160, %v721, 0
      %v754 = vsel %vm160, %v723, 0
      %v756 = vsel %vm160, %v725, 0
      %v758 = vsel %vm160, %v727, 0
      %v760 = vsel %vm160, %v729, 0
      %v762 = vsel %vm160, %v731, 0
      %v764 = vsel %vm160, %v733, 0
      %766 = vmatpush.xpose.msra.mxu0 0.0
      %767 = vmatpush.xpose.msra.mxu0 0.0
      %768 = vmatpush.xpose.msra.mxu0 0.0
      %769 = vmatpush.xpose.msra.mxu0 0.0
      %770 = vmatpush.xpose.msra.mxu0 0.0
      %771 = vmatpush.xpose.msra.mxu0 0.0
      %772 = vmatpush.xpose.msra.mxu0 0.0
      %773 = vmatpush.xpose.msra.mxu0 0.0
      %774 = vmatpush.xpose.msra.mxu0 %v764
      %775 = vmatpush.xpose.msra.mxu0 %v762
      %776 = vmatpush.xpose.msra.mxu0 %v760
      %777 = vmatpush.xpose.msra.mxu0 %v758
      %778 = vmatpush.xpose.msra.mxu0 %v756
      %779 = vmatpush.xpose.msra.mxu0 %v754
      %780 = vmatpush.xpose.msra.mxu0 %v752
      %781 = vmatpush.xpose.msra.mxu0 %v750
      %782 = vmatmul.f32.gmra.mxu0 %v734
      %v783 = vpop.f32.mrf.mxu0
      %v784 = vadd.f32 0.0, %v783
      %785 = vmatmul.f32.gmra.mxu0 %v736
      %v786 = vpop.f32.mrf.mxu0
      %v787 = vadd.f32 0.0, %v786
      %788 = vmatmul.f32.gmra.mxu0 %v738
      %v789 = vpop.f32.mrf.mxu0
      %v790 = vadd.f32 0.0, %v789
      %791 = vmatmul.f32.gmra.mxu0 %v740
      %v792 = vpop.f32.mrf.mxu0
      %v793 = vadd.f32 0.0, %v792
      %794 = vmatmul.f32.gmra.mxu0 %v742
      %v795 = vpop.f32.mrf.mxu0
      %v796 = vadd.f32 0.0, %v795
      %797 = vmatmul.f32.gmra.mxu0 %v744
      %v798 = vpop.f32.mrf.mxu0
      %v799 = vadd.f32 0.0, %v798
      %800 = vmatmul.f32.gmra.mxu0 %v746
      %v801 = vpop.f32.mrf.mxu0
      %v802 = vadd.f32 0.0, %v801
      %803 = vmatmul.f32.gmra.mxu0 %v748
      %v804 = vpop.f32.mrf.mxu0
      %v805 = vadd.f32 0.0, %v804
      %806 = vdwg.mxu0
      %v807 = vsel %vm242, %v784, -inf
      %808 = vmax.xlane.f32.xlu0 %v807
      %v809 = vpop.xlane.xlu0 %808
      %v810 = vsel %vm242, %v787, -inf
      %811 = vmax.xlane.f32.xlu0 %v810
      %v812 = vpop.xlane.xlu0 %811
      %v813 = vsel %vm242, %v790, -inf
      %814 = vmax.xlane.f32.xlu0 %v813
      %v815 = vpop.xlane.xlu0 %814
      %v816 = vsel %vm242, %v793, -inf
      %817 = vmax.xlane.f32.xlu0 %v816
      %v818 = vpop.xlane.xlu0 %817
      %v819 = vsel %vm242, %v796, -inf
      %820 = vmax.xlane.f32.xlu0 %v819
      %v821 = vpop.xlane.xlu0 %820
      %v822 = vsel %vm242, %v799, -inf
      %823 = vmax.xlane.f32.xlu0 %v822
      %v824 = vpop.xlane.xlu0 %823
      %v825 = vsel %vm242, %v802, -inf
      %826 = vmax.xlane.f32.xlu0 %v825
      %v827 = vpop.xlane.xlu0 %826
      %v828 = vsel %vm242, %v805, -inf
      %829 = vmax.xlane.f32.xlu0 %v828
      %v830 = vpop.xlane.xlu0 %829
      %v831 = vsub.f32 %v784, %v809
      %v832 = vsub.f32 %v787, %v812
      %v833 = vsub.f32 %v790, %v815
      %v834 = vsub.f32 %v793, %v818
      %v835 = vsub.f32 %v796, %v821
      %v836 = vsub.f32 %v799, %v824
      %v837 = vsub.f32 %v802, %v827
      %v838 = vsub.f32 %v805, %v830
      %v839 = vmul.f32 %v831, 1.442695
      %v840 = vpow.pop %v839
      %v841 = vmul.f32 %v832, 1.442695
      %v842 = vpow.pop %v841
      %v843 = vmul.f32 %v833, 1.442695
      %v844 = vpow.pop %v843
      %v845 = vmul.f32 %v834, 1.442695
      %v846 = vpow.pop %v845
      %v847 = vmul.f32 %v835, 1.442695
      %v848 = vpow.pop %v847
      %v849 = vmul.f32 %v836, 1.442695
      %v850 = vpow.pop %v849
      %v851 = vmul.f32 %v837, 1.442695
      %v852 = vpow.pop %v851
      %v853 = vmul.f32 %v838, 1.442695
      %v854 = vpow.pop %v853
      %v855 = vsel %vm242, %v840, 0.0
      %856 = vadd.xlane.f32.xlu0 %v855
      %v857 = vpop.xlane.xlu0 %856
      %v858 = vsel %vm242, %v842, 0.0
      %859 = vadd.xlane.f32.xlu0 %v858
      %v860 = vpop.xlane.xlu0 %859
      %v861 = vsel %vm242, %v844, 0.0
      %862 = vadd.xlane.f32.xlu0 %v861
      %v863 = vpop.xlane.xlu0 %862
      %v864 = vsel %vm242, %v846, 0.0
      %865 = vadd.xlane.f32.xlu0 %v864
      %v866 = vpop.xlane.xlu0 %865
      %v867 = vsel %vm242, %v848, 0.0
      %868 = vadd.xlane.f32.xlu0 %v867
      %v869 = vpop.xlane.xlu0 %868
      %v870 = vsel %vm242, %v850, 0.0
      %871 = vadd.xlane.f32.xlu0 %v870
      %v872 = vpop.xlane.xlu0 %871
      %v873 = vsel %vm242, %v852, 0.0
      %874 = vadd.xlane.f32.xlu0 %v873
      %v875 = vpop.xlane.xlu0 %874
      %v876 = vsel %vm242, %v854, 0.0
      %877 = vadd.xlane.f32.xlu0 %v876
      %v878 = vpop.xlane.xlu0 %877
      %v879 = vrcp.pop %v857
      %v880 = vrcp.pop %v860
      %v881 = vrcp.pop %v863
      %v882 = vrcp.pop %v866
      %v883 = vrcp.pop %v869
      %v884 = vrcp.pop %v872
      %v885 = vrcp.pop %v875
      %v886 = vrcp.pop %v878
      %v887 = vmul.f32 %v840, %v879
      %v888 = vmul.f32 %v842, %v880
      %v889 = vmul.f32 %v844, %v881
      %v890 = vmul.f32 %v846, %v882
      %v891 = vmul.f32 %v848, %v883
      %v892 = vmul.f32 %v850, %v884
      %v893 = vmul.f32 %v852, %v885
      %v894 = vmul.f32 %v854, %v886
      %895 = vrot.lane.b32.xlu0 %v120, 48
      %v896 = vpop.permute.xlu0 %895
      %897 = vrot.lane.b32.xlu0 %v121, 48
      %v898 = vpop.permute.xlu0 %897
      %899 = vrot.lane.b32.xlu0 %v122, 48
      %v900 = vpop.permute.xlu0 %899
      %901 = vrot.lane.b32.xlu0 %v123, 48
      %v902 = vpop.permute.xlu0 %901
      %903 = vrot.lane.b32.xlu0 %v124, 48
      %v904 = vpop.permute.xlu0 %903
      %905 = vrot.lane.b32.xlu0 %v125, 48
      %v906 = vpop.permute.xlu0 %905
      %907 = vrot.lane.b32.xlu0 %v126, 48
      %v908 = vpop.permute.xlu0 %907
      %909 = vrot.lane.b32.xlu0 %v127, 48
      %v910 = vpop.permute.xlu0 %909
      %v920 = vsel %vm242, %v887, 0
      %v923 = vsel %vm242, %v888, 0
      %v926 = vsel %vm242, %v889, 0
      %v929 = vsel %vm242, %v890, 0
      %v932 = vsel %vm242, %v891, 0
      %v935 = vsel %vm242, %v892, 0
      %v938 = vsel %vm242, %v893, 0
      %v941 = vsel %vm242, %v894, 0
      %943 = vmatpush.msra.mxu0 0.0
      %944 = vmatpush.msra.mxu0 0.0
      %945 = vmatpush.msra.mxu0 0.0
      %946 = vmatpush.msra.mxu0 0.0
      %947 = vmatpush.msra.mxu0 0.0
      %948 = vmatpush.msra.mxu0 0.0
      %949 = vmatpush.msra.mxu0 0.0
      %950 = vmatpush.msra.mxu0 0.0
      %951 = vmatpush.msra.mxu0 %v910
      %952 = vmatpush.msra.mxu0 %v908
      %953 = vmatpush.msra.mxu0 %v906
      %954 = vmatpush.msra.mxu0 %v904
      %955 = vmatpush.msra.mxu0 %v902
      %956 = vmatpush.msra.mxu0 %v900
      %957 = vmatpush.msra.mxu0 %v898
      %958 = vmatpush.msra.mxu0 %v896
      %959 = vmatmul.f32.gmra.mxu0 %v920
      %v960 = vpop.f32.mrf.mxu0
      %v961 = vadd.f32 0.0, %v960
      %962 = vmatmul.f32.gmra.mxu0 %v923
      %v963 = vpop.f32.mrf.mxu0
      %v964 = vadd.f32 0.0, %v963
      %965 = vmatmul.f32.gmra.mxu0 %v926
      %v966 = vpop.f32.mrf.mxu0
      %v967 = vadd.f32 0.0, %v966
      %968 = vmatmul.f32.gmra.mxu0 %v929
      %v969 = vpop.f32.mrf.mxu0
      %v970 = vadd.f32 0.0, %v969
      %971 = vmatmul.f32.gmra.mxu0 %v932
      %v972 = vpop.f32.mrf.mxu0
      %v973 = vadd.f32 0.0, %v972
      %974 = vmatmul.f32.gmra.mxu0 %v935
      %v975 = vpop.f32.mrf.mxu0
      %v976 = vadd.f32 0.0, %v975
      %977 = vmatmul.f32.gmra.mxu0 %v938
      %v978 = vpop.f32.mrf.mxu0
      %v979 = vadd.f32 0.0, %v978
      %980 = vmatmul.f32.gmra.mxu0 %v941
      %v981 = vpop.f32.mrf.mxu0
      %v982 = vadd.f32 0.0, %v981
      %983 = vdwg.mxu0
      %984 = vrot.lane.b32.xlu0 %v128, 104
      %v985 = vpop.permute.xlu0 %984
      %986 = vrot.lane.b32.xlu0 %v129, 104
      %v987 = vpop.permute.xlu0 %986
      %988 = vrot.lane.b32.xlu0 %v130, 104
      %v989 = vpop.permute.xlu0 %988
      %990 = vrot.lane.b32.xlu0 %v131, 104
      %v991 = vpop.permute.xlu0 %990
      %992 = vrot.lane.b32.xlu0 %v132, 104
      %v993 = vpop.permute.xlu0 %992
      %994 = vrot.lane.b32.xlu0 %v133, 104
      %v995 = vpop.permute.xlu0 %994
      %996 = vrot.lane.b32.xlu0 %v134, 104
      %v997 = vpop.permute.xlu0 %996
      %998 = vrot.lane.b32.xlu0 %v135, 104
      %v999 = vpop.permute.xlu0 %998
      %1000 = vrot.lane.b32.xlu0 %v120, 72
      %v1001 = vpop.permute.xlu0 %1000
      %1002 = vrot.lane.b32.xlu0 %v121, 72
      %v1003 = vpop.permute.xlu0 %1002
      %1004 = vrot.lane.b32.xlu0 %v122, 72
      %v1005 = vpop.permute.xlu0 %1004
      %1006 = vrot.lane.b32.xlu0 %v123, 72
      %v1007 = vpop.permute.xlu0 %1006
      %1008 = vrot.lane.b32.xlu0 %v124, 72
      %v1009 = vpop.permute.xlu0 %1008
      %1010 = vrot.lane.b32.xlu0 %v125, 72
      %v1011 = vpop.permute.xlu0 %1010
      %1012 = vrot.lane.b32.xlu0 %v126, 72
      %v1013 = vpop.permute.xlu0 %1012
      %1014 = vrot.lane.b32.xlu0 %v127, 72
      %v1015 = vpop.permute.xlu0 %1014
      %v1016 = vsel %vm160, %v985, 0
      %v1018 = vsel %vm160, %v987, 0
      %v1020 = vsel %vm160, %v989, 0
      %v1022 = vsel %vm160, %v991, 0
      %v1024 = vsel %vm160, %v993, 0
      %v1026 = vsel %vm160, %v995, 0
      %v1028 = vsel %vm160, %v997, 0
      %v1030 = vsel %vm160, %v999, 0
      %v1032 = vsel %vm160, %v1001, 0
      %v1034 = vsel %vm160, %v1003, 0
      %v1036 = vsel %vm160, %v1005, 0
      %v1038 = vsel %vm160, %v1007, 0
      %v1040 = vsel %vm160, %v1009, 0
      %v1042 = vsel %vm160, %v1011, 0
      %v1044 = vsel %vm160, %v1013, 0
      %v1046 = vsel %vm160, %v1015, 0
      %1048 = vmatpush.xpose.msra.mxu0 0.0
      %1049 = vmatpush.xpose.msra.mxu0 0.0
      %1050 = vmatpush.xpose.msra.mxu0 0.0
      %1051 = vmatpush.xpose.msra.mxu0 0.0
      %1052 = vmatpush.xpose.msra.mxu0 0.0
      %1053 = vmatpush.xpose.msra.mxu0 0.0
      %1054 = vmatpush.xpose.msra.mxu0 0.0
      %1055 = vmatpush.xpose.msra.mxu0 0.0
      %1056 = vmatpush.xpose.msra.mxu0 %v1046
      %1057 = vmatpush.xpose.msra.mxu0 %v1044
      %1058 = vmatpush.xpose.msra.mxu0 %v1042
      %1059 = vmatpush.xpose.msra.mxu0 %v1040
      %1060 = vmatpush.xpose.msra.mxu0 %v1038
      %1061 = vmatpush.xpose.msra.mxu0 %v1036
      %1062 = vmatpush.xpose.msra.mxu0 %v1034
      %1063 = vmatpush.xpose.msra.mxu0 %v1032
      %1064 = vmatmul.f32.gmra.mxu0 %v1016
      %v1065 = vpop.f32.mrf.mxu0
      %v1066 = vadd.f32 0.0, %v1065
      %1067 = vmatmul.f32.gmra.mxu0 %v1018
      %v1068 = vpop.f32.mrf.mxu0
      %v1069 = vadd.f32 0.0, %v1068
      %1070 = vmatmul.f32.gmra.mxu0 %v1020
      %v1071 = vpop.f32.mrf.mxu0
      %v1072 = vadd.f32 0.0, %v1071
      %1073 = vmatmul.f32.gmra.mxu0 %v1022
      %v1074 = vpop.f32.mrf.mxu0
      %v1075 = vadd.f32 0.0, %v1074
      %1076 = vmatmul.f32.gmra.mxu0 %v1024
      %v1077 = vpop.f32.mrf.mxu0
      %v1078 = vadd.f32 0.0, %v1077
      %1079 = vmatmul.f32.gmra.mxu0 %v1026
      %v1080 = vpop.f32.mrf.mxu0
      %v1081 = vadd.f32 0.0, %v1080
      %1082 = vmatmul.f32.gmra.mxu0 %v1028
      %v1083 = vpop.f32.mrf.mxu0
      %v1084 = vadd.f32 0.0, %v1083
      %1085 = vmatmul.f32.gmra.mxu0 %v1030
      %v1086 = vpop.f32.mrf.mxu0
      %v1087 = vadd.f32 0.0, %v1086
      %1088 = vdwg.mxu0
      %v1089 = vsel %vm242, %v1066, -inf
      %1090 = vmax.xlane.f32.xlu0 %v1089
      %v1091 = vpop.xlane.xlu0 %1090
      %v1092 = vsel %vm242, %v1069, -inf
      %1093 = vmax.xlane.f32.xlu0 %v1092
      %v1094 = vpop.xlane.xlu0 %1093
      %v1095 = vsel %vm242, %v1072, -inf
      %1096 = vmax.xlane.f32.xlu0 %v1095
      %v1097 = vpop.xlane.xlu0 %1096
      %v1098 = vsel %vm242, %v1075, -inf
      %1099 = vmax.xlane.f32.xlu0 %v1098
      %v1100 = vpop.xlane.xlu0 %1099
      %v1101 = vsel %vm242, %v1078, -inf
      %1102 = vmax.xlane.f32.xlu0 %v1101
      %v1103 = vpop.xlane.xlu0 %1102
      %v1104 = vsel %vm242, %v1081, -inf
      %1105 = vmax.xlane.f32.xlu0 %v1104
      %v1106 = vpop.xlane.xlu0 %1105
      %v1107 = vsel %vm242, %v1084, -inf
      %1108 = vmax.xlane.f32.xlu0 %v1107
      %v1109 = vpop.xlane.xlu0 %1108
      %v1110 = vsel %vm242, %v1087, -inf
      %1111 = vmax.xlane.f32.xlu0 %v1110
      %v1112 = vpop.xlane.xlu0 %1111
      %v1113 = vsub.f32 %v1066, %v1091
      %v1114 = vsub.f32 %v1069, %v1094
      %v1115 = vsub.f32 %v1072, %v1097
      %v1116 = vsub.f32 %v1075, %v1100
      %v1117 = vsub.f32 %v1078, %v1103
      %v1118 = vsub.f32 %v1081, %v1106
      %v1119 = vsub.f32 %v1084, %v1109
      %v1120 = vsub.f32 %v1087, %v1112
      %v1121 = vmul.f32 %v1113, 1.442695
      %v1122 = vpow.pop %v1121
      %v1123 = vmul.f32 %v1114, 1.442695
      %v1124 = vpow.pop %v1123
      %v1125 = vmul.f32 %v1115, 1.442695
      %v1126 = vpow.pop %v1125
      %v1127 = vmul.f32 %v1116, 1.442695
      %v1128 = vpow.pop %v1127
      %v1129 = vmul.f32 %v1117, 1.442695
      %v1130 = vpow.pop %v1129
      %v1131 = vmul.f32 %v1118, 1.442695
      %v1132 = vpow.pop %v1131
      %v1133 = vmul.f32 %v1119, 1.442695
      %v1134 = vpow.pop %v1133
      %v1135 = vmul.f32 %v1120, 1.442695
      %v1136 = vpow.pop %v1135
      %v1137 = vsel %vm242, %v1122, 0.0
      %1138 = vadd.xlane.f32.xlu0 %v1137
      %v1139 = vpop.xlane.xlu0 %1138
      %v1140 = vsel %vm242, %v1124, 0.0
      %1141 = vadd.xlane.f32.xlu0 %v1140
      %v1142 = vpop.xlane.xlu0 %1141
      %v1143 = vsel %vm242, %v1126, 0.0
      %1144 = vadd.xlane.f32.xlu0 %v1143
      %v1145 = vpop.xlane.xlu0 %1144
      %v1146 = vsel %vm242, %v1128, 0.0
      %1147 = vadd.xlane.f32.xlu0 %v1146
      %v1148 = vpop.xlane.xlu0 %1147
      %v1149 = vsel %vm242, %v1130, 0.0
      %1150 = vadd.xlane.f32.xlu0 %v1149
      %v1151 = vpop.xlane.xlu0 %1150
      %v1152 = vsel %vm242, %v1132, 0.0
      %1153 = vadd.xlane.f32.xlu0 %v1152
      %v1154 = vpop.xlane.xlu0 %1153
      %v1155 = vsel %vm242, %v1134, 0.0
      %1156 = vadd.xlane.f32.xlu0 %v1155
      %v1157 = vpop.xlane.xlu0 %1156
      %v1158 = vsel %vm242, %v1136, 0.0
      %1159 = vadd.xlane.f32.xlu0 %v1158
      %v1160 = vpop.xlane.xlu0 %1159
      %v1161 = vrcp.pop %v1139
      %v1162 = vrcp.pop %v1142
      %v1163 = vrcp.pop %v1145
      %v1164 = vrcp.pop %v1148
      %v1165 = vrcp.pop %v1151
      %v1166 = vrcp.pop %v1154
      %v1167 = vrcp.pop %v1157
      %v1168 = vrcp.pop %v1160
      %v1169 = vmul.f32 %v1122, %v1161
      %v1170 = vmul.f32 %v1124, %v1162
      %v1171 = vmul.f32 %v1126, %v1163
      %v1172 = vmul.f32 %v1128, %v1164
      %v1173 = vmul.f32 %v1130, %v1165
      %v1174 = vmul.f32 %v1132, %v1166
      %v1175 = vmul.f32 %v1134, %v1167
      %v1176 = vmul.f32 %v1136, %v1168
      %1177 = vrot.lane.b32.xlu0 %v120, 40
      %v1178 = vpop.permute.xlu0 %1177
      %1179 = vrot.lane.b32.xlu0 %v121, 40
      %v1180 = vpop.permute.xlu0 %1179
      %1181 = vrot.lane.b32.xlu0 %v122, 40
      %v1182 = vpop.permute.xlu0 %1181
      %1183 = vrot.lane.b32.xlu0 %v123, 40
      %v1184 = vpop.permute.xlu0 %1183
      %1185 = vrot.lane.b32.xlu0 %v124, 40
      %v1186 = vpop.permute.xlu0 %1185
      %1187 = vrot.lane.b32.xlu0 %v125, 40
      %v1188 = vpop.permute.xlu0 %1187
      %1189 = vrot.lane.b32.xlu0 %v126, 40
      %v1190 = vpop.permute.xlu0 %1189
      %1191 = vrot.lane.b32.xlu0 %v127, 40
      %v1192 = vpop.permute.xlu0 %1191
      %v1202 = vsel %vm242, %v1169, 0
      %v1205 = vsel %vm242, %v1170, 0
      %v1208 = vsel %vm242, %v1171, 0
      %v1211 = vsel %vm242, %v1172, 0
      %v1214 = vsel %vm242, %v1173, 0
      %v1217 = vsel %vm242, %v1174, 0
      %v1220 = vsel %vm242, %v1175, 0
      %v1223 = vsel %vm242, %v1176, 0
      %1225 = vmatpush.msra.mxu0 0.0
      %1226 = vmatpush.msra.mxu0 0.0
      %1227 = vmatpush.msra.mxu0 0.0
      %1228 = vmatpush.msra.mxu0 0.0
      %1229 = vmatpush.msra.mxu0 0.0
      %1230 = vmatpush.msra.mxu0 0.0
      %1231 = vmatpush.msra.mxu0 0.0
      %1232 = vmatpush.msra.mxu0 0.0
      %1233 = vmatpush.msra.mxu0 %v1192
      %1234 = vmatpush.msra.mxu0 %v1190
      %1235 = vmatpush.msra.mxu0 %v1188
      %1236 = vmatpush.msra.mxu0 %v1186
      %1237 = vmatpush.msra.mxu0 %v1184
      %1238 = vmatpush.msra.mxu0 %v1182
      %1239 = vmatpush.msra.mxu0 %v1180
      %1240 = vmatpush.msra.mxu0 %v1178
      %1241 = vmatmul.f32.gmra.mxu0 %v1202
      %v1242 = vpop.f32.mrf.mxu0
      %v1243 = vadd.f32 0.0, %v1242
      %1244 = vmatmul.f32.gmra.mxu0 %v1205
      %v1245 = vpop.f32.mrf.mxu0
      %v1246 = vadd.f32 0.0, %v1245
      %1247 = vmatmul.f32.gmra.mxu0 %v1208
      %v1248 = vpop.f32.mrf.mxu0
      %v1249 = vadd.f32 0.0, %v1248
      %1250 = vmatmul.f32.gmra.mxu0 %v1211
      %v1251 = vpop.f32.mrf.mxu0
      %v1252 = vadd.f32 0.0, %v1251
      %1253 = vmatmul.f32.gmra.mxu0 %v1214
      %v1254 = vpop.f32.mrf.mxu0
      %v1255 = vadd.f32 0.0, %v1254
      %1256 = vmatmul.f32.gmra.mxu0 %v1217
      %v1257 = vpop.f32.mrf.mxu0
      %v1258 = vadd.f32 0.0, %v1257
      %1259 = vmatmul.f32.gmra.mxu0 %v1220
      %v1260 = vpop.f32.mrf.mxu0
      %v1261 = vadd.f32 0.0, %v1260
      %1262 = vmatmul.f32.gmra.mxu0 %v1223
      %v1263 = vpop.f32.mrf.mxu0
      %v1264 = vadd.f32 0.0, %v1263
      %1265 = vdwg.mxu0
      %1274 = vrot.lane.b32.xlu0 %v679, 8
      %v1275 = vpop.permute.xlu0 %1274
      %1276 = vrot.lane.b32.xlu0 %v682, 8
      %v1277 = vpop.permute.xlu0 %1276
      %1278 = vrot.lane.b32.xlu0 %v685, 8
      %v1279 = vpop.permute.xlu0 %1278
      %1280 = vrot.lane.b32.xlu0 %v688, 8
      %v1281 = vpop.permute.xlu0 %1280
      %1282 = vrot.lane.b32.xlu0 %v691, 8
      %v1283 = vpop.permute.xlu0 %1282
      %1284 = vrot.lane.b32.xlu0 %v694, 8
      %v1285 = vpop.permute.xlu0 %1284
      %1286 = vrot.lane.b32.xlu0 %v697, 8
      %v1287 = vpop.permute.xlu0 %1286
      %1288 = vrot.lane.b32.xlu0 %v700, 8
      %v1289 = vpop.permute.xlu0 %1288
      %1306 = vrot.lane.b32.xlu0 %v961, 16
      %v1307 = vpop.permute.xlu0 %1306
      %1308 = vrot.lane.b32.xlu0 %v964, 16
      %v1309 = vpop.permute.xlu0 %1308
      %1310 = vrot.lane.b32.xlu0 %v967, 16
      %v1311 = vpop.permute.xlu0 %1310
      %1312 = vrot.lane.b32.xlu0 %v970, 16
      %v1313 = vpop.permute.xlu0 %1312
      %1314 = vrot.lane.b32.xlu0 %v973, 16
      %v1315 = vpop.permute.xlu0 %1314
      %1316 = vrot.lane.b32.xlu0 %v976, 16
      %v1317 = vpop.permute.xlu0 %1316
      %1318 = vrot.lane.b32.xlu0 %v979, 16
      %v1319 = vpop.permute.xlu0 %1318
      %1320 = vrot.lane.b32.xlu0 %v982, 16
      %v1321 = vpop.permute.xlu0 %1320
      %1338 = vrot.lane.b32.xlu0 %v1243, 24
      %v1339 = vpop.permute.xlu0 %1338
      %1340 = vrot.lane.b32.xlu0 %v1246, 24
      %v1341 = vpop.permute.xlu0 %1340
      %1342 = vrot.lane.b32.xlu0 %v1249, 24
      %v1343 = vpop.permute.xlu0 %1342
      %1344 = vrot.lane.b32.xlu0 %v1252, 24
      %v1345 = vpop.permute.xlu0 %1344
      %1346 = vrot.lane.b32.xlu0 %v1255, 24
      %v1347 = vpop.permute.xlu0 %1346
      %1348 = vrot.lane.b32.xlu0 %v1258, 24
      %v1349 = vpop.permute.xlu0 %1348
      %1350 = vrot.lane.b32.xlu0 %v1261, 24
      %v1351 = vpop.permute.xlu0 %1350
      %1352 = vrot.lane.b32.xlu0 %v1264, 24
      %v1353 = vpop.permute.xlu0 %1352
      %v1362 = vsel %vm160, %v397, %v1275
      %v1363 = vsel %vm160, %v400, %v1277
      %v1364 = vsel %vm160, %v403, %v1279
      %v1365 = vsel %vm160, %v406, %v1281
      %v1366 = vsel %vm160, %v409, %v1283
      %v1367 = vsel %vm160, %v412, %v1285
      %v1368 = vsel %vm160, %v415, %v1287
      %v1369 = vsel %vm160, %v418, %v1289
      %vm1370 = vcmask 130048
      %v1371 = vsel %vm1370, %v1362, %v1307
      %v1372 = vsel %vm1370, %v1363, %v1309
      %v1373 = vsel %vm1370, %v1364, %v1311
      %v1374 = vsel %vm1370, %v1365, %v1313
      %v1375 = vsel %vm1370, %v1366, %v1315
      %v1376 = vsel %vm1370, %v1367, %v1317
      %v1377 = vsel %vm1370, %v1368, %v1319
      %v1378 = vsel %vm1370, %v1369, %v1321
      %vm1379 = vcmask 195584
      %v1380 = vsel %vm1379, %v1371, %v1339
      %v1381 = vsel %vm1379, %v1372, %v1341
      %v1382 = vsel %vm1379, %v1373, %v1343
      %v1383 = vsel %vm1379, %v1374, %v1345
      %v1384 = vsel %vm1379, %v1375, %v1347
      %v1385 = vsel %vm1379, %v1376, %v1349
      %v1386 = vsel %vm1379, %v1377, %v1351
      %v1387 = vsel %vm1379, %v1378, %v1353
      %vm1388 = vcmask 261120
      %1389 = vst.msk [vmem:[%s118] sm:$0xff] %vm1388, %v1380
      %1390 = vst.msk [vmem:[%s118 + $0x8] sm:$0xff] %vm1388, %v1381
      %1391 = vst.msk [vmem:[%s118 + $0x10] sm:$0xff] %vm1388, %v1382
      %1392 = vst.msk [vmem:[%s118 + $0x18] sm:$0xff] %vm1388, %v1383
      %1393 = vst.msk [vmem:[%s118 + $0x20] sm:$0xff] %vm1388, %v1384
      %1394 = vst.msk [vmem:[%s118 + $0x28] sm:$0xff] %vm1388, %v1385
      %1395 = vst.msk [vmem:[%s118 + $0x30] sm:$0xff] %vm1388, %v1386
      %1396 = vst.msk [vmem:[%s118 + $0x38] sm:$0xff] %vm1388, %v1387
      %s1397 = smul.u32 8, %s12
      %p1398 = scmp.lt.s32.totalorder %s1397, 15
      %s1399 = scalar_select %p1398, %s1397, 15
      %s1400 = smul.addr %s1399, 8
      %s1401 = scalar_lea.vmem %s1, %s1400
      // Predicated region
      $region25: #{_lambda_.39} parent=23 // pred_check
        %p1402 = pneg %p56
      $region26: #{_lambda_.39} parent=23 // pred_check_branch
        %1404 = sbr.rel (%p1402) target = $region28
      $region27: #{_lambda_.39} parent=23 // pred_region
        %s1405 = smul.u32 8, %s12
      $region28: #{_lambda_.39} parent=23 // pred_fallthru
        _
    $region24: #{_lambda_.39} parent=5 // pred_fallthru
      _
    %p1406 = scmp.le.s32.totalorder 2, %s7
    // Predicated region
    $region29: #{_lambda_.39} parent=5 // pred_check
      %p1407 = pneg %p1406
    $region30: #{_lambda_.39} parent=5 // pred_check_branch
      %1409 = sbr.rel (%p1407) target = $region32
    $region31: #{_lambda_.39} parent=5 // pred_region
      %s1410 = ssub.s32 %s7, 2
      // Predicated region
      $region33: #{_lambda_.39} parent=31 // pred_check
        %p1411 = pneg %p62
      $region34: #{_lambda_.39} parent=31 // pred_check_branch
        %1413 = sbr.rel (%p1411) target = $region36
      $region35: #{_lambda_.39} parent=31 // pred_region
        %s1414 = smul.u32 8, %s13
        %p1415 = scmp.lt.s32.totalorder %s1414, 15
        %s1416 = scalar_select %p1415, %s1414, 15
        %s1417 = smul.addr %s1416, 8
        %s1418 = scalar_lea.vmem %s1, %s1417
      $region36: #{_lambda_.39} parent=31 // pred_fallthru
        _
    $region32: #{_lambda_.39} parent=5 // pred_fallthru
      _
  $region6: #{_lambda_.39} parent=0 // loop_footer
    %s11 = sadd.s32 1, %s7
  $region7: #{_lambda_.39} parent=0 // loop_footer_branch
    %6 = sbr.rel target = $region3
  $region8: #{_lambda_.39} parent=0 // loop_exit
    _

</llo_original>
